<compile_context>
chip_gen: v7x
topology: tpu7x:2x2x1
jax: 0.10.0
libtpu: 0.0.40
codegen_flags: <defaults>
</compile_context>

<pallas_src>
import math
import jax
import jax.numpy as jnp
from jax import lax
from jax.experimental import pallas as pl
from jax.experimental.pallas import tpu as pltpu


# ----------------------------------------------------------------------------
# Pallas kernels
# ----------------------------------------------------------------------------
def bigru_layer_kernel(x_ref, wih_ref, whh_ref, bih_ref, bhh_ref, out_ref,
                       gxf_scr, gxb_scr, hf_scr, hb_scr, outf_scr, outb_scr):
    """One bidirectional GRU layer, both directions, full sequence.

    x_ref:   (T, B, I)    input sequence (time-major)
    wih_ref: (2, I, 3H)   input->hidden weights, dir 0=fwd 1=bwd, gates (r,z,n)
    whh_ref: (2, H, 3H)   hidden->hidden weights
    bih_ref: (2, 1, 3H)   input biases
    bhh_ref: (2, 1, 3H)   hidden biases
    out_ref: (T, B, 2H)   [:, :, :H]=forward, [:, :, H:]=backward (torch layout)
    scratch: gx{f,b}_scr (T, B, 3H), h{f,b}_scr (B, H), out{f,b}_scr (T, B, H)
    """
    T, B, I = x_ref.shape
    H = hf_scr.shape[-1]

    # ---- hoisted input projections: one big, well-filled MXU matmul per
    # direction (bih folded in here, off the serial path) ----
    x2 = x_ref[...].reshape(T * B, I)
    gxf_scr[...] = (
        jnp.dot(x2, wih_ref[0], preferred_element_type=jnp.float32) + bih_ref[0]
    ).reshape(T, B, 3 * H)
    gxb_scr[...] = (
        jnp.dot(x2, wih_ref[1], preferred_element_type=jnp.float32) + bih_ref[1]
    ).reshape(T, B, 3 * H)

    hf_scr[...] = jnp.zeros_like(hf_scr)
    hb_scr[...] = jnp.zeros_like(hb_scr)

    def cell(gx, gh, h):
        r = jax.nn.sigmoid(gx[:, 0:H] + gh[:, 0:H])
        z = jax.nn.sigmoid(gx[:, H:2 * H] + gh[:, H:2 * H])
        n = jnp.tanh(gx[:, 2 * H:3 * H] + r * gh[:, 2 * H:3 * H])
        return (1.0 - z) * n + z * h

    def step(s, carry):
        tf = s              # forward processes time s
        tb = T - 1 - s      # backward processes time T-1-s (in-kernel reversal)
        h_f = hf_scr[...]
        h_b = hb_scr[...]
        # Only these two (independent) small matmuls remain in the recurrence.
        gh_f = jnp.dot(h_f, whh_ref[0], preferred_element_type=jnp.float32) + bhh_ref[0]
        gh_b = jnp.dot(h_b, whh_ref[1], preferred_element_type=jnp.float32) + bhh_ref[1]
        hf_new = cell(gxf_scr[tf], gh_f, h_f)
        hb_new = cell(gxb_scr[tb], gh_b, h_b)
        hf_scr[...] = hf_new
        hb_scr[...] = hb_new
        outf_scr[tf] = hf_new
        outb_scr[tb] = hb_new
        return carry

    lax.fori_loop(0, T, step, 0, unroll=True)

    # Single full-width write of the bidirectional output (in-VMEM concat;
    # no host-side concatenate / extra HBM copy).
    out_ref[...] = jnp.concatenate([outf_scr[...], outb_scr[...]], axis=-1)


def linear_kernel(x_ref, w_ref, b_ref, o_ref):
    """o = x @ w + b.   x: (B, F), w: (F, O), b: (1, O), o: (B, O)."""
    o_ref[...] = (
        jnp.dot(x_ref[...], w_ref[...], preferred_element_type=jnp.float32)
        + b_ref[...]
    )


# ----------------------------------------------------------------------------
# Wrappers (glue)
# ----------------------------------------------------------------------------
def run_bigru_layer(x_tbi, wih, whh, bih, bhh, hidden_dim):
    T, B, _ = x_tbi.shape
    H = hidden_dim
    vmem = pl.BlockSpec(memory_space=pltpu.MemorySpace.VMEM)
    return pl.pallas_call(
        bigru_layer_kernel,
        out_shape=jax.ShapeDtypeStruct((T, B, 2 * H), jnp.float32),
        in_specs=[vmem] * 5,
        out_specs=vmem,
        scratch_shapes=[
            pltpu.VMEM((T, B, 3 * H), jnp.float32),   # gx forward
            pltpu.VMEM((T, B, 3 * H), jnp.float32),   # gx backward
            pltpu.VMEM((B, H), jnp.float32),          # h forward
            pltpu.VMEM((B, H), jnp.float32),          # h backward
            pltpu.VMEM((T, B, H), jnp.float32),       # out forward
            pltpu.VMEM((T, B, H), jnp.float32),       # out backward
        ],
    )(x_tbi, wih, whh, bih, bhh)


def run_linear(x, w, b):
    B, _ = x.shape
    O = w.shape[1]
    vmem = pl.BlockSpec(memory_space=pltpu.MemorySpace.VMEM)
    return pl.pallas_call(
        linear_kernel,
        out_shape=jax.ShapeDtypeStruct((B, O), jnp.float32),
        in_specs=[vmem] * 3,
        out_specs=vmem,
    )(x, w, b)


def bigru_forward(params, x_tokens):
    """x_tokens: (B, T) int32  ->  logits (B, output_size)."""
    B, T = x_tokens.shape
    H = params["hidden_dim"]

    # Pad batch to a multiple of 8 so the sublane dim is full in every vreg /
    # MXU pass; padded rows are discarded at the end.
    B_pad = ((B + 7) // 8) * 8
    if B_pad != B:
        x_tokens = jnp.pad(x_tokens, ((0, B_pad - B), (0, 0)))

    # Embedding lookup (gather) stays in glue; the matmul/recurrence hot path
    # is inside the Pallas kernels.
    embeds = jnp.take(params["embedding"], x_tokens, axis=0)          # (B_pad, T, E)
    layer_in = jnp.transpose(embeds, (1, 0, 2)).astype(jnp.float32)   # (T, B_pad, E)

    for layer in params["gru_layers"]:
        layer_in = run_bigru_layer(
            layer_in, layer["wih"], layer["whh"], layer["bih"], layer["bhh"], H
        )                                                              # (T, B_pad, 2H)
        # TODO(synk): inter-layer dropout (p=0.2) is train-mode only; no-op here.

    last = layer_in[-1]                                                # (B_pad, 2H) == gru_out[:, -1, :]
    logits = run_linear(last, params["fc_w"], params["fc_b"])          # (B_pad, output_size)
    return logits[:B]


# ----------------------------------------------------------------------------
# Deterministic parameter init (PyTorch-style ranges, JAX RNG)
# ----------------------------------------------------------------------------
def init_params(key, num_embedding, output_size, embedding_dim, hidden_dim, n_layers):
    k_emb, k_fc, *k_layers = jax.random.split(key, 2 + n_layers)
    params = {"hidden_dim": hidden_dim}

    # nn.Embedding default: N(0, 1)
    params["embedding"] = jax.random.normal(
        k_emb, (num_embedding, embedding_dim), dtype=jnp.float32
    )

    bound = 1.0 / math.sqrt(hidden_dim)
    layers = []
    for l in range(n_layers):
        in_dim = embedding_dim if l == 0 else 2 * hidden_dim
        kw = jax.random.split(k_layers[l], 4)
        layers.append({
            # direction axis: 0=fwd, 1=bwd; gate-fused last dim (r, z, n);
            # stored pre-transposed so the kernel does x @ W.
            "wih": jax.random.uniform(
                kw[0], (2, in_dim, 3 * hidden_dim), jnp.float32, -bound, bound),
            "whh": jax.random.uniform(
                kw[1], (2, hidden_dim, 3 * hidden_dim), jnp.float32, -bound, bound),
            "bih": jax.random.uniform(
                kw[2], (2, 1, 3 * hidden_dim), jnp.float32, -bound, bound),
            "bhh": jax.random.uniform(
                kw[3], (2, 1, 3 * hidden_dim), jnp.float32, -bound, bound),
        })
    params["gru_layers"] = layers

    # nn.Linear default: U(-1/sqrt(fan_in), 1/sqrt(fan_in))
    fc_bound = 1.0 / math.sqrt(2 * hidden_dim)
    kfw, kfb = jax.random.split(k_fc)
    params["fc_w"] = jax.random.uniform(
        kfw, (2 * hidden_dim, output_size), jnp.float32, -fc_bound, fc_bound)
    params["fc_b"] = jax.random.uniform(
        kfb, (1, output_size), jnp.float32, -fc_bound, fc_bound)
    return params


# ----------------------------------------------------------------------------
if __name__ == "__main__":
    B, T = 2, 8
    num_embedding = 50
    output_size = 5
    embedding_dim = 16
    hidden_dim = 32
    n_layers = 2

    key = jax.random.PRNGKey(0)
    k_tok, k_par = jax.random.split(key)
    x_tokens = jax.random.randint(k_tok, (B, T), 0, num_embedding, dtype=jnp.int32)

    params = init_params(
        k_par, num_embedding, output_size, embedding_dim, hidden_dim, n_layers
    )

    out = bigru_forward(params, x_tokens)
    out = jax.block_until_ready(out)
    assert out.shape == (B, output_size), out.shape
    assert out.dtype == jnp.float32
    print("KERNEL_OK")
</pallas_src>

<mosaic_0001>
module attributes {stable_mosaic.version = 11 : i64} {
  func.func @bigru_layer_kernel(%arg0: memref<8x8x16xf32, #tpu.memory_space<vmem>>, %arg1: memref<2x16x96xf32, #tpu.memory_space<vmem>>, %arg2: memref<2x32x96xf32, #tpu.memory_space<vmem>>, %arg3: memref<2x1x96xf32, #tpu.memory_space<vmem>>, %arg4: memref<2x1x96xf32, #tpu.memory_space<vmem>>, %arg5: memref<8x8x64xf32, #tpu.memory_space<vmem>>, %arg6: memref<8x8x96xf32, #tpu.memory_space<vmem>>, %arg7: memref<8x8x96xf32, #tpu.memory_space<vmem>>, %arg8: memref<8x32xf32, #tpu.memory_space<vmem>>, %arg9: memref<8x32xf32, #tpu.memory_space<vmem>>, %arg10: memref<8x8x32xf32, #tpu.memory_space<vmem>>, %arg11: memref<8x8x32xf32, #tpu.memory_space<vmem>>) attributes {dimension_semantics = [], scalar_prefetch = 0 : i64, scratch_operands = 6 : i64, tpu.core_type = #tpu.core_type<tc>} {
    %c0 = arith.constant 0 : index
    %c0_0 = arith.constant 0 : index
    %c0_1 = arith.constant 0 : index
    %0 = vector.load %arg0[%c0, %c0_0, %c0_1] : memref<8x8x16xf32, #tpu.memory_space<vmem>>, vector<8x8x16xf32>
    %1 = vector.shape_cast %0 : vector<8x8x16xf32> to vector<64x16xf32>
    %c0_2 = arith.constant 0 : index
    %c0_3 = arith.constant 0 : index
    %c0_4 = arith.constant 0 : index
    %2 = vector.load %arg1[%c0_2, %c0_3, %c0_4] : memref<2x16x96xf32, #tpu.memory_space<vmem>>, vector<1x16x96xf32>
    %3 = vector.shape_cast %2 : vector<1x16x96xf32> to vector<16x96xf32>
    %cst = arith.constant dense<0.000000e+00> : vector<64x96xf32>
    %4 = tpu.matmul %1, %3, %cst {dimension_numbers = #tpu.dot_dimension_numbers<[1], [0], [0], [1], [0, 0, 1, 1], [], []>} : vector<64x16xf32>, vector<16x96xf32>, vector<64x96xf32> -> vector<64x96xf32>
    %c0_5 = arith.constant 0 : index
    %c0_6 = arith.constant 0 : index
    %c0_7 = arith.constant 0 : index
    %5 = vector.load %arg3[%c0_5, %c0_6, %c0_7] : memref<2x1x96xf32, #tpu.memory_space<vmem>>, vector<1x1x96xf32>
    %6 = vector.shape_cast %5 : vector<1x1x96xf32> to vector<1x96xf32>
    %7 = vector.broadcast %6 : vector<1x96xf32> to vector<64x96xf32>
    %8 = arith.addf %4, %7 : vector<64x96xf32>
    %9 = vector.shape_cast %8 : vector<64x96xf32> to vector<8x8x96xf32>
    %c0_8 = arith.constant 0 : index
    %c0_9 = arith.constant 0 : index
    %c0_10 = arith.constant 0 : index
    %10 = vector.load %arg6[%c0_8, %c0_9, %c0_10] : memref<8x8x96xf32, #tpu.memory_space<vmem>>, vector<8x8x96xf32>
    tpu.vector_store %arg6[%c0_8, %c0_9, %c0_10], %9 {strides = array<i32>} : memref<8x8x96xf32, #tpu.memory_space<vmem>>, vector<8x8x96xf32>,
    %c1 = arith.constant 1 : index
    %c0_11 = arith.constant 0 : index
    %c0_12 = arith.constant 0 : index
    %11 = vector.load %arg1[%c1, %c0_11, %c0_12] : memref<2x16x96xf32, #tpu.memory_space<vmem>>, vector<1x16x96xf32>
    %12 = vector.shape_cast %11 : vector<1x16x96xf32> to vector<16x96xf32>
    %cst_13 = arith.constant dense<0.000000e+00> : vector<64x96xf32>
    %13 = tpu.matmul %1, %12, %cst_13 {dimension_numbers = #tpu.dot_dimension_numbers<[1], [0], [0], [1], [0, 0, 1, 1], [], []>} : vector<64x16xf32>, vector<16x96xf32>, vector<64x96xf32> -> vector<64x96xf32>
    %c1_14 = arith.constant 1 : index
    %c0_15 = arith.constant 0 : index
    %c0_16 = arith.constant 0 : index
    %14 = vector.load %arg3[%c1_14, %c0_15, %c0_16] : memref<2x1x96xf32, #tpu.memory_space<vmem>>, vector<1x1x96xf32>
    %15 = vector.shape_cast %14 : vector<1x1x96xf32> to vector<1x96xf32>
    %16 = vector.broadcast %15 : vector<1x96xf32> to vector<64x96xf32>
    %17 = arith.addf %13, %16 : vector<64x96xf32>
    %18 = vector.shape_cast %17 : vector<64x96xf32> to vector<8x8x96xf32>
    %c0_17 = arith.constant 0 : index
    %c0_18 = arith.constant 0 : index
    %c0_19 = arith.constant 0 : index
    %19 = vector.load %arg7[%c0_17, %c0_18, %c0_19] : memref<8x8x96xf32, #tpu.memory_space<vmem>>, vector<8x8x96xf32>
    tpu.vector_store %arg7[%c0_17, %c0_18, %c0_19], %18 {strides = array<i32>} : memref<8x8x96xf32, #tpu.memory_space<vmem>>, vector<8x8x96xf32>,
    %cst_20 = arith.constant 0.000000e+00 : f32
    %20 = vector.broadcast %cst_20 : f32 to vector<8x32xf32>
    %c0_21 = arith.constant 0 : index
    %c0_22 = arith.constant 0 : index
    %21 = vector.load %arg8[%c0_21, %c0_22] : memref<8x32xf32, #tpu.memory_space<vmem>>, vector<8x32xf32>
    tpu.vector_store %arg8[%c0_21, %c0_22], %20 {strides = array<i32>} : memref<8x32xf32, #tpu.memory_space<vmem>>, vector<8x32xf32>,
    %cst_23 = arith.constant 0.000000e+00 : f32
    %22 = vector.broadcast %cst_23 : f32 to vector<8x32xf32>
    %c0_24 = arith.constant 0 : index
    %c0_25 = arith.constant 0 : index
    %23 = vector.load %arg9[%c0_24, %c0_25] : memref<8x32xf32, #tpu.memory_space<vmem>>, vector<8x32xf32>
    tpu.vector_store %arg9[%c0_24, %c0_25], %22 {strides = array<i32>} : memref<8x32xf32, #tpu.memory_space<vmem>>, vector<8x32xf32>,
    %c0_i32 = arith.constant 0 : i32
    %c7_i32 = arith.constant 7 : i32
    %24 = arith.subi %c7_i32, %c0_i32 : i32
    %c0_26 = arith.constant 0 : index
    %c0_27 = arith.constant 0 : index
    %25 = vector.load %arg8[%c0_26, %c0_27] : memref<8x32xf32, #tpu.memory_space<vmem>>, vector<8x32xf32>
    %c0_28 = arith.constant 0 : index
    %c0_29 = arith.constant 0 : index
    %26 = vector.load %arg9[%c0_28, %c0_29] : memref<8x32xf32, #tpu.memory_space<vmem>>, vector<8x32xf32>
    %c0_30 = arith.constant 0 : index
    %c0_31 = arith.constant 0 : index
    %c0_32 = arith.constant 0 : index
    %27 = vector.load %arg2[%c0_30, %c0_31, %c0_32] : memref<2x32x96xf32, #tpu.memory_space<vmem>>, vector<1x32x96xf32>
    %28 = vector.shape_cast %27 : vector<1x32x96xf32> to vector<32x96xf32>
    %cst_33 = arith.constant dense<0.000000e+00> : vector<8x96xf32>
    %29 = tpu.matmul %25, %28, %cst_33 {dimension_numbers = #tpu.dot_dimension_numbers<[1], [0], [0], [1], [0, 0, 1, 1], [], []>} : vector<8x32xf32>, vector<32x96xf32>, vector<8x96xf32> -> vector<8x96xf32>
    %c0_34 = arith.constant 0 : index
    %c0_35 = arith.constant 0 : index
    %c0_36 = arith.constant 0 : index
    %30 = vector.load %arg4[%c0_34, %c0_35, %c0_36] : memref<2x1x96xf32, #tpu.memory_space<vmem>>, vector<1x1x96xf32>
    %31 = vector.shape_cast %30 : vector<1x1x96xf32> to vector<1x96xf32>
    %32 = vector.broadcast %31 : vector<1x96xf32> to vector<8x96xf32>
    %33 = arith.addf %29, %32 : vector<8x96xf32>
    %c1_37 = arith.constant 1 : index
    %c0_38 = arith.constant 0 : index
    %c0_39 = arith.constant 0 : index
    %34 = vector.load %arg2[%c1_37, %c0_38, %c0_39] : memref<2x32x96xf32, #tpu.memory_space<vmem>>, vector<1x32x96xf32>
    %35 = vector.shape_cast %34 : vector<1x32x96xf32> to vector<32x96xf32>
    %cst_40 = arith.constant dense<0.000000e+00> : vector<8x96xf32>
    %36 = tpu.matmul %26, %35, %cst_40 {dimension_numbers = #tpu.dot_dimension_numbers<[1], [0], [0], [1], [0, 0, 1, 1], [], []>} : vector<8x32xf32>, vector<32x96xf32>, vector<8x96xf32> -> vector<8x96xf32>
    %c1_41 = arith.constant 1 : index
    %c0_42 = arith.constant 0 : index
    %c0_43 = arith.constant 0 : index
    %37 = vector.load %arg4[%c1_41, %c0_42, %c0_43] : memref<2x1x96xf32, #tpu.memory_space<vmem>>, vector<1x1x96xf32>
    %38 = vector.shape_cast %37 : vector<1x1x96xf32> to vector<1x96xf32>
    %39 = vector.broadcast %38 : vector<1x96xf32> to vector<8x96xf32>
    %40 = arith.addf %36, %39 : vector<8x96xf32>
    %41 = arith.index_cast %c0_i32 : i32 to index
    %c0_44 = arith.constant 0 : index
    %c0_45 = arith.constant 0 : index
    %42 = vector.load %arg6[%41, %c0_44, %c0_45] : memref<8x8x96xf32, #tpu.memory_space<vmem>>, vector<1x8x96xf32>
    %43 = vector.shape_cast %42 : vector<1x8x96xf32> to vector<8x96xf32>
    %44 = vector.extract_strided_slice %43 {offsets = [0, 0], sizes = [8, 32], strides = [1, 1]} : vector<8x96xf32> to vector<8x32xf32>
    %45 = vector.extract_strided_slice %33 {offsets = [0, 0], sizes = [8, 32], strides = [1, 1]} : vector<8x96xf32> to vector<8x32xf32>
    %46 = arith.addf %44, %45 : vector<8x32xf32>
    %47 = arith.negf %46 : vector<8x32xf32>
    %48 = math.exp %47 : vector<8x32xf32>
    %cst_46 = arith.constant 1.000000e+00 : f32
    %49 = vector.broadcast %cst_46 : f32 to vector<8x32xf32>
    %50 = arith.addf %49, %48 : vector<8x32xf32>
    %51 = arith.divf %49, %50 : vector<8x32xf32>
    %52 = vector.extract_strided_slice %43 {offsets = [0, 32], sizes = [8, 32], strides = [1, 1]} : vector<8x96xf32> to vector<8x32xf32>
    %53 = vector.extract_strided_slice %33 {offsets = [0, 32], sizes = [8, 32], strides = [1, 1]} : vector<8x96xf32> to vector<8x32xf32>
    %54 = arith.addf %52, %53 : vector<8x32xf32>
    %55 = arith.negf %54 : vector<8x32xf32>
    %56 = math.exp %55 : vector<8x32xf32>
    %cst_47 = arith.constant 1.000000e+00 : f32
    %57 = vector.broadcast %cst_47 : f32 to vector<8x32xf32>
    %58 = arith.addf %57, %56 : vector<8x32xf32>
    %59 = arith.divf %57, %58 : vector<8x32xf32>
    %60 = vector.extract_strided_slice %43 {offsets = [0, 64], sizes = [8, 32], strides = [1, 1]} : vector<8x96xf32> to vector<8x32xf32>
    %61 = vector.extract_strided_slice %33 {offsets = [0, 64], sizes = [8, 32], strides = [1, 1]} : vector<8x96xf32> to vector<8x32xf32>
    %62 = arith.mulf %51, %61 : vector<8x32xf32>
    %63 = arith.addf %60, %62 : vector<8x32xf32>
    %64 = math.tanh %63 : vector<8x32xf32>
    %cst_48 = arith.constant 1.000000e+00 : f32
    %65 = vector.broadcast %cst_48 : f32 to vector<8x32xf32>
    %66 = arith.subf %65, %59 : vector<8x32xf32>
    %67 = arith.mulf %66, %64 : vector<8x32xf32>
    %68 = arith.mulf %59, %25 : vector<8x32xf32>
    %69 = arith.addf %67, %68 : vector<8x32xf32>
    %70 = arith.index_cast %24 : i32 to index
    %c0_49 = arith.constant 0 : index
    %c0_50 = arith.constant 0 : index
    %71 = vector.load %arg7[%70, %c0_49, %c0_50] : memref<8x8x96xf32, #tpu.memory_space<vmem>>, vector<1x8x96xf32>
    %72 = vector.shape_cast %71 : vector<1x8x96xf32> to vector<8x96xf32>
    %73 = vector.extract_strided_slice %72 {offsets = [0, 0], sizes = [8, 32], strides = [1, 1]} : vector<8x96xf32> to vector<8x32xf32>
    %74 = vector.extract_strided_slice %40 {offsets = [0, 0], sizes = [8, 32], strides = [1, 1]} : vector<8x96xf32> to vector<8x32xf32>
    %75 = arith.addf %73, %74 : vector<8x32xf32>
    %76 = arith.negf %75 : vector<8x32xf32>
    %77 = math.exp %76 : vector<8x32xf32>
    %cst_51 = arith.constant 1.000000e+00 : f32
    %78 = vector.broadcast %cst_51 : f32 to vector<8x32xf32>
    %79 = arith.addf %78, %77 : vector<8x32xf32>
    %80 = arith.divf %78, %79 : vector<8x32xf32>
    %81 = vector.extract_strided_slice %72 {offsets = [0, 32], sizes = [8, 32], strides = [1, 1]} : vector<8x96xf32> to vector<8x32xf32>
    %82 = vector.extract_strided_slice %40 {offsets = [0, 32], sizes = [8, 32], strides = [1, 1]} : vector<8x96xf32> to vector<8x32xf32>
    %83 = arith.addf %81, %82 : vector<8x32xf32>
    %84 = arith.negf %83 : vector<8x32xf32>
    %85 = math.exp %84 : vector<8x32xf32>
    %cst_52 = arith.constant 1.000000e+00 : f32
    %86 = vector.broadcast %cst_52 : f32 to vector<8x32xf32>
    %87 = arith.addf %86, %85 : vector<8x32xf32>
    %88 = arith.divf %86, %87 : vector<8x32xf32>
    %89 = vector.extract_strided_slice %72 {offsets = [0, 64], sizes = [8, 32], strides = [1, 1]} : vector<8x96xf32> to vector<8x32xf32>
    %90 = vector.extract_strided_slice %40 {offsets = [0, 64], sizes = [8, 32], strides = [1, 1]} : vector<8x96xf32> to vector<8x32xf32>
    %91 = arith.mulf %80, %90 : vector<8x32xf32>
    %92 = arith.addf %89, %91 : vector<8x32xf32>
    %93 = math.tanh %92 : vector<8x32xf32>
    %cst_53 = arith.constant 1.000000e+00 : f32
    %94 = vector.broadcast %cst_53 : f32 to vector<8x32xf32>
    %95 = arith.subf %94, %88 : vector<8x32xf32>
    %96 = arith.mulf %95, %93 : vector<8x32xf32>
    %97 = arith.mulf %88, %26 : vector<8x32xf32>
    %98 = arith.addf %96, %97 : vector<8x32xf32>
    %c0_54 = arith.constant 0 : index
    %c0_55 = arith.constant 0 : index
    %99 = vector.load %arg8[%c0_54, %c0_55] : memref<8x32xf32, #tpu.memory_space<vmem>>, vector<8x32xf32>
    tpu.vector_store %arg8[%c0_54, %c0_55], %69 {strides = array<i32>} : memref<8x32xf32, #tpu.memory_space<vmem>>, vector<8x32xf32>,
    %c0_56 = arith.constant 0 : index
    %c0_57 = arith.constant 0 : index
    %100 = vector.load %arg9[%c0_56, %c0_57] : memref<8x32xf32, #tpu.memory_space<vmem>>, vector<8x32xf32>
    tpu.vector_store %arg9[%c0_56, %c0_57], %98 {strides = array<i32>} : memref<8x32xf32, #tpu.memory_space<vmem>>, vector<8x32xf32>,
    %101 = arith.index_cast %c0_i32 : i32 to index
    %c0_58 = arith.constant 0 : index
    %c0_59 = arith.constant 0 : index
    %102 = vector.load %arg10[%101, %c0_58, %c0_59] : memref<8x8x32xf32, #tpu.memory_space<vmem>>, vector<1x8x32xf32>
    %103 = vector.shape_cast %102 : vector<1x8x32xf32> to vector<8x32xf32>
    %104 = vector.shape_cast %69 : vector<8x32xf32> to vector<1x8x32xf32>
    tpu.vector_store %arg10[%101, %c0_58, %c0_59], %104 {strides = array<i32>} : memref<8x8x32xf32, #tpu.memory_space<vmem>>, vector<1x8x32xf32>,
    %105 = arith.index_cast %24 : i32 to index
    %c0_60 = arith.constant 0 : index
    %c0_61 = arith.constant 0 : index
    %106 = vector.load %arg11[%105, %c0_60, %c0_61] : memref<8x8x32xf32, #tpu.memory_space<vmem>>, vector<1x8x32xf32>
    %107 = vector.shape_cast %106 : vector<1x8x32xf32> to vector<8x32xf32>
    %108 = vector.shape_cast %98 : vector<8x32xf32> to vector<1x8x32xf32>
    tpu.vector_store %arg11[%105, %c0_60, %c0_61], %108 {strides = array<i32>} : memref<8x8x32xf32, #tpu.memory_space<vmem>>, vector<1x8x32xf32>,
    %c1_i32 = arith.constant 1 : i32
    %c7_i32_62 = arith.constant 7 : i32
    %109 = arith.subi %c7_i32_62, %c1_i32 : i32
    %c0_63 = arith.constant 0 : index
    %c0_64 = arith.constant 0 : index
    %110 = vector.load %arg8[%c0_63, %c0_64] : memref<8x32xf32, #tpu.memory_space<vmem>>, vector<8x32xf32>
    %c0_65 = arith.constant 0 : index
    %c0_66 = arith.constant 0 : index
    %111 = vector.load %arg9[%c0_65, %c0_66] : memref<8x32xf32, #tpu.memory_space<vmem>>, vector<8x32xf32>
    %c0_67 = arith.constant 0 : index
    %c0_68 = arith.constant 0 : index
    %c0_69 = arith.constant 0 : index
    %112 = vector.load %arg2[%c0_67, %c0_68, %c0_69] : memref<2x32x96xf32, #tpu.memory_space<vmem>>, vector<1x32x96xf32>
    %113 = vector.shape_cast %112 : vector<1x32x96xf32> to vector<32x96xf32>
    %cst_70 = arith.constant dense<0.000000e+00> : vector<8x96xf32>
    %114 = tpu.matmul %110, %113, %cst_70 {dimension_numbers = #tpu.dot_dimension_numbers<[1], [0], [0], [1], [0, 0, 1, 1], [], []>} : vector<8x32xf32>, vector<32x96xf32>, vector<8x96xf32> -> vector<8x96xf32>
    %c0_71 = arith.constant 0 : index
    %c0_72 = arith.constant 0 : index
    %c0_73 = arith.constant 0 : index
    %115 = vector.load %arg4[%c0_71, %c0_72, %c0_73] : memref<2x1x96xf32, #tpu.memory_space<vmem>>, vector<1x1x96xf32>
    %116 = vector.shape_cast %115 : vector<1x1x96xf32> to vector<1x96xf32>
    %117 = vector.broadcast %116 : vector<1x96xf32> to vector<8x96xf32>
    %118 = arith.addf %114, %117 : vector<8x96xf32>
    %c1_74 = arith.constant 1 : index
    %c0_75 = arith.constant 0 : index
    %c0_76 = arith.constant 0 : index
    %119 = vector.load %arg2[%c1_74, %c0_75, %c0_76] : memref<2x32x96xf32, #tpu.memory_space<vmem>>, vector<1x32x96xf32>
    %120 = vector.shape_cast %119 : vector<1x32x96xf32> to vector<32x96xf32>
    %cst_77 = arith.constant dense<0.000000e+00> : vector<8x96xf32>
    %121 = tpu.matmul %111, %120, %cst_77 {dimension_numbers = #tpu.dot_dimension_numbers<[1], [0], [0], [1], [0, 0, 1, 1], [], []>} : vector<8x32xf32>, vector<32x96xf32>, vector<8x96xf32> -> vector<8x96xf32>
    %c1_78 = arith.constant 1 : index
    %c0_79 = arith.constant 0 : index
    %c0_80 = arith.constant 0 : index
    %122 = vector.load %arg4[%c1_78, %c0_79, %c0_80] : memref<2x1x96xf32, #tpu.memory_space<vmem>>, vector<1x1x96xf32>
    %123 = vector.shape_cast %122 : vector<1x1x96xf32> to vector<1x96xf32>
    %124 = vector.broadcast %123 : vector<1x96xf32> to vector<8x96xf32>
    %125 = arith.addf %121, %124 : vector<8x96xf32>
    %126 = arith.index_cast %c1_i32 : i32 to index
    %c0_81 = arith.constant 0 : index
    %c0_82 = arith.constant 0 : index
    %127 = vector.load %arg6[%126, %c0_81, %c0_82] : memref<8x8x96xf32, #tpu.memory_space<vmem>>, vector<1x8x96xf32>
    %128 = vector.shape_cast %127 : vector<1x8x96xf32> to vector<8x96xf32>
    %129 = vector.extract_strided_slice %128 {offsets = [0, 0], sizes = [8, 32], strides = [1, 1]} : vector<8x96xf32> to vector<8x32xf32>
    %130 = vector.extract_strided_slice %118 {offsets = [0, 0], sizes = [8, 32], strides = [1, 1]} : vector<8x96xf32> to vector<8x32xf32>
    %131 = arith.addf %129, %130 : vector<8x32xf32>
    %132 = arith.negf %131 : vector<8x32xf32>
    %133 = math.exp %132 : vector<8x32xf32>
    %cst_83 = arith.constant 1.000000e+00 : f32
    %134 = vector.broadcast %cst_83 : f32 to vector<8x32xf32>
    %135 = arith.addf %134, %133 : vector<8x32xf32>
    %136 = arith.divf %134, %135 : vector<8x32xf32>
    %137 = vector.extract_strided_slice %128 {offsets = [0, 32], sizes = [8, 32], strides = [1, 1]} : vector<8x96xf32> to vector<8x32xf32>
    %138 = vector.extract_strided_slice %118 {offsets = [0, 32], sizes = [8, 32], strides = [1, 1]} : vector<8x96xf32> to vector<8x32xf32>
    %139 = arith.addf %137, %138 : vector<8x32xf32>
    %140 = arith.negf %139 : vector<8x32xf32>
    %141 = math.exp %140 : vector<8x32xf32>
    %cst_84 = arith.constant 1.000000e+00 : f32
    %142 = vector.broadcast %cst_84 : f32 to vector<8x32xf32>
    %143 = arith.addf %142, %141 : vector<8x32xf32>
    %144 = arith.divf %142, %143 : vector<8x32xf32>
    %145 = vector.extract_strided_slice %128 {offsets = [0, 64], sizes = [8, 32], strides = [1, 1]} : vector<8x96xf32> to vector<8x32xf32>
    %146 = vector.extract_strided_slice %118 {offsets = [0, 64], sizes = [8, 32], strides = [1, 1]} : vector<8x96xf32> to vector<8x32xf32>
    %147 = arith.mulf %136, %146 : vector<8x32xf32>
    %148 = arith.addf %145, %147 : vector<8x32xf32>
    %149 = math.tanh %148 : vector<8x32xf32>
    %cst_85 = arith.constant 1.000000e+00 : f32
    %150 = vector.broadcast %cst_85 : f32 to vector<8x32xf32>
    %151 = arith.subf %150, %144 : vector<8x32xf32>
    %152 = arith.mulf %151, %149 : vector<8x32xf32>
    %153 = arith.mulf %144, %110 : vector<8x32xf32>
    %154 = arith.addf %152, %153 : vector<8x32xf32>
    %155 = arith.index_cast %109 : i32 to index
    %c0_86 = arith.constant 0 : index
    %c0_87 = arith.constant 0 : index
    %156 = vector.load %arg7[%155, %c0_86, %c0_87] : memref<8x8x96xf32, #tpu.memory_space<vmem>>, vector<1x8x96xf32>
    %157 = vector.shape_cast %156 : vector<1x8x96xf32> to vector<8x96xf32>
    %158 = vector.extract_strided_slice %157 {offsets = [0, 0], sizes = [8, 32], strides = [1, 1]} : vector<8x96xf32> to vector<8x32xf32>
    %159 = vector.extract_strided_slice %125 {offsets = [0, 0], sizes = [8, 32], strides = [1, 1]} : vector<8x96xf32> to vector<8x32xf32>
    %160 = arith.addf %158, %159 : vector<8x32xf32>
    %161 = arith.negf %160 : vector<8x32xf32>
    %162 = math.exp %161 : vector<8x32xf32>
    %cst_88 = arith.constant 1.000000e+00 : f32
    %163 = vector.broadcast %cst_88 : f32 to vector<8x32xf32>
    %164 = arith.addf %163, %162 : vector<8x32xf32>
    %165 = arith.divf %163, %164 : vector<8x32xf32>
    %166 = vector.extract_strided_slice %157 {offsets = [0, 32], sizes = [8, 32], strides = [1, 1]} : vector<8x96xf32> to vector<8x32xf32>
    %167 = vector.extract_strided_slice %125 {offsets = [0, 32], sizes = [8, 32], strides = [1, 1]} : vector<8x96xf32> to vector<8x32xf32>
    %168 = arith.addf %166, %167 : vector<8x32xf32>
    %169 = arith.negf %168 : vector<8x32xf32>
    %170 = math.exp %169 : vector<8x32xf32>
    %cst_89 = arith.constant 1.000000e+00 : f32
    %171 = vector.broadcast %cst_89 : f32 to vector<8x32xf32>
    %172 = arith.addf %171, %170 : vector<8x32xf32>
    %173 = arith.divf %171, %172 : vector<8x32xf32>
    %174 = vector.extract_strided_slice %157 {offsets = [0, 64], sizes = [8, 32], strides = [1, 1]} : vector<8x96xf32> to vector<8x32xf32>
    %175 = vector.extract_strided_slice %125 {offsets = [0, 64], sizes = [8, 32], strides = [1, 1]} : vector<8x96xf32> to vector<8x32xf32>
    %176 = arith.mulf %165, %175 : vector<8x32xf32>
    %177 = arith.addf %174, %176 : vector<8x32xf32>
    %178 = math.tanh %177 : vector<8x32xf32>
    %cst_90 = arith.constant 1.000000e+00 : f32
    %179 = vector.broadcast %cst_90 : f32 to vector<8x32xf32>
    %180 = arith.subf %179, %173 : vector<8x32xf32>
    %181 = arith.mulf %180, %178 : vector<8x32xf32>
    %182 = arith.mulf %173, %111 : vector<8x32xf32>
    %183 = arith.addf %181, %182 : vector<8x32xf32>
    %c0_91 = arith.constant 0 : index
    %c0_92 = arith.constant 0 : index
    %184 = vector.load %arg8[%c0_91, %c0_92] : memref<8x32xf32, #tpu.memory_space<vmem>>, vector<8x32xf32>
    tpu.vector_store %arg8[%c0_91, %c0_92], %154 {strides = array<i32>} : memref<8x32xf32, #tpu.memory_space<vmem>>, vector<8x32xf32>,
    %c0_93 = arith.constant 0 : index
    %c0_94 = arith.constant 0 : index
    %185 = vector.load %arg9[%c0_93, %c0_94] : memref<8x32xf32, #tpu.memory_space<vmem>>, vector<8x32xf32>
    tpu.vector_store %arg9[%c0_93, %c0_94], %183 {strides = array<i32>} : memref<8x32xf32, #tpu.memory_space<vmem>>, vector<8x32xf32>,
    %186 = arith.index_cast %c1_i32 : i32 to index
    %c0_95 = arith.constant 0 : index
    %c0_96 = arith.constant 0 : index
    %187 = vector.load %arg10[%186, %c0_95, %c0_96] : memref<8x8x32xf32, #tpu.memory_space<vmem>>, vector<1x8x32xf32>
    %188 = vector.shape_cast %187 : vector<1x8x32xf32> to vector<8x32xf32>
    %189 = vector.shape_cast %154 : vector<8x32xf32> to vector<1x8x32xf32>
    tpu.vector_store %arg10[%186, %c0_95, %c0_96], %189 {strides = array<i32>} : memref<8x8x32xf32, #tpu.memory_space<vmem>>, vector<1x8x32xf32>,
    %190 = arith.index_cast %109 : i32 to index
    %c0_97 = arith.constant 0 : index
    %c0_98 = arith.constant 0 : index
    %191 = vector.load %arg11[%190, %c0_97, %c0_98] : memref<8x8x32xf32, #tpu.memory_space<vmem>>, vector<1x8x32xf32>
    %192 = vector.shape_cast %191 : vector<1x8x32xf32> to vector<8x32xf32>
    %193 = vector.shape_cast %183 : vector<8x32xf32> to vector<1x8x32xf32>
    tpu.vector_store %arg11[%190, %c0_97, %c0_98], %193 {strides = array<i32>} : memref<8x8x32xf32, #tpu.memory_space<vmem>>, vector<1x8x32xf32>,
    %c2_i32 = arith.constant 2 : i32
    %c7_i32_99 = arith.constant 7 : i32
    %194 = arith.subi %c7_i32_99, %c2_i32 : i32
    %c0_100 = arith.constant 0 : index
    %c0_101 = arith.constant 0 : index
    %195 = vector.load %arg8[%c0_100, %c0_101] : memref<8x32xf32, #tpu.memory_space<vmem>>, vector<8x32xf32>
    %c0_102 = arith.constant 0 : index
    %c0_103 = arith.constant 0 : index
    %196 = vector.load %arg9[%c0_102, %c0_103] : memref<8x32xf32, #tpu.memory_space<vmem>>, vector<8x32xf32>
    %c0_104 = arith.constant 0 : index
    %c0_105 = arith.constant 0 : index
    %c0_106 = arith.constant 0 : index
    %197 = vector.load %arg2[%c0_104, %c0_105, %c0_106] : memref<2x32x96xf32, #tpu.memory_space<vmem>>, vector<1x32x96xf32>
    %198 = vector.shape_cast %197 : vector<1x32x96xf32> to vector<32x96xf32>
    %cst_107 = arith.constant dense<0.000000e+00> : vector<8x96xf32>
    %199 = tpu.matmul %195, %198, %cst_107 {dimension_numbers = #tpu.dot_dimension_numbers<[1], [0], [0], [1], [0, 0, 1, 1], [], []>} : vector<8x32xf32>, vector<32x96xf32>, vector<8x96xf32> -> vector<8x96xf32>
    %c0_108 = arith.constant 0 : index
    %c0_109 = arith.constant 0 : index
    %c0_110 = arith.constant 0 : index
    %200 = vector.load %arg4[%c0_108, %c0_109, %c0_110] : memref<2x1x96xf32, #tpu.memory_space<vmem>>, vector<1x1x96xf32>
    %201 = vector.shape_cast %200 : vector<1x1x96xf32> to vector<1x96xf32>
    %202 = vector.broadcast %201 : vector<1x96xf32> to vector<8x96xf32>
    %203 = arith.addf %199, %202 : vector<8x96xf32>
    %c1_111 = arith.constant 1 : index
    %c0_112 = arith.constant 0 : index
    %c0_113 = arith.constant 0 : index
    %204 = vector.load %arg2[%c1_111, %c0_112, %c0_113] : memref<2x32x96xf32, #tpu.memory_space<vmem>>, vector<1x32x96xf32>
    %205 = vector.shape_cast %204 : vector<1x32x96xf32> to vector<32x96xf32>
    %cst_114 = arith.constant dense<0.000000e+00> : vector<8x96xf32>
    %206 = tpu.matmul %196, %205, %cst_114 {dimension_numbers = #tpu.dot_dimension_numbers<[1], [0], [0], [1], [0, 0, 1, 1], [], []>} : vector<8x32xf32>, vector<32x96xf32>, vector<8x96xf32> -> vector<8x96xf32>
    %c1_115 = arith.constant 1 : index
    %c0_116 = arith.constant 0 : index
    %c0_117 = arith.constant 0 : index
    %207 = vector.load %arg4[%c1_115, %c0_116, %c0_117] : memref<2x1x96xf32, #tpu.memory_space<vmem>>, vector<1x1x96xf32>
    %208 = vector.shape_cast %207 : vector<1x1x96xf32> to vector<1x96xf32>
    %209 = vector.broadcast %208 : vector<1x96xf32> to vector<8x96xf32>
    %210 = arith.addf %206, %209 : vector<8x96xf32>
    %211 = arith.index_cast %c2_i32 : i32 to index
    %c0_118 = arith.constant 0 : index
    %c0_119 = arith.constant 0 : index
    %212 = vector.load %arg6[%211, %c0_118, %c0_119] : memref<8x8x96xf32, #tpu.memory_space<vmem>>, vector<1x8x96xf32>
    %213 = vector.shape_cast %212 : vector<1x8x96xf32> to vector<8x96xf32>
    %214 = vector.extract_strided_slice %213 {offsets = [0, 0], sizes = [8, 32], strides = [1, 1]} : vector<8x96xf32> to vector<8x32xf32>
    %215 = vector.extract_strided_slice %203 {offsets = [0, 0], sizes = [8, 32], strides = [1, 1]} : vector<8x96xf32> to vector<8x32xf32>
    %216 = arith.addf %214, %215 : vector<8x32xf32>
    %217 = arith.negf %216 : vector<8x32xf32>
    %218 = math.exp %217 : vector<8x32xf32>
    %cst_120 = arith.constant 1.000000e+00 : f32
    %219 = vector.broadcast %cst_120 : f32 to vector<8x32xf32>
    %220 = arith.addf %219, %218 : vector<8x32xf32>
    %221 = arith.divf %219, %220 : vector<8x32xf32>
    %222 = vector.extract_strided_slice %213 {offsets = [0, 32], sizes = [8, 32], strides = [1, 1]} : vector<8x96xf32> to vector<8x32xf32>
    %223 = vector.extract_strided_slice %203 {offsets = [0, 32], sizes = [8, 32], strides = [1, 1]} : vector<8x96xf32> to vector<8x32xf32>
    %224 = arith.addf %222, %223 : vector<8x32xf32>
    %225 = arith.negf %224 : vector<8x32xf32>
    %226 = math.exp %225 : vector<8x32xf32>
    %cst_121 = arith.constant 1.000000e+00 : f32
    %227 = vector.broadcast %cst_121 : f32 to vector<8x32xf32>
    %228 = arith.addf %227, %226 : vector<8x32xf32>
    %229 = arith.divf %227, %228 : vector<8x32xf32>
    %230 = vector.extract_strided_slice %213 {offsets = [0, 64], sizes = [8, 32], strides = [1, 1]} : vector<8x96xf32> to vector<8x32xf32>
    %231 = vector.extract_strided_slice %203 {offsets = [0, 64], sizes = [8, 32], strides = [1, 1]} : vector<8x96xf32> to vector<8x32xf32>
    %232 = arith.mulf %221, %231 : vector<8x32xf32>
    %233 = arith.addf %230, %232 : vector<8x32xf32>
    %234 = math.tanh %233 : vector<8x32xf32>
    %cst_122 = arith.constant 1.000000e+00 : f32
    %235 = vector.broadcast %cst_122 : f32 to vector<8x32xf32>
    %236 = arith.subf %235, %229 : vector<8x32xf32>
    %237 = arith.mulf %236, %234 : vector<8x32xf32>
    %238 = arith.mulf %229, %195 : vector<8x32xf32>
    %239 = arith.addf %237, %238 : vector<8x32xf32>
    %240 = arith.index_cast %194 : i32 to index
    %c0_123 = arith.constant 0 : index
    %c0_124 = arith.constant 0 : index
    %241 = vector.load %arg7[%240, %c0_123, %c0_124] : memref<8x8x96xf32, #tpu.memory_space<vmem>>, vector<1x8x96xf32>
    %242 = vector.shape_cast %241 : vector<1x8x96xf32> to vector<8x96xf32>
    %243 = vector.extract_strided_slice %242 {offsets = [0, 0], sizes = [8, 32], strides = [1, 1]} : vector<8x96xf32> to vector<8x32xf32>
    %244 = vector.extract_strided_slice %210 {offsets = [0, 0], sizes = [8, 32], strides = [1, 1]} : vector<8x96xf32> to vector<8x32xf32>
    %245 = arith.addf %243, %244 : vector<8x32xf32>
    %246 = arith.negf %245 : vector<8x32xf32>
    %247 = math.exp %246 : vector<8x32xf32>
    %cst_125 = arith.constant 1.000000e+00 : f32
    %248 = vector.broadcast %cst_125 : f32 to vector<8x32xf32>
    %249 = arith.addf %248, %247 : vector<8x32xf32>
    %250 = arith.divf %248, %249 : vector<8x32xf32>
    %251 = vector.extract_strided_slice %242 {offsets = [0, 32], sizes = [8, 32], strides = [1, 1]} : vector<8x96xf32> to vector<8x32xf32>
    %252 = vector.extract_strided_slice %210 {offsets = [0, 32], sizes = [8, 32], strides = [1, 1]} : vector<8x96xf32> to vector<8x32xf32>
    %253 = arith.addf %251, %252 : vector<8x32xf32>
    %254 = arith.negf %253 : vector<8x32xf32>
    %255 = math.exp %254 : vector<8x32xf32>
    %cst_126 = arith.constant 1.000000e+00 : f32
    %256 = vector.broadcast %cst_126 : f32 to vector<8x32xf32>
    %257 = arith.addf %256, %255 : vector<8x32xf32>
    %258 = arith.divf %256, %257 : vector<8x32xf32>
    %259 = vector.extract_strided_slice %242 {offsets = [0, 64], sizes = [8, 32], strides = [1, 1]} : vector<8x96xf32> to vector<8x32xf32>
    %260 = vector.extract_strided_slice %210 {offsets = [0, 64], sizes = [8, 32], strides = [1, 1]} : vector<8x96xf32> to vector<8x32xf32>
    %261 = arith.mulf %250, %260 : vector<8x32xf32>
    %262 = arith.addf %259, %261 : vector<8x32xf32>
    %263 = math.tanh %262 : vector<8x32xf32>
    %cst_127 = arith.constant 1.000000e+00 : f32
    %264 = vector.broadcast %cst_127 : f32 to vector<8x32xf32>
    %265 = arith.subf %264, %258 : vector<8x32xf32>
    %266 = arith.mulf %265, %263 : vector<8x32xf32>
    %267 = arith.mulf %258, %196 : vector<8x32xf32>
    %268 = arith.addf %266, %267 : vector<8x32xf32>
    %c0_128 = arith.constant 0 : index
    %c0_129 = arith.constant 0 : index
    %269 = vector.load %arg8[%c0_128, %c0_129] : memref<8x32xf32, #tpu.memory_space<vmem>>, vector<8x32xf32>
    tpu.vector_store %arg8[%c0_128, %c0_129], %239 {strides = array<i32>} : memref<8x32xf32, #tpu.memory_space<vmem>>, vector<8x32xf32>,
    %c0_130 = arith.constant 0 : index
    %c0_131 = arith.constant 0 : index
    %270 = vector.load %arg9[%c0_130, %c0_131] : memref<8x32xf32, #tpu.memory_space<vmem>>, vector<8x32xf32>
    tpu.vector_store %arg9[%c0_130, %c0_131], %268 {strides = array<i32>} : memref<8x32xf32, #tpu.memory_space<vmem>>, vector<8x32xf32>,
    %271 = arith.index_cast %c2_i32 : i32 to index
    %c0_132 = arith.constant 0 : index
    %c0_133 = arith.constant 0 : index
    %272 = vector.load %arg10[%271, %c0_132, %c0_133] : memref<8x8x32xf32, #tpu.memory_space<vmem>>, vector<1x8x32xf32>
    %273 = vector.shape_cast %272 : vector<1x8x32xf32> to vector<8x32xf32>
    %274 = vector.shape_cast %239 : vector<8x32xf32> to vector<1x8x32xf32>
    tpu.vector_store %arg10[%271, %c0_132, %c0_133], %274 {strides = array<i32>} : memref<8x8x32xf32, #tpu.memory_space<vmem>>, vector<1x8x32xf32>,
    %275 = arith.index_cast %194 : i32 to index
    %c0_134 = arith.constant 0 : index
    %c0_135 = arith.constant 0 : index
    %276 = vector.load %arg11[%275, %c0_134, %c0_135] : memref<8x8x32xf32, #tpu.memory_space<vmem>>, vector<1x8x32xf32>
    %277 = vector.shape_cast %276 : vector<1x8x32xf32> to vector<8x32xf32>
    %278 = vector.shape_cast %268 : vector<8x32xf32> to vector<1x8x32xf32>
    tpu.vector_store %arg11[%275, %c0_134, %c0_135], %278 {strides = array<i32>} : memref<8x8x32xf32, #tpu.memory_space<vmem>>, vector<1x8x32xf32>,
    %c3_i32 = arith.constant 3 : i32
    %c7_i32_136 = arith.constant 7 : i32
    %279 = arith.subi %c7_i32_136, %c3_i32 : i32
    %c0_137 = arith.constant 0 : index
    %c0_138 = arith.constant 0 : index
    %280 = vector.load %arg8[%c0_137, %c0_138] : memref<8x32xf32, #tpu.memory_space<vmem>>, vector<8x32xf32>
    %c0_139 = arith.constant 0 : index
    %c0_140 = arith.constant 0 : index
    %281 = vector.load %arg9[%c0_139, %c0_140] : memref<8x32xf32, #tpu.memory_space<vmem>>, vector<8x32xf32>
    %c0_141 = arith.constant 0 : index
    %c0_142 = arith.constant 0 : index
    %c0_143 = arith.constant 0 : index
    %282 = vector.load %arg2[%c0_141, %c0_142, %c0_143] : memref<2x32x96xf32, #tpu.memory_space<vmem>>, vector<1x32x96xf32>
    %283 = vector.shape_cast %282 : vector<1x32x96xf32> to vector<32x96xf32>
    %cst_144 = arith.constant dense<0.000000e+00> : vector<8x96xf32>
    %284 = tpu.matmul %280, %283, %cst_144 {dimension_numbers = #tpu.dot_dimension_numbers<[1], [0], [0], [1], [0, 0, 1, 1], [], []>} : vector<8x32xf32>, vector<32x96xf32>, vector<8x96xf32> -> vector<8x96xf32>
    %c0_145 = arith.constant 0 : index
    %c0_146 = arith.constant 0 : index
    %c0_147 = arith.constant 0 : index
    %285 = vector.load %arg4[%c0_145, %c0_146, %c0_147] : memref<2x1x96xf32, #tpu.memory_space<vmem>>, vector<1x1x96xf32>
    %286 = vector.shape_cast %285 : vector<1x1x96xf32> to vector<1x96xf32>
    %287 = vector.broadcast %286 : vector<1x96xf32> to vector<8x96xf32>
    %288 = arith.addf %284, %287 : vector<8x96xf32>
    %c1_148 = arith.constant 1 : index
    %c0_149 = arith.constant 0 : index
    %c0_150 = arith.constant 0 : index
    %289 = vector.load %arg2[%c1_148, %c0_149, %c0_150] : memref<2x32x96xf32, #tpu.memory_space<vmem>>, vector<1x32x96xf32>
    %290 = vector.shape_cast %289 : vector<1x32x96xf32> to vector<32x96xf32>
    %cst_151 = arith.constant dense<0.000000e+00> : vector<8x96xf32>
    %291 = tpu.matmul %281, %290, %cst_151 {dimension_numbers = #tpu.dot_dimension_numbers<[1], [0], [0], [1], [0, 0, 1, 1], [], []>} : vector<8x32xf32>, vector<32x96xf32>, vector<8x96xf32> -> vector<8x96xf32>
    %c1_152 = arith.constant 1 : index
    %c0_153 = arith.constant 0 : index
    %c0_154 = arith.constant 0 : index
    %292 = vector.load %arg4[%c1_152, %c0_153, %c0_154] : memref<2x1x96xf32, #tpu.memory_space<vmem>>, vector<1x1x96xf32>
    %293 = vector.shape_cast %292 : vector<1x1x96xf32> to vector<1x96xf32>
    %294 = vector.broadcast %293 : vector<1x96xf32> to vector<8x96xf32>
    %295 = arith.addf %291, %294 : vector<8x96xf32>
    %296 = arith.index_cast %c3_i32 : i32 to index
    %c0_155 = arith.constant 0 : index
    %c0_156 = arith.constant 0 : index
    %297 = vector.load %arg6[%296, %c0_155, %c0_156] : memref<8x8x96xf32, #tpu.memory_space<vmem>>, vector<1x8x96xf32>
    %298 = vector.shape_cast %297 : vector<1x8x96xf32> to vector<8x96xf32>
    %299 = vector.extract_strided_slice %298 {offsets = [0, 0], sizes = [8, 32], strides = [1, 1]} : vector<8x96xf32> to vector<8x32xf32>
    %300 = vector.extract_strided_slice %288 {offsets = [0, 0], sizes = [8, 32], strides = [1, 1]} : vector<8x96xf32> to vector<8x32xf32>
    %301 = arith.addf %299, %300 : vector<8x32xf32>
    %302 = arith.negf %301 : vector<8x32xf32>
    %303 = math.exp %302 : vector<8x32xf32>
    %cst_157 = arith.constant 1.000000e+00 : f32
    %304 = vector.broadcast %cst_157 : f32 to vector<8x32xf32>
    %305 = arith.addf %304, %303 : vector<8x32xf32>
    %306 = arith.divf %304, %305 : vector<8x32xf32>
    %307 = vector.extract_strided_slice %298 {offsets = [0, 32], sizes = [8, 32], strides = [1, 1]} : vector<8x96xf32> to vector<8x32xf32>
    %308 = vector.extract_strided_slice %288 {offsets = [0, 32], sizes = [8, 32], strides = [1, 1]} : vector<8x96xf32> to vector<8x32xf32>
    %309 = arith.addf %307, %308 : vector<8x32xf32>
    %310 = arith.negf %309 : vector<8x32xf32>
    %311 = math.exp %310 : vector<8x32xf32>
    %cst_158 = arith.constant 1.000000e+00 : f32
    %312 = vector.broadcast %cst_158 : f32 to vector<8x32xf32>
    %313 = arith.addf %312, %311 : vector<8x32xf32>
    %314 = arith.divf %312, %313 : vector<8x32xf32>
    %315 = vector.extract_strided_slice %298 {offsets = [0, 64], sizes = [8, 32], strides = [1, 1]} : vector<8x96xf32> to vector<8x32xf32>
    %316 = vector.extract_strided_slice %288 {offsets = [0, 64], sizes = [8, 32], strides = [1, 1]} : vector<8x96xf32> to vector<8x32xf32>
    %317 = arith.mulf %306, %316 : vector<8x32xf32>
    %318 = arith.addf %315, %317 : vector<8x32xf32>
    %319 = math.tanh %318 : vector<8x32xf32>
    %cst_159 = arith.constant 1.000000e+00 : f32
    %320 = vector.broadcast %cst_159 : f32 to vector<8x32xf32>
    %321 = arith.subf %320, %314 : vector<8x32xf32>
    %322 = arith.mulf %321, %319 : vector<8x32xf32>
    %323 = arith.mulf %314, %280 : vector<8x32xf32>
    %324 = arith.addf %322, %323 : vector<8x32xf32>
    %325 = arith.index_cast %279 : i32 to index
    %c0_160 = arith.constant 0 : index
    %c0_161 = arith.constant 0 : index
    %326 = vector.load %arg7[%325, %c0_160, %c0_161] : memref<8x8x96xf32, #tpu.memory_space<vmem>>, vector<1x8x96xf32>
    %327 = vector.shape_cast %326 : vector<1x8x96xf32> to vector<8x96xf32>
    %328 = vector.extract_strided_slice %327 {offsets = [0, 0], sizes = [8, 32], strides = [1, 1]} : vector<8x96xf32> to vector<8x32xf32>
    %329 = vector.extract_strided_slice %295 {offsets = [0, 0], sizes = [8, 32], strides = [1, 1]} : vector<8x96xf32> to vector<8x32xf32>
    %330 = arith.addf %328, %329 : vector<8x32xf32>
    %331 = arith.negf %330 : vector<8x32xf32>
    %332 = math.exp %331 : vector<8x32xf32>
    %cst_162 = arith.constant 1.000000e+00 : f32
    %333 = vector.broadcast %cst_162 : f32 to vector<8x32xf32>
    %334 = arith.addf %333, %332 : vector<8x32xf32>
    %335 = arith.divf %333, %334 : vector<8x32xf32>
    %336 = vector.extract_strided_slice %327 {offsets = [0, 32], sizes = [8, 32], strides = [1, 1]} : vector<8x96xf32> to vector<8x32xf32>
    %337 = vector.extract_strided_slice %295 {offsets = [0, 32], sizes = [8, 32], strides = [1, 1]} : vector<8x96xf32> to vector<8x32xf32>
    %338 = arith.addf %336, %337 : vector<8x32xf32>
    %339 = arith.negf %338 : vector<8x32xf32>
    %340 = math.exp %339 : vector<8x32xf32>
    %cst_163 = arith.constant 1.000000e+00 : f32
    %341 = vector.broadcast %cst_163 : f32 to vector<8x32xf32>
    %342 = arith.addf %341, %340 : vector<8x32xf32>
    %343 = arith.divf %341, %342 : vector<8x32xf32>
    %344 = vector.extract_strided_slice %327 {offsets = [0, 64], sizes = [8, 32], strides = [1, 1]} : vector<8x96xf32> to vector<8x32xf32>
    %345 = vector.extract_strided_slice %295 {offsets = [0, 64], sizes = [8, 32], strides = [1, 1]} : vector<8x96xf32> to vector<8x32xf32>
    %346 = arith.mulf %335, %345 : vector<8x32xf32>
    %347 = arith.addf %344, %346 : vector<8x32xf32>
    %348 = math.tanh %347 : vector<8x32xf32>
    %cst_164 = arith.constant 1.000000e+00 : f32
    %349 = vector.broadcast %cst_164 : f32 to vector<8x32xf32>
    %350 = arith.subf %349, %343 : vector<8x32xf32>
    %351 = arith.mulf %350, %348 : vector<8x32xf32>
    %352 = arith.mulf %343, %281 : vector<8x32xf32>
    %353 = arith.addf %351, %352 : vector<8x32xf32>
    %c0_165 = arith.constant 0 : index
    %c0_166 = arith.constant 0 : index
    %354 = vector.load %arg8[%c0_165, %c0_166] : memref<8x32xf32, #tpu.memory_space<vmem>>, vector<8x32xf32>
    tpu.vector_store %arg8[%c0_165, %c0_166], %324 {strides = array<i32>} : memref<8x32xf32, #tpu.memory_space<vmem>>, vector<8x32xf32>,
    %c0_167 = arith.constant 0 : index
    %c0_168 = arith.constant 0 : index
    %355 = vector.load %arg9[%c0_167, %c0_168] : memref<8x32xf32, #tpu.memory_space<vmem>>, vector<8x32xf32>
    tpu.vector_store %arg9[%c0_167, %c0_168], %353 {strides = array<i32>} : memref<8x32xf32, #tpu.memory_space<vmem>>, vector<8x32xf32>,
    %356 = arith.index_cast %c3_i32 : i32 to index
    %c0_169 = arith.constant 0 : index
    %c0_170 = arith.constant 0 : index
    %357 = vector.load %arg10[%356, %c0_169, %c0_170] : memref<8x8x32xf32, #tpu.memory_space<vmem>>, vector<1x8x32xf32>
    %358 = vector.shape_cast %357 : vector<1x8x32xf32> to vector<8x32xf32>
    %359 = vector.shape_cast %324 : vector<8x32xf32> to vector<1x8x32xf32>
    tpu.vector_store %arg10[%356, %c0_169, %c0_170], %359 {strides = array<i32>} : memref<8x8x32xf32, #tpu.memory_space<vmem>>, vector<1x8x32xf32>,
    %360 = arith.index_cast %279 : i32 to index
    %c0_171 = arith.constant 0 : index
    %c0_172 = arith.constant 0 : index
    %361 = vector.load %arg11[%360, %c0_171, %c0_172] : memref<8x8x32xf32, #tpu.memory_space<vmem>>, vector<1x8x32xf32>
    %362 = vector.shape_cast %361 : vector<1x8x32xf32> to vector<8x32xf32>
    %363 = vector.shape_cast %353 : vector<8x32xf32> to vector<1x8x32xf32>
    tpu.vector_store %arg11[%360, %c0_171, %c0_172], %363 {strides = array<i32>} : memref<8x8x32xf32, #tpu.memory_space<vmem>>, vector<1x8x32xf32>,
    %c4_i32 = arith.constant 4 : i32
    %c7_i32_173 = arith.constant 7 : i32
    %364 = arith.subi %c7_i32_173, %c4_i32 : i32
    %c0_174 = arith.constant 0 : index
    %c0_175 = arith.constant 0 : index
    %365 = vector.load %arg8[%c0_174, %c0_175] : memref<8x32xf32, #tpu.memory_space<vmem>>, vector<8x32xf32>
    %c0_176 = arith.constant 0 : index
    %c0_177 = arith.constant 0 : index
    %366 = vector.load %arg9[%c0_176, %c0_177] : memref<8x32xf32, #tpu.memory_space<vmem>>, vector<8x32xf32>
    %c0_178 = arith.constant 0 : index
    %c0_179 = arith.constant 0 : index
    %c0_180 = arith.constant 0 : index
    %367 = vector.load %arg2[%c0_178, %c0_179, %c0_180] : memref<2x32x96xf32, #tpu.memory_space<vmem>>, vector<1x32x96xf32>
    %368 = vector.shape_cast %367 : vector<1x32x96xf32> to vector<32x96xf32>
    %cst_181 = arith.constant dense<0.000000e+00> : vector<8x96xf32>
    %369 = tpu.matmul %365, %368, %cst_181 {dimension_numbers = #tpu.dot_dimension_numbers<[1], [0], [0], [1], [0, 0, 1, 1], [], []>} : vector<8x32xf32>, vector<32x96xf32>, vector<8x96xf32> -> vector<8x96xf32>
    %c0_182 = arith.constant 0 : index
    %c0_183 = arith.constant 0 : index
    %c0_184 = arith.constant 0 : index
    %370 = vector.load %arg4[%c0_182, %c0_183, %c0_184] : memref<2x1x96xf32, #tpu.memory_space<vmem>>, vector<1x1x96xf32>
    %371 = vector.shape_cast %370 : vector<1x1x96xf32> to vector<1x96xf32>
    %372 = vector.broadcast %371 : vector<1x96xf32> to vector<8x96xf32>
    %373 = arith.addf %369, %372 : vector<8x96xf32>
    %c1_185 = arith.constant 1 : index
    %c0_186 = arith.constant 0 : index
    %c0_187 = arith.constant 0 : index
    %374 = vector.load %arg2[%c1_185, %c0_186, %c0_187] : memref<2x32x96xf32, #tpu.memory_space<vmem>>, vector<1x32x96xf32>
    %375 = vector.shape_cast %374 : vector<1x32x96xf32> to vector<32x96xf32>
    %cst_188 = arith.constant dense<0.000000e+00> : vector<8x96xf32>
    %376 = tpu.matmul %366, %375, %cst_188 {dimension_numbers = #tpu.dot_dimension_numbers<[1], [0], [0], [1], [0, 0, 1, 1], [], []>} : vector<8x32xf32>, vector<32x96xf32>, vector<8x96xf32> -> vector<8x96xf32>
    %c1_189 = arith.constant 1 : index
    %c0_190 = arith.constant 0 : index
    %c0_191 = arith.constant 0 : index
    %377 = vector.load %arg4[%c1_189, %c0_190, %c0_191] : memref<2x1x96xf32, #tpu.memory_space<vmem>>, vector<1x1x96xf32>
    %378 = vector.shape_cast %377 : vector<1x1x96xf32> to vector<1x96xf32>
    %379 = vector.broadcast %378 : vector<1x96xf32> to vector<8x96xf32>
    %380 = arith.addf %376, %379 : vector<8x96xf32>
    %381 = arith.index_cast %c4_i32 : i32 to index
    %c0_192 = arith.constant 0 : index
    %c0_193 = arith.constant 0 : index
    %382 = vector.load %arg6[%381, %c0_192, %c0_193] : memref<8x8x96xf32, #tpu.memory_space<vmem>>, vector<1x8x96xf32>
    %383 = vector.shape_cast %382 : vector<1x8x96xf32> to vector<8x96xf32>
    %384 = vector.extract_strided_slice %383 {offsets = [0, 0], sizes = [8, 32], strides = [1, 1]} : vector<8x96xf32> to vector<8x32xf32>
    %385 = vector.extract_strided_slice %373 {offsets = [0, 0], sizes = [8, 32], strides = [1, 1]} : vector<8x96xf32> to vector<8x32xf32>
    %386 = arith.addf %384, %385 : vector<8x32xf32>
    %387 = arith.negf %386 : vector<8x32xf32>
    %388 = math.exp %387 : vector<8x32xf32>
    %cst_194 = arith.constant 1.000000e+00 : f32
    %389 = vector.broadcast %cst_194 : f32 to vector<8x32xf32>
    %390 = arith.addf %389, %388 : vector<8x32xf32>
    %391 = arith.divf %389, %390 : vector<8x32xf32>
    %392 = vector.extract_strided_slice %383 {offsets = [0, 32], sizes = [8, 32], strides = [1, 1]} : vector<8x96xf32> to vector<8x32xf32>
    %393 = vector.extract_strided_slice %373 {offsets = [0, 32], sizes = [8, 32], strides = [1, 1]} : vector<8x96xf32> to vector<8x32xf32>
    %394 = arith.addf %392, %393 : vector<8x32xf32>
    %395 = arith.negf %394 : vector<8x32xf32>
    %396 = math.exp %395 : vector<8x32xf32>
    %cst_195 = arith.constant 1.000000e+00 : f32
    %397 = vector.broadcast %cst_195 : f32 to vector<8x32xf32>
    %398 = arith.addf %397, %396 : vector<8x32xf32>
    %399 = arith.divf %397, %398 : vector<8x32xf32>
    %400 = vector.extract_strided_slice %383 {offsets = [0, 64], sizes = [8, 32], strides = [1, 1]} : vector<8x96xf32> to vector<8x32xf32>
    %401 = vector.extract_strided_slice %373 {offsets = [0, 64], sizes = [8, 32], strides = [1, 1]} : vector<8x96xf32> to vector<8x32xf32>
    %402 = arith.mulf %391, %401 : vector<8x32xf32>
    %403 = arith.addf %400, %402 : vector<8x32xf32>
    %404 = math.tanh %403 : vector<8x32xf32>
    %cst_196 = arith.constant 1.000000e+00 : f32
    %405 = vector.broadcast %cst_196 : f32 to vector<8x32xf32>
    %406 = arith.subf %405, %399 : vector<8x32xf32>
    %407 = arith.mulf %406, %404 : vector<8x32xf32>
    %408 = arith.mulf %399, %365 : vector<8x32xf32>
    %409 = arith.addf %407, %408 : vector<8x32xf32>
    %410 = arith.index_cast %364 : i32 to index
    %c0_197 = arith.constant 0 : index
    %c0_198 = arith.constant 0 : index
    %411 = vector.load %arg7[%410, %c0_197, %c0_198] : memref<8x8x96xf32, #tpu.memory_space<vmem>>, vector<1x8x96xf32>
    %412 = vector.shape_cast %411 : vector<1x8x96xf32> to vector<8x96xf32>
    %413 = vector.extract_strided_slice %412 {offsets = [0, 0], sizes = [8, 32], strides = [1, 1]} : vector<8x96xf32> to vector<8x32xf32>
    %414 = vector.extract_strided_slice %380 {offsets = [0, 0], sizes = [8, 32], strides = [1, 1]} : vector<8x96xf32> to vector<8x32xf32>
    %415 = arith.addf %413, %414 : vector<8x32xf32>
    %416 = arith.negf %415 : vector<8x32xf32>
    %417 = math.exp %416 : vector<8x32xf32>
    %cst_199 = arith.constant 1.000000e+00 : f32
    %418 = vector.broadcast %cst_199 : f32 to vector<8x32xf32>
    %419 = arith.addf %418, %417 : vector<8x32xf32>
    %420 = arith.divf %418, %419 : vector<8x32xf32>
    %421 = vector.extract_strided_slice %412 {offsets = [0, 32], sizes = [8, 32], strides = [1, 1]} : vector<8x96xf32> to vector<8x32xf32>
    %422 = vector.extract_strided_slice %380 {offsets = [0, 32], sizes = [8, 32], strides = [1, 1]} : vector<8x96xf32> to vector<8x32xf32>
    %423 = arith.addf %421, %422 : vector<8x32xf32>
    %424 = arith.negf %423 : vector<8x32xf32>
    %425 = math.exp %424 : vector<8x32xf32>
    %cst_200 = arith.constant 1.000000e+00 : f32
    %426 = vector.broadcast %cst_200 : f32 to vector<8x32xf32>
    %427 = arith.addf %426, %425 : vector<8x32xf32>
    %428 = arith.divf %426, %427 : vector<8x32xf32>
    %429 = vector.extract_strided_slice %412 {offsets = [0, 64], sizes = [8, 32], strides = [1, 1]} : vector<8x96xf32> to vector<8x32xf32>
    %430 = vector.extract_strided_slice %380 {offsets = [0, 64], sizes = [8, 32], strides = [1, 1]} : vector<8x96xf32> to vector<8x32xf32>
    %431 = arith.mulf %420, %430 : vector<8x32xf32>
    %432 = arith.addf %429, %431 : vector<8x32xf32>
    %433 = math.tanh %432 : vector<8x32xf32>
    %cst_201 = arith.constant 1.000000e+00 : f32
    %434 = vector.broadcast %cst_201 : f32 to vector<8x32xf32>
    %435 = arith.subf %434, %428 : vector<8x32xf32>
    %436 = arith.mulf %435, %433 : vector<8x32xf32>
    %437 = arith.mulf %428, %366 : vector<8x32xf32>
    %438 = arith.addf %436, %437 : vector<8x32xf32>
    %c0_202 = arith.constant 0 : index
    %c0_203 = arith.constant 0 : index
    %439 = vector.load %arg8[%c0_202, %c0_203] : memref<8x32xf32, #tpu.memory_space<vmem>>, vector<8x32xf32>
    tpu.vector_store %arg8[%c0_202, %c0_203], %409 {strides = array<i32>} : memref<8x32xf32, #tpu.memory_space<vmem>>, vector<8x32xf32>,
    %c0_204 = arith.constant 0 : index
    %c0_205 = arith.constant 0 : index
    %440 = vector.load %arg9[%c0_204, %c0_205] : memref<8x32xf32, #tpu.memory_space<vmem>>, vector<8x32xf32>
    tpu.vector_store %arg9[%c0_204, %c0_205], %438 {strides = array<i32>} : memref<8x32xf32, #tpu.memory_space<vmem>>, vector<8x32xf32>,
    %441 = arith.index_cast %c4_i32 : i32 to index
    %c0_206 = arith.constant 0 : index
    %c0_207 = arith.constant 0 : index
    %442 = vector.load %arg10[%441, %c0_206, %c0_207] : memref<8x8x32xf32, #tpu.memory_space<vmem>>, vector<1x8x32xf32>
    %443 = vector.shape_cast %442 : vector<1x8x32xf32> to vector<8x32xf32>
    %444 = vector.shape_cast %409 : vector<8x32xf32> to vector<1x8x32xf32>
    tpu.vector_store %arg10[%441, %c0_206, %c0_207], %444 {strides = array<i32>} : memref<8x8x32xf32, #tpu.memory_space<vmem>>, vector<1x8x32xf32>,
    %445 = arith.index_cast %364 : i32 to index
    %c0_208 = arith.constant 0 : index
    %c0_209 = arith.constant 0 : index
    %446 = vector.load %arg11[%445, %c0_208, %c0_209] : memref<8x8x32xf32, #tpu.memory_space<vmem>>, vector<1x8x32xf32>
    %447 = vector.shape_cast %446 : vector<1x8x32xf32> to vector<8x32xf32>
    %448 = vector.shape_cast %438 : vector<8x32xf32> to vector<1x8x32xf32>
    tpu.vector_store %arg11[%445, %c0_208, %c0_209], %448 {strides = array<i32>} : memref<8x8x32xf32, #tpu.memory_space<vmem>>, vector<1x8x32xf32>,
    %c5_i32 = arith.constant 5 : i32
    %c7_i32_210 = arith.constant 7 : i32
    %449 = arith.subi %c7_i32_210, %c5_i32 : i32
    %c0_211 = arith.constant 0 : index
    %c0_212 = arith.constant 0 : index
    %450 = vector.load %arg8[%c0_211, %c0_212] : memref<8x32xf32, #tpu.memory_space<vmem>>, vector<8x32xf32>
    %c0_213 = arith.constant 0 : index
    %c0_214 = arith.constant 0 : index
    %451 = vector.load %arg9[%c0_213, %c0_214] : memref<8x32xf32, #tpu.memory_space<vmem>>, vector<8x32xf32>
    %c0_215 = arith.constant 0 : index
    %c0_216 = arith.constant 0 : index
    %c0_217 = arith.constant 0 : index
    %452 = vector.load %arg2[%c0_215, %c0_216, %c0_217] : memref<2x32x96xf32, #tpu.memory_space<vmem>>, vector<1x32x96xf32>
    %453 = vector.shape_cast %452 : vector<1x32x96xf32> to vector<32x96xf32>
    %cst_218 = arith.constant dense<0.000000e+00> : vector<8x96xf32>
    %454 = tpu.matmul %450, %453, %cst_218 {dimension_numbers = #tpu.dot_dimension_numbers<[1], [0], [0], [1], [0, 0, 1, 1], [], []>} : vector<8x32xf32>, vector<32x96xf32>, vector<8x96xf32> -> vector<8x96xf32>
    %c0_219 = arith.constant 0 : index
    %c0_220 = arith.constant 0 : index
    %c0_221 = arith.constant 0 : index
    %455 = vector.load %arg4[%c0_219, %c0_220, %c0_221] : memref<2x1x96xf32, #tpu.memory_space<vmem>>, vector<1x1x96xf32>
    %456 = vector.shape_cast %455 : vector<1x1x96xf32> to vector<1x96xf32>
    %457 = vector.broadcast %456 : vector<1x96xf32> to vector<8x96xf32>
    %458 = arith.addf %454, %457 : vector<8x96xf32>
    %c1_222 = arith.constant 1 : index
    %c0_223 = arith.constant 0 : index
    %c0_224 = arith.constant 0 : index
    %459 = vector.load %arg2[%c1_222, %c0_223, %c0_224] : memref<2x32x96xf32, #tpu.memory_space<vmem>>, vector<1x32x96xf32>
    %460 = vector.shape_cast %459 : vector<1x32x96xf32> to vector<32x96xf32>
    %cst_225 = arith.constant dense<0.000000e+00> : vector<8x96xf32>
    %461 = tpu.matmul %451, %460, %cst_225 {dimension_numbers = #tpu.dot_dimension_numbers<[1], [0], [0], [1], [0, 0, 1, 1], [], []>} : vector<8x32xf32>, vector<32x96xf32>, vector<8x96xf32> -> vector<8x96xf32>
    %c1_226 = arith.constant 1 : index
    %c0_227 = arith.constant 0 : index
    %c0_228 = arith.constant 0 : index
    %462 = vector.load %arg4[%c1_226, %c0_227, %c0_228] : memref<2x1x96xf32, #tpu.memory_space<vmem>>, vector<1x1x96xf32>
    %463 = vector.shape_cast %462 : vector<1x1x96xf32> to vector<1x96xf32>
    %464 = vector.broadcast %463 : vector<1x96xf32> to vector<8x96xf32>
    %465 = arith.addf %461, %464 : vector<8x96xf32>
    %466 = arith.index_cast %c5_i32 : i32 to index
    %c0_229 = arith.constant 0 : index
    %c0_230 = arith.constant 0 : index
    %467 = vector.load %arg6[%466, %c0_229, %c0_230] : memref<8x8x96xf32, #tpu.memory_space<vmem>>, vector<1x8x96xf32>
    %468 = vector.shape_cast %467 : vector<1x8x96xf32> to vector<8x96xf32>
    %469 = vector.extract_strided_slice %468 {offsets = [0, 0], sizes = [8, 32], strides = [1, 1]} : vector<8x96xf32> to vector<8x32xf32>
    %470 = vector.extract_strided_slice %458 {offsets = [0, 0], sizes = [8, 32], strides = [1, 1]} : vector<8x96xf32> to vector<8x32xf32>
    %471 = arith.addf %469, %470 : vector<8x32xf32>
    %472 = arith.negf %471 : vector<8x32xf32>
    %473 = math.exp %472 : vector<8x32xf32>
    %cst_231 = arith.constant 1.000000e+00 : f32
    %474 = vector.broadcast %cst_231 : f32 to vector<8x32xf32>
    %475 = arith.addf %474, %473 : vector<8x32xf32>
    %476 = arith.divf %474, %475 : vector<8x32xf32>
    %477 = vector.extract_strided_slice %468 {offsets = [0, 32], sizes = [8, 32], strides = [1, 1]} : vector<8x96xf32> to vector<8x32xf32>
    %478 = vector.extract_strided_slice %458 {offsets = [0, 32], sizes = [8, 32], strides = [1, 1]} : vector<8x96xf32> to vector<8x32xf32>
    %479 = arith.addf %477, %478 : vector<8x32xf32>
    %480 = arith.negf %479 : vector<8x32xf32>
    %481 = math.exp %480 : vector<8x32xf32>
    %cst_232 = arith.constant 1.000000e+00 : f32
    %482 = vector.broadcast %cst_232 : f32 to vector<8x32xf32>
    %483 = arith.addf %482, %481 : vector<8x32xf32>
    %484 = arith.divf %482, %483 : vector<8x32xf32>
    %485 = vector.extract_strided_slice %468 {offsets = [0, 64], sizes = [8, 32], strides = [1, 1]} : vector<8x96xf32> to vector<8x32xf32>
    %486 = vector.extract_strided_slice %458 {offsets = [0, 64], sizes = [8, 32], strides = [1, 1]} : vector<8x96xf32> to vector<8x32xf32>
    %487 = arith.mulf %476, %486 : vector<8x32xf32>
    %488 = arith.addf %485, %487 : vector<8x32xf32>
    %489 = math.tanh %488 : vector<8x32xf32>
    %cst_233 = arith.constant 1.000000e+00 : f32
    %490 = vector.broadcast %cst_233 : f32 to vector<8x32xf32>
    %491 = arith.subf %490, %484 : vector<8x32xf32>
    %492 = arith.mulf %491, %489 : vector<8x32xf32>
    %493 = arith.mulf %484, %450 : vector<8x32xf32>
    %494 = arith.addf %492, %493 : vector<8x32xf32>
    %495 = arith.index_cast %449 : i32 to index
    %c0_234 = arith.constant 0 : index
    %c0_235 = arith.constant 0 : index
    %496 = vector.load %arg7[%495, %c0_234, %c0_235] : memref<8x8x96xf32, #tpu.memory_space<vmem>>, vector<1x8x96xf32>
    %497 = vector.shape_cast %496 : vector<1x8x96xf32> to vector<8x96xf32>
    %498 = vector.extract_strided_slice %497 {offsets = [0, 0], sizes = [8, 32], strides = [1, 1]} : vector<8x96xf32> to vector<8x32xf32>
    %499 = vector.extract_strided_slice %465 {offsets = [0, 0], sizes = [8, 32], strides = [1, 1]} : vector<8x96xf32> to vector<8x32xf32>
    %500 = arith.addf %498, %499 : vector<8x32xf32>
    %501 = arith.negf %500 : vector<8x32xf32>
    %502 = math.exp %501 : vector<8x32xf32>
    %cst_236 = arith.constant 1.000000e+00 : f32
    %503 = vector.broadcast %cst_236 : f32 to vector<8x32xf32>
    %504 = arith.addf %503, %502 : vector<8x32xf32>
    %505 = arith.divf %503, %504 : vector<8x32xf32>
    %506 = vector.extract_strided_slice %497 {offsets = [0, 32], sizes = [8, 32], strides = [1, 1]} : vector<8x96xf32> to vector<8x32xf32>
    %507 = vector.extract_strided_slice %465 {offsets = [0, 32], sizes = [8, 32], strides = [1, 1]} : vector<8x96xf32> to vector<8x32xf32>
    %508 = arith.addf %506, %507 : vector<8x32xf32>
    %509 = arith.negf %508 : vector<8x32xf32>
    %510 = math.exp %509 : vector<8x32xf32>
    %cst_237 = arith.constant 1.000000e+00 : f32
    %511 = vector.broadcast %cst_237 : f32 to vector<8x32xf32>
    %512 = arith.addf %511, %510 : vector<8x32xf32>
    %513 = arith.divf %511, %512 : vector<8x32xf32>
    %514 = vector.extract_strided_slice %497 {offsets = [0, 64], sizes = [8, 32], strides = [1, 1]} : vector<8x96xf32> to vector<8x32xf32>
    %515 = vector.extract_strided_slice %465 {offsets = [0, 64], sizes = [8, 32], strides = [1, 1]} : vector<8x96xf32> to vector<8x32xf32>
    %516 = arith.mulf %505, %515 : vector<8x32xf32>
    %517 = arith.addf %514, %516 : vector<8x32xf32>
    %518 = math.tanh %517 : vector<8x32xf32>
    %cst_238 = arith.constant 1.000000e+00 : f32
    %519 = vector.broadcast %cst_238 : f32 to vector<8x32xf32>
    %520 = arith.subf %519, %513 : vector<8x32xf32>
    %521 = arith.mulf %520, %518 : vector<8x32xf32>
    %522 = arith.mulf %513, %451 : vector<8x32xf32>
    %523 = arith.addf %521, %522 : vector<8x32xf32>
    %c0_239 = arith.constant 0 : index
    %c0_240 = arith.constant 0 : index
    %524 = vector.load %arg8[%c0_239, %c0_240] : memref<8x32xf32, #tpu.memory_space<vmem>>, vector<8x32xf32>
    tpu.vector_store %arg8[%c0_239, %c0_240], %494 {strides = array<i32>} : memref<8x32xf32, #tpu.memory_space<vmem>>, vector<8x32xf32>,
    %c0_241 = arith.constant 0 : index
    %c0_242 = arith.constant 0 : index
    %525 = vector.load %arg9[%c0_241, %c0_242] : memref<8x32xf32, #tpu.memory_space<vmem>>, vector<8x32xf32>
    tpu.vector_store %arg9[%c0_241, %c0_242], %523 {strides = array<i32>} : memref<8x32xf32, #tpu.memory_space<vmem>>, vector<8x32xf32>,
    %526 = arith.index_cast %c5_i32 : i32 to index
    %c0_243 = arith.constant 0 : index
    %c0_244 = arith.constant 0 : index
    %527 = vector.load %arg10[%526, %c0_243, %c0_244] : memref<8x8x32xf32, #tpu.memory_space<vmem>>, vector<1x8x32xf32>
    %528 = vector.shape_cast %527 : vector<1x8x32xf32> to vector<8x32xf32>
    %529 = vector.shape_cast %494 : vector<8x32xf32> to vector<1x8x32xf32>
    tpu.vector_store %arg10[%526, %c0_243, %c0_244], %529 {strides = array<i32>} : memref<8x8x32xf32, #tpu.memory_space<vmem>>, vector<1x8x32xf32>,
    %530 = arith.index_cast %449 : i32 to index
    %c0_245 = arith.constant 0 : index
    %c0_246 = arith.constant 0 : index
    %531 = vector.load %arg11[%530, %c0_245, %c0_246] : memref<8x8x32xf32, #tpu.memory_space<vmem>>, vector<1x8x32xf32>
    %532 = vector.shape_cast %531 : vector<1x8x32xf32> to vector<8x32xf32>
    %533 = vector.shape_cast %523 : vector<8x32xf32> to vector<1x8x32xf32>
    tpu.vector_store %arg11[%530, %c0_245, %c0_246], %533 {strides = array<i32>} : memref<8x8x32xf32, #tpu.memory_space<vmem>>, vector<1x8x32xf32>,
    %c6_i32 = arith.constant 6 : i32
    %c7_i32_247 = arith.constant 7 : i32
    %534 = arith.subi %c7_i32_247, %c6_i32 : i32
    %c0_248 = arith.constant 0 : index
    %c0_249 = arith.constant 0 : index
    %535 = vector.load %arg8[%c0_248, %c0_249] : memref<8x32xf32, #tpu.memory_space<vmem>>, vector<8x32xf32>
    %c0_250 = arith.constant 0 : index
    %c0_251 = arith.constant 0 : index
    %536 = vector.load %arg9[%c0_250, %c0_251] : memref<8x32xf32, #tpu.memory_space<vmem>>, vector<8x32xf32>
    %c0_252 = arith.constant 0 : index
    %c0_253 = arith.constant 0 : index
    %c0_254 = arith.constant 0 : index
    %537 = vector.load %arg2[%c0_252, %c0_253, %c0_254] : memref<2x32x96xf32, #tpu.memory_space<vmem>>, vector<1x32x96xf32>
    %538 = vector.shape_cast %537 : vector<1x32x96xf32> to vector<32x96xf32>
    %cst_255 = arith.constant dense<0.000000e+00> : vector<8x96xf32>
    %539 = tpu.matmul %535, %538, %cst_255 {dimension_numbers = #tpu.dot_dimension_numbers<[1], [0], [0], [1], [0, 0, 1, 1], [], []>} : vector<8x32xf32>, vector<32x96xf32>, vector<8x96xf32> -> vector<8x96xf32>
    %c0_256 = arith.constant 0 : index
    %c0_257 = arith.constant 0 : index
    %c0_258 = arith.constant 0 : index
    %540 = vector.load %arg4[%c0_256, %c0_257, %c0_258] : memref<2x1x96xf32, #tpu.memory_space<vmem>>, vector<1x1x96xf32>
    %541 = vector.shape_cast %540 : vector<1x1x96xf32> to vector<1x96xf32>
    %542 = vector.broadcast %541 : vector<1x96xf32> to vector<8x96xf32>
    %543 = arith.addf %539, %542 : vector<8x96xf32>
    %c1_259 = arith.constant 1 : index
    %c0_260 = arith.constant 0 : index
    %c0_261 = arith.constant 0 : index
    %544 = vector.load %arg2[%c1_259, %c0_260, %c0_261] : memref<2x32x96xf32, #tpu.memory_space<vmem>>, vector<1x32x96xf32>
    %545 = vector.shape_cast %544 : vector<1x32x96xf32> to vector<32x96xf32>
    %cst_262 = arith.constant dense<0.000000e+00> : vector<8x96xf32>
    %546 = tpu.matmul %536, %545, %cst_262 {dimension_numbers = #tpu.dot_dimension_numbers<[1], [0], [0], [1], [0, 0, 1, 1], [], []>} : vector<8x32xf32>, vector<32x96xf32>, vector<8x96xf32> -> vector<8x96xf32>
    %c1_263 = arith.constant 1 : index
    %c0_264 = arith.constant 0 : index
    %c0_265 = arith.constant 0 : index
    %547 = vector.load %arg4[%c1_263, %c0_264, %c0_265] : memref<2x1x96xf32, #tpu.memory_space<vmem>>, vector<1x1x96xf32>
    %548 = vector.shape_cast %547 : vector<1x1x96xf32> to vector<1x96xf32>
    %549 = vector.broadcast %548 : vector<1x96xf32> to vector<8x96xf32>
    %550 = arith.addf %546, %549 : vector<8x96xf32>
    %551 = arith.index_cast %c6_i32 : i32 to index
    %c0_266 = arith.constant 0 : index
    %c0_267 = arith.constant 0 : index
    %552 = vector.load %arg6[%551, %c0_266, %c0_267] : memref<8x8x96xf32, #tpu.memory_space<vmem>>, vector<1x8x96xf32>
    %553 = vector.shape_cast %552 : vector<1x8x96xf32> to vector<8x96xf32>
    %554 = vector.extract_strided_slice %553 {offsets = [0, 0], sizes = [8, 32], strides = [1, 1]} : vector<8x96xf32> to vector<8x32xf32>
    %555 = vector.extract_strided_slice %543 {offsets = [0, 0], sizes = [8, 32], strides = [1, 1]} : vector<8x96xf32> to vector<8x32xf32>
    %556 = arith.addf %554, %555 : vector<8x32xf32>
    %557 = arith.negf %556 : vector<8x32xf32>
    %558 = math.exp %557 : vector<8x32xf32>
    %cst_268 = arith.constant 1.000000e+00 : f32
    %559 = vector.broadcast %cst_268 : f32 to vector<8x32xf32>
    %560 = arith.addf %559, %558 : vector<8x32xf32>
    %561 = arith.divf %559, %560 : vector<8x32xf32>
    %562 = vector.extract_strided_slice %553 {offsets = [0, 32], sizes = [8, 32], strides = [1, 1]} : vector<8x96xf32> to vector<8x32xf32>
    %563 = vector.extract_strided_slice %543 {offsets = [0, 32], sizes = [8, 32], strides = [1, 1]} : vector<8x96xf32> to vector<8x32xf32>
    %564 = arith.addf %562, %563 : vector<8x32xf32>
    %565 = arith.negf %564 : vector<8x32xf32>
    %566 = math.exp %565 : vector<8x32xf32>
    %cst_269 = arith.constant 1.000000e+00 : f32
    %567 = vector.broadcast %cst_269 : f32 to vector<8x32xf32>
    %568 = arith.addf %567, %566 : vector<8x32xf32>
    %569 = arith.divf %567, %568 : vector<8x32xf32>
    %570 = vector.extract_strided_slice %553 {offsets = [0, 64], sizes = [8, 32], strides = [1, 1]} : vector<8x96xf32> to vector<8x32xf32>
    %571 = vector.extract_strided_slice %543 {offsets = [0, 64], sizes = [8, 32], strides = [1, 1]} : vector<8x96xf32> to vector<8x32xf32>
    %572 = arith.mulf %561, %571 : vector<8x32xf32>
    %573 = arith.addf %570, %572 : vector<8x32xf32>
    %574 = math.tanh %573 : vector<8x32xf32>
    %cst_270 = arith.constant 1.000000e+00 : f32
    %575 = vector.broadcast %cst_270 : f32 to vector<8x32xf32>
    %576 = arith.subf %575, %569 : vector<8x32xf32>
    %577 = arith.mulf %576, %574 : vector<8x32xf32>
    %578 = arith.mulf %569, %535 : vector<8x32xf32>
    %579 = arith.addf %577, %578 : vector<8x32xf32>
    %580 = arith.index_cast %534 : i32 to index
    %c0_271 = arith.constant 0 : index
    %c0_272 = arith.constant 0 : index
    %581 = vector.load %arg7[%580, %c0_271, %c0_272] : memref<8x8x96xf32, #tpu.memory_space<vmem>>, vector<1x8x96xf32>
    %582 = vector.shape_cast %581 : vector<1x8x96xf32> to vector<8x96xf32>
    %583 = vector.extract_strided_slice %582 {offsets = [0, 0], sizes = [8, 32], strides = [1, 1]} : vector<8x96xf32> to vector<8x32xf32>
    %584 = vector.extract_strided_slice %550 {offsets = [0, 0], sizes = [8, 32], strides = [1, 1]} : vector<8x96xf32> to vector<8x32xf32>
    %585 = arith.addf %583, %584 : vector<8x32xf32>
    %586 = arith.negf %585 : vector<8x32xf32>
    %587 = math.exp %586 : vector<8x32xf32>
    %cst_273 = arith.constant 1.000000e+00 : f32
    %588 = vector.broadcast %cst_273 : f32 to vector<8x32xf32>
    %589 = arith.addf %588, %587 : vector<8x32xf32>
    %590 = arith.divf %588, %589 : vector<8x32xf32>
    %591 = vector.extract_strided_slice %582 {offsets = [0, 32], sizes = [8, 32], strides = [1, 1]} : vector<8x96xf32> to vector<8x32xf32>
    %592 = vector.extract_strided_slice %550 {offsets = [0, 32], sizes = [8, 32], strides = [1, 1]} : vector<8x96xf32> to vector<8x32xf32>
    %593 = arith.addf %591, %592 : vector<8x32xf32>
    %594 = arith.negf %593 : vector<8x32xf32>
    %595 = math.exp %594 : vector<8x32xf32>
    %cst_274 = arith.constant 1.000000e+00 : f32
    %596 = vector.broadcast %cst_274 : f32 to vector<8x32xf32>
    %597 = arith.addf %596, %595 : vector<8x32xf32>
    %598 = arith.divf %596, %597 : vector<8x32xf32>
    %599 = vector.extract_strided_slice %582 {offsets = [0, 64], sizes = [8, 32], strides = [1, 1]} : vector<8x96xf32> to vector<8x32xf32>
    %600 = vector.extract_strided_slice %550 {offsets = [0, 64], sizes = [8, 32], strides = [1, 1]} : vector<8x96xf32> to vector<8x32xf32>
    %601 = arith.mulf %590, %600 : vector<8x32xf32>
    %602 = arith.addf %599, %601 : vector<8x32xf32>
    %603 = math.tanh %602 : vector<8x32xf32>
    %cst_275 = arith.constant 1.000000e+00 : f32
    %604 = vector.broadcast %cst_275 : f32 to vector<8x32xf32>
    %605 = arith.subf %604, %598 : vector<8x32xf32>
    %606 = arith.mulf %605, %603 : vector<8x32xf32>
    %607 = arith.mulf %598, %536 : vector<8x32xf32>
    %608 = arith.addf %606, %607 : vector<8x32xf32>
    %c0_276 = arith.constant 0 : index
    %c0_277 = arith.constant 0 : index
    %609 = vector.load %arg8[%c0_276, %c0_277] : memref<8x32xf32, #tpu.memory_space<vmem>>, vector<8x32xf32>
    tpu.vector_store %arg8[%c0_276, %c0_277], %579 {strides = array<i32>} : memref<8x32xf32, #tpu.memory_space<vmem>>, vector<8x32xf32>,
    %c0_278 = arith.constant 0 : index
    %c0_279 = arith.constant 0 : index
    %610 = vector.load %arg9[%c0_278, %c0_279] : memref<8x32xf32, #tpu.memory_space<vmem>>, vector<8x32xf32>
    tpu.vector_store %arg9[%c0_278, %c0_279], %608 {strides = array<i32>} : memref<8x32xf32, #tpu.memory_space<vmem>>, vector<8x32xf32>,
    %611 = arith.index_cast %c6_i32 : i32 to index
    %c0_280 = arith.constant 0 : index
    %c0_281 = arith.constant 0 : index
    %612 = vector.load %arg10[%611, %c0_280, %c0_281] : memref<8x8x32xf32, #tpu.memory_space<vmem>>, vector<1x8x32xf32>
    %613 = vector.shape_cast %612 : vector<1x8x32xf32> to vector<8x32xf32>
    %614 = vector.shape_cast %579 : vector<8x32xf32> to vector<1x8x32xf32>
    tpu.vector_store %arg10[%611, %c0_280, %c0_281], %614 {strides = array<i32>} : memref<8x8x32xf32, #tpu.memory_space<vmem>>, vector<1x8x32xf32>,
    %615 = arith.index_cast %534 : i32 to index
    %c0_282 = arith.constant 0 : index
    %c0_283 = arith.constant 0 : index
    %616 = vector.load %arg11[%615, %c0_282, %c0_283] : memref<8x8x32xf32, #tpu.memory_space<vmem>>, vector<1x8x32xf32>
    %617 = vector.shape_cast %616 : vector<1x8x32xf32> to vector<8x32xf32>
    %618 = vector.shape_cast %608 : vector<8x32xf32> to vector<1x8x32xf32>
    tpu.vector_store %arg11[%615, %c0_282, %c0_283], %618 {strides = array<i32>} : memref<8x8x32xf32, #tpu.memory_space<vmem>>, vector<1x8x32xf32>,
    %c7_i32_284 = arith.constant 7 : i32
    %c7_i32_285 = arith.constant 7 : i32
    %619 = arith.subi %c7_i32_285, %c7_i32_284 : i32
    %c0_286 = arith.constant 0 : index
    %c0_287 = arith.constant 0 : index
    %620 = vector.load %arg8[%c0_286, %c0_287] : memref<8x32xf32, #tpu.memory_space<vmem>>, vector<8x32xf32>
    %c0_288 = arith.constant 0 : index
    %c0_289 = arith.constant 0 : index
    %621 = vector.load %arg9[%c0_288, %c0_289] : memref<8x32xf32, #tpu.memory_space<vmem>>, vector<8x32xf32>
    %c0_290 = arith.constant 0 : index
    %c0_291 = arith.constant 0 : index
    %c0_292 = arith.constant 0 : index
    %622 = vector.load %arg2[%c0_290, %c0_291, %c0_292] : memref<2x32x96xf32, #tpu.memory_space<vmem>>, vector<1x32x96xf32>
    %623 = vector.shape_cast %622 : vector<1x32x96xf32> to vector<32x96xf32>
    %cst_293 = arith.constant dense<0.000000e+00> : vector<8x96xf32>
    %624 = tpu.matmul %620, %623, %cst_293 {dimension_numbers = #tpu.dot_dimension_numbers<[1], [0], [0], [1], [0, 0, 1, 1], [], []>} : vector<8x32xf32>, vector<32x96xf32>, vector<8x96xf32> -> vector<8x96xf32>
    %c0_294 = arith.constant 0 : index
    %c0_295 = arith.constant 0 : index
    %c0_296 = arith.constant 0 : index
    %625 = vector.load %arg4[%c0_294, %c0_295, %c0_296] : memref<2x1x96xf32, #tpu.memory_space<vmem>>, vector<1x1x96xf32>
    %626 = vector.shape_cast %625 : vector<1x1x96xf32> to vector<1x96xf32>
    %627 = vector.broadcast %626 : vector<1x96xf32> to vector<8x96xf32>
    %628 = arith.addf %624, %627 : vector<8x96xf32>
    %c1_297 = arith.constant 1 : index
    %c0_298 = arith.constant 0 : index
    %c0_299 = arith.constant 0 : index
    %629 = vector.load %arg2[%c1_297, %c0_298, %c0_299] : memref<2x32x96xf32, #tpu.memory_space<vmem>>, vector<1x32x96xf32>
    %630 = vector.shape_cast %629 : vector<1x32x96xf32> to vector<32x96xf32>
    %cst_300 = arith.constant dense<0.000000e+00> : vector<8x96xf32>
    %631 = tpu.matmul %621, %630, %cst_300 {dimension_numbers = #tpu.dot_dimension_numbers<[1], [0], [0], [1], [0, 0, 1, 1], [], []>} : vector<8x32xf32>, vector<32x96xf32>, vector<8x96xf32> -> vector<8x96xf32>
    %c1_301 = arith.constant 1 : index
    %c0_302 = arith.constant 0 : index
    %c0_303 = arith.constant 0 : index
    %632 = vector.load %arg4[%c1_301, %c0_302, %c0_303] : memref<2x1x96xf32, #tpu.memory_space<vmem>>, vector<1x1x96xf32>
    %633 = vector.shape_cast %632 : vector<1x1x96xf32> to vector<1x96xf32>
    %634 = vector.broadcast %633 : vector<1x96xf32> to vector<8x96xf32>
    %635 = arith.addf %631, %634 : vector<8x96xf32>
    %636 = arith.index_cast %c7_i32_284 : i32 to index
    %c0_304 = arith.constant 0 : index
    %c0_305 = arith.constant 0 : index
    %637 = vector.load %arg6[%636, %c0_304, %c0_305] : memref<8x8x96xf32, #tpu.memory_space<vmem>>, vector<1x8x96xf32>
    %638 = vector.shape_cast %637 : vector<1x8x96xf32> to vector<8x96xf32>
    %639 = vector.extract_strided_slice %638 {offsets = [0, 0], sizes = [8, 32], strides = [1, 1]} : vector<8x96xf32> to vector<8x32xf32>
    %640 = vector.extract_strided_slice %628 {offsets = [0, 0], sizes = [8, 32], strides = [1, 1]} : vector<8x96xf32> to vector<8x32xf32>
    %641 = arith.addf %639, %640 : vector<8x32xf32>
    %642 = arith.negf %641 : vector<8x32xf32>
    %643 = math.exp %642 : vector<8x32xf32>
    %cst_306 = arith.constant 1.000000e+00 : f32
    %644 = vector.broadcast %cst_306 : f32 to vector<8x32xf32>
    %645 = arith.addf %644, %643 : vector<8x32xf32>
    %646 = arith.divf %644, %645 : vector<8x32xf32>
    %647 = vector.extract_strided_slice %638 {offsets = [0, 32], sizes = [8, 32], strides = [1, 1]} : vector<8x96xf32> to vector<8x32xf32>
    %648 = vector.extract_strided_slice %628 {offsets = [0, 32], sizes = [8, 32], strides = [1, 1]} : vector<8x96xf32> to vector<8x32xf32>
    %649 = arith.addf %647, %648 : vector<8x32xf32>
    %650 = arith.negf %649 : vector<8x32xf32>
    %651 = math.exp %650 : vector<8x32xf32>
    %cst_307 = arith.constant 1.000000e+00 : f32
    %652 = vector.broadcast %cst_307 : f32 to vector<8x32xf32>
    %653 = arith.addf %652, %651 : vector<8x32xf32>
    %654 = arith.divf %652, %653 : vector<8x32xf32>
    %655 = vector.extract_strided_slice %638 {offsets = [0, 64], sizes = [8, 32], strides = [1, 1]} : vector<8x96xf32> to vector<8x32xf32>
    %656 = vector.extract_strided_slice %628 {offsets = [0, 64], sizes = [8, 32], strides = [1, 1]} : vector<8x96xf32> to vector<8x32xf32>
    %657 = arith.mulf %646, %656 : vector<8x32xf32>
    %658 = arith.addf %655, %657 : vector<8x32xf32>
    %659 = math.tanh %658 : vector<8x32xf32>
    %cst_308 = arith.constant 1.000000e+00 : f32
    %660 = vector.broadcast %cst_308 : f32 to vector<8x32xf32>
    %661 = arith.subf %660, %654 : vector<8x32xf32>
    %662 = arith.mulf %661, %659 : vector<8x32xf32>
    %663 = arith.mulf %654, %620 : vector<8x32xf32>
    %664 = arith.addf %662, %663 : vector<8x32xf32>
    %665 = arith.index_cast %619 : i32 to index
    %c0_309 = arith.constant 0 : index
    %c0_310 = arith.constant 0 : index
    %666 = vector.load %arg7[%665, %c0_309, %c0_310] : memref<8x8x96xf32, #tpu.memory_space<vmem>>, vector<1x8x96xf32>
    %667 = vector.shape_cast %666 : vector<1x8x96xf32> to vector<8x96xf32>
    %668 = vector.extract_strided_slice %667 {offsets = [0, 0], sizes = [8, 32], strides = [1, 1]} : vector<8x96xf32> to vector<8x32xf32>
    %669 = vector.extract_strided_slice %635 {offsets = [0, 0], sizes = [8, 32], strides = [1, 1]} : vector<8x96xf32> to vector<8x32xf32>
    %670 = arith.addf %668, %669 : vector<8x32xf32>
    %671 = arith.negf %670 : vector<8x32xf32>
    %672 = math.exp %671 : vector<8x32xf32>
    %cst_311 = arith.constant 1.000000e+00 : f32
    %673 = vector.broadcast %cst_311 : f32 to vector<8x32xf32>
    %674 = arith.addf %673, %672 : vector<8x32xf32>
    %675 = arith.divf %673, %674 : vector<8x32xf32>
    %676 = vector.extract_strided_slice %667 {offsets = [0, 32], sizes = [8, 32], strides = [1, 1]} : vector<8x96xf32> to vector<8x32xf32>
    %677 = vector.extract_strided_slice %635 {offsets = [0, 32], sizes = [8, 32], strides = [1, 1]} : vector<8x96xf32> to vector<8x32xf32>
    %678 = arith.addf %676, %677 : vector<8x32xf32>
    %679 = arith.negf %678 : vector<8x32xf32>
    %680 = math.exp %679 : vector<8x32xf32>
    %cst_312 = arith.constant 1.000000e+00 : f32
    %681 = vector.broadcast %cst_312 : f32 to vector<8x32xf32>
    %682 = arith.addf %681, %680 : vector<8x32xf32>
    %683 = arith.divf %681, %682 : vector<8x32xf32>
    %684 = vector.extract_strided_slice %667 {offsets = [0, 64], sizes = [8, 32], strides = [1, 1]} : vector<8x96xf32> to vector<8x32xf32>
    %685 = vector.extract_strided_slice %635 {offsets = [0, 64], sizes = [8, 32], strides = [1, 1]} : vector<8x96xf32> to vector<8x32xf32>
    %686 = arith.mulf %675, %685 : vector<8x32xf32>
    %687 = arith.addf %684, %686 : vector<8x32xf32>
    %688 = math.tanh %687 : vector<8x32xf32>
    %cst_313 = arith.constant 1.000000e+00 : f32
    %689 = vector.broadcast %cst_313 : f32 to vector<8x32xf32>
    %690 = arith.subf %689, %683 : vector<8x32xf32>
    %691 = arith.mulf %690, %688 : vector<8x32xf32>
    %692 = arith.mulf %683, %621 : vector<8x32xf32>
    %693 = arith.addf %691, %692 : vector<8x32xf32>
    %c0_314 = arith.constant 0 : index
    %c0_315 = arith.constant 0 : index
    %694 = vector.load %arg8[%c0_314, %c0_315] : memref<8x32xf32, #tpu.memory_space<vmem>>, vector<8x32xf32>
    tpu.vector_store %arg8[%c0_314, %c0_315], %664 {strides = array<i32>} : memref<8x32xf32, #tpu.memory_space<vmem>>, vector<8x32xf32>,
    %c0_316 = arith.constant 0 : index
    %c0_317 = arith.constant 0 : index
    %695 = vector.load %arg9[%c0_316, %c0_317] : memref<8x32xf32, #tpu.memory_space<vmem>>, vector<8x32xf32>
    tpu.vector_store %arg9[%c0_316, %c0_317], %693 {strides = array<i32>} : memref<8x32xf32, #tpu.memory_space<vmem>>, vector<8x32xf32>,
    %696 = arith.index_cast %c7_i32_284 : i32 to index
    %c0_318 = arith.constant 0 : index
    %c0_319 = arith.constant 0 : index
    %697 = vector.load %arg10[%696, %c0_318, %c0_319] : memref<8x8x32xf32, #tpu.memory_space<vmem>>, vector<1x8x32xf32>
    %698 = vector.shape_cast %697 : vector<1x8x32xf32> to vector<8x32xf32>
    %699 = vector.shape_cast %664 : vector<8x32xf32> to vector<1x8x32xf32>
    tpu.vector_store %arg10[%696, %c0_318, %c0_319], %699 {strides = array<i32>} : memref<8x8x32xf32, #tpu.memory_space<vmem>>, vector<1x8x32xf32>,
    %700 = arith.index_cast %619 : i32 to index
    %c0_320 = arith.constant 0 : index
    %c0_321 = arith.constant 0 : index
    %701 = vector.load %arg11[%700, %c0_320, %c0_321] : memref<8x8x32xf32, #tpu.memory_space<vmem>>, vector<1x8x32xf32>
    %702 = vector.shape_cast %701 : vector<1x8x32xf32> to vector<8x32xf32>
    %703 = vector.shape_cast %693 : vector<8x32xf32> to vector<1x8x32xf32>
    tpu.vector_store %arg11[%700, %c0_320, %c0_321], %703 {strides = array<i32>} : memref<8x8x32xf32, #tpu.memory_space<vmem>>, vector<1x8x32xf32>,
    %c8_i32 = arith.constant 8 : i32
    %c0_322 = arith.constant 0 : index
    %c0_323 = arith.constant 0 : index
    %c0_324 = arith.constant 0 : index
    %704 = vector.load %arg10[%c0_322, %c0_323, %c0_324] : memref<8x8x32xf32, #tpu.memory_space<vmem>>, vector<8x8x32xf32>
    %c0_325 = arith.constant 0 : index
    %c0_326 = arith.constant 0 : index
    %c0_327 = arith.constant 0 : index
    %705 = vector.load %arg11[%c0_325, %c0_326, %c0_327] : memref<8x8x32xf32, #tpu.memory_space<vmem>>, vector<8x8x32xf32>
    %706 = tpu.concatenate %704, %705 in 2 : vector<8x8x32xf32>, vector<8x8x32xf32> -> vector<8x8x64xf32>
    %c0_328 = arith.constant 0 : index
    %c0_329 = arith.constant 0 : index
    %c0_330 = arith.constant 0 : index
    %707 = vector.load %arg5[%c0_328, %c0_329, %c0_330] : memref<8x8x64xf32, #tpu.memory_space<vmem>>, vector<8x8x64xf32>
    tpu.vector_store %arg5[%c0_328, %c0_329, %c0_330], %706 {strides = array<i32>} : memref<8x8x64xf32, #tpu.memory_space<vmem>>, vector<8x8x64xf32>,
    return
  }
}

</mosaic_0001>

<llo_original>
// kernel: tpu_custom_call.1
$region0: #{tpu_custom_call.1}
  #allocation0 [shape = 'u32[]', space=smem, size = 0x4, offset = 0x4, fixed_abs, tag = 'smem constant byte address 0x4 - core index']
  #allocation1 [shape = 'u32[144,128]{1,0:T(1,128)}', space=vmem, size = 0x12000, scoped, tag = 'internal scratch']
  #allocation2 [shape = 'f32[8,8,96]{2,1,0:T(8,128)}', space=vmem, size = 0x8000, scoped, tag = 'scratch operand']
  #allocation3 [shape = 'f32[8,8,96]{2,1,0:T(8,128)}', space=vmem, size = 0x8000, scoped, tag = 'scratch operand']
  #allocation4 [shape = 'f32[8,32]{1,0:T(8,128)}', space=vmem, size = 0x1000, scoped, tag = 'scratch operand']
  #allocation5 [shape = 'f32[8,32]{1,0:T(8,128)}', space=vmem, size = 0x1000, scoped, tag = 'scratch operand']
  #allocation6 [shape = 'f32[8,8,32]{2,1,0:T(8,128)}', space=vmem, size = 0x8000, scoped, tag = 'scratch operand']
  #allocation7 [shape = 'f32[8,8,32]{2,1,0:T(8,128)}', space=vmem, size = 0x8000, scoped, tag = 'scratch operand']
  %s0 = inlined_call_operand.hbm [shape: f32[8,8,16], index: 0, kind: input, shape index: {}]
  %s1 = inlined_call_operand.hbm [shape: f32[2,16,96], index: 1, kind: input, shape index: {}]
  %s2 = inlined_call_operand.hbm [shape: f32[2,32,96], index: 2, kind: input, shape index: {}]
  %s3 = inlined_call_operand.vmem [shape: f32[2,1,96], index: 3, kind: input, shape index: {}]
  %s4 = inlined_call_operand.vmem [shape: f32[2,1,96], index: 4, kind: input, shape index: {}]
  %s5 = inlined_call_operand.hbm [shape: f32[8,8,64], index: 5, kind: output, shape index: {}]
  %s6 = sld [smem:[#allocation0]]
  $region42: #{tpu_custom_call.1} parent=0
    _
  %s8 = ssub.s32 1, %s6
  %s9 = scalar_select 0, %s8, %s6
  $region1: #{tpu_custom_call.1} parent=0
    #allocation8 [shape = 'u8[32768]{0}', space=vmem, size = 0x8000, scoped, tag = 'input window, operand 0, single buffered']
    #allocation9 [shape = 's32[1]{0}', space=sflag, size = 0x4, scoped, tag = 'scoped memory for tpu_custom_call.1']
    #allocation10 [shape = 's32[1]{0}', space=sflag, size = 0x4, scoped, tag = 'scoped memory for tpu_custom_call.1']
    #allocation11 [shape = 'u8[16384]{0}', space=vmem, size = 0x4000, scoped, tag = 'input window, operand 1, single buffered']
    #allocation12 [shape = 's32[1]{0}', space=sflag, size = 0x4, scoped, tag = 'scoped memory for tpu_custom_call.1']
    #allocation13 [shape = 'u8[32768]{0}', space=vmem, size = 0x8000, scoped, tag = 'input window, operand 2, single buffered']
    #allocation14 [shape = 'u8[32768]{0}', space=vmem, size = 0x8000, scoped, tag = 'output window, operand 0, single buffered']
    %10 = vsyncpa [#allocation9], 0
    %11 = vsyncpa [#allocation12], 0
    %12 = vsyncpa [#allocation10], 0
    // Predicated region
    $region2: #{tpu_custom_call.1} parent=1 // pred_check
      _
    $region3: #{tpu_custom_call.1} parent=1 // pred_check_branch
      %14 = sbr.rel (0) target = $region5
    $region4: #{tpu_custom_call.1} parent=1 // pred_region
      %s16 = ssub.s32 1024, 1024
      %17 = vsyncadd [#allocation9], %s16
      %s18 = sshll.u32 [#allocation8], 4
      %s19 = int_to_ptr.vmem [resolvable:$true] %s18
      %24 = dma.hbm_to_vmem [thread:$0]  %s0, 1024, %s19, [#allocation9], 128, 128, 8
    $region5: #{tpu_custom_call.1} parent=1 // pred_fallthru
      _
    // Predicated region
    $region6: #{tpu_custom_call.1} parent=1 // pred_check
      _
    $region7: #{tpu_custom_call.1} parent=1 // pred_check_branch
      %26 = sbr.rel (0) target = $region9
    $region8: #{tpu_custom_call.1} parent=1 // pred_region
      %s28 = ssub.s32 512, 512
      %29 = vsyncadd [#allocation12], %s28
      %s30 = sshll.u32 [#allocation11], 4
      %s31 = int_to_ptr.vmem [resolvable:$true] %s30
      %36 = dma.hbm_to_vmem [thread:$0]  %s1, 512, %s31, [#allocation12], 128, 128, 8
    $region9: #{tpu_custom_call.1} parent=1 // pred_fallthru
      _
    // Predicated region
    $region10: #{tpu_custom_call.1} parent=1 // pred_check
      _
    $region11: #{tpu_custom_call.1} parent=1 // pred_check_branch
      %38 = sbr.rel (0) target = $region13
    $region12: #{tpu_custom_call.1} parent=1 // pred_region
      %s40 = ssub.s32 1024, 1024
      %41 = vsyncadd [#allocation12], %s40
      %s42 = sshll.u32 [#allocation13], 4
      %s43 = int_to_ptr.vmem [resolvable:$true] %s42
      %48 = dma.hbm_to_vmem [thread:$0]  %s2, 1024, %s43, [#allocation12], 128, 128, 8
    $region13: #{tpu_custom_call.1} parent=1 // pred_fallthru
      _
    // Predicated region
    $region14: #{tpu_custom_call.1} parent=1 // pred_check
      _
    $region15: #{tpu_custom_call.1} parent=1 // pred_check_branch
      %50 = sbr.rel (0) target = $region17
    $region16: #{tpu_custom_call.1} parent=1 // pred_region
      _
    $region17: #{tpu_custom_call.1} parent=1 // pred_fallthru
      _
    // Predicated region
    $region18: #{tpu_custom_call.1} parent=1 // pred_check
      _
    $region19: #{tpu_custom_call.1} parent=1 // pred_check_branch
      %52 = sbr.rel (0) target = $region21
    $region20: #{tpu_custom_call.1} parent=1 // pred_region
      _
    $region21: #{tpu_custom_call.1} parent=1 // pred_fallthru
      _
    // Predicated region
    $region22: #{tpu_custom_call.1} parent=1 // pred_check
      _
    $region23: #{tpu_custom_call.1} parent=1 // pred_check_branch
      %54 = sbr.rel (0) target = $region25
    $region24: #{tpu_custom_call.1} parent=1 // pred_region
      %55 = dma.done [#allocation9], 1024
    $region25: #{tpu_custom_call.1} parent=1 // pred_fallthru
      _
    // Predicated region
    $region26: #{tpu_custom_call.1} parent=1 // pred_check
      _
    $region27: #{tpu_custom_call.1} parent=1 // pred_check_branch
      %57 = sbr.rel (0) target = $region29
    $region28: #{tpu_custom_call.1} parent=1 // pred_region
      %58 = dma.done [#allocation12], 512
    $region29: #{tpu_custom_call.1} parent=1 // pred_fallthru
      _
    // Predicated region
    $region30: #{tpu_custom_call.1} parent=1 // pred_check
      _
    $region31: #{tpu_custom_call.1} parent=1 // pred_check_branch
      %60 = sbr.rel (0) target = $region33
    $region32: #{tpu_custom_call.1} parent=1 // pred_region
      %61 = dma.done [#allocation12], 1024
    $region33: #{tpu_custom_call.1} parent=1 // pred_fallthru
      _
    %v62 = vld [vmem:[#allocation8] sm:$0xff]
    %v63 = vld [vmem:[#allocation8 + $0x8] sm:$0xff]
    %v64 = vld [vmem:[#allocation8 + $0x10] sm:$0xff]
    %v65 = vld [vmem:[#allocation8 + $0x18] sm:$0xff]
    %v66 = vld [vmem:[#allocation8 + $0x20] sm:$0xff]
    %v67 = vld [vmem:[#allocation8 + $0x28] sm:$0xff]
    %v68 = vld [vmem:[#allocation8 + $0x30] sm:$0xff]
    %v69 = vld [vmem:[#allocation8 + $0x38] sm:$0xff]
    %v70 = vld [vmem:[#allocation11] sm:$0xff]
    %v71 = vld [vmem:[#allocation11 + $0x8] sm:$0xff]
    %v72 = vld [vmem:[%s3] sm:$0x1]
    %v74 = vlaneseq
    %v75 = vshrl.u32 %v74, 7
    %v76 = vsub.s32 0, %v75
    %v77 = vrot.slane %v72, %v76
    %vm79 = vcmask 130048
    %v81 = vsel %vm79, %v62, 0
    %v84 = vsel %vm79, %v63, 0
    %v87 = vsel %vm79, %v64, 0
    %v90 = vsel %vm79, %v65, 0
    %v93 = vsel %vm79, %v66, 0
    %v96 = vsel %vm79, %v67, 0
    %v99 = vsel %vm79, %v68, 0
    %v102 = vsel %vm79, %v69, 0
    %104 = vmatprep.subr.mxu0 0.0
    %105 = vmatpush1.msra.mxu0 %v70
    %106 = vmatprep.subr.mxu0 0.0
    %107 = vmatpush1.msra.mxu0 %v71
    %108 = vmatprep.subr.mxu0 0.0
    %109 = vmatpush1.msra.mxu0 0.0
    %110 = vmatprep.subr.mxu0 0.0
    %111 = vmatpush1.msra.mxu0 0.0
    %112 = vmatprep.subr.mxu0 0.0
    %113 = vmatpush1.msra.mxu0 0.0
    %114 = vmatprep.subr.mxu0 0.0
    %115 = vmatpush1.msra.mxu0 0.0
    %116 = vmatprep.subr.mxu0 0.0
    %117 = vmatpush1.msra.mxu0 0.0
    %118 = vmatprep.subr.mxu0 0.0
    %119 = vmatpush1.msra.mxu0 0.0
    %120 = vmatprep.subr.mxu0 0.0
    %121 = vmatpush1.msra.mxu0 0.0
    %122 = vmatprep.subr.mxu0 0.0
    %123 = vmatpush1.msra.mxu0 0.0
    %124 = vmatprep.subr.mxu0 0.0
    %125 = vmatpush1.msra.mxu0 0.0
    %126 = vmatprep.subr.mxu0 0.0
    %127 = vmatpush1.msra.mxu0 0.0
    %128 = vmatprep.subr.mxu0 0.0
    %129 = vmatpush1.msra.mxu0 0.0
    %130 = vmatprep.subr.mxu0 0.0
    %131 = vmatpush1.msra.mxu0 0.0
    %132 = vmatprep.subr.mxu0 0.0
    %133 = vmatpush1.msra.mxu0 0.0
    %134 = vmatprep.subr.mxu0 0.0
    %135 = vmatpush1.msra.mxu0 0.0
    %136 = vmatprep.subr.mxu0 0.0
    %137 = vmatpush1.msra.mxu0 0.0
    %138 = vmatprep.subr.mxu0 0.0
    %139 = vmatpush1.msra.mxu0 0.0
    %140 = vmatprep.subr.mxu0 0.0
    %141 = vmatpush1.msra.mxu0 0.0
    %142 = vmatprep.subr.mxu0 0.0
    %143 = vmatpush1.msra.mxu0 0.0
    %144 = vmatprep.subr.mxu0 0.0
    %145 = vmatpush1.msra.mxu0 0.0
    %146 = vmatprep.subr.mxu0 0.0
    %147 = vmatpush1.msra.mxu0 0.0
    %148 = vmatprep.subr.mxu0 0.0
    %149 = vmatpush1.msra.mxu0 0.0
    %150 = vmatprep.subr.mxu0 0.0
    %151 = vmatpush1.msra.mxu0 0.0
    %152 = vmatprep.subr.mxu0 0.0
    %153 = vmatpush1.msra.mxu0 0.0
    %154 = vmatprep.subr.mxu0 0.0
    %155 = vmatpush1.msra.mxu0 0.0
    %156 = vmatprep.subr.mxu0 0.0
    %157 = vmatpush1.msra.mxu0 0.0
    %158 = vmatprep.subr.mxu0 0.0
    %159 = vmatpush1.msra.mxu0 0.0
    %160 = vmatprep.subr.mxu0 0.0
    %161 = vmatpush1.msra.mxu0 0.0
    %162 = vmatprep.subr.mxu0 0.0
    %163 = vmatpush1.msra.mxu0 0.0
    %164 = vmatprep.subr.mxu0 0.0
    %165 = vmatpush1.msra.mxu0 0.0
    %166 = vmatprep.subr.mxu0 0.0
    %167 = vmatpush1.msra.mxu0 0.0
    %168 = vmatprep.mubr.f32.mxu0 0.0
    %169 = vmatmul.mubr.f32.gmra.mrb[0].mxu0 %v81
    %v170 = vpop.f32.mrb[0].mxu0
    %v171 = vadd.f32 %v77, %v170
    %v172 = vpop.f32.mrb[0].mxu0
    %173 = vmatprep.mubr.f32.mxu0 0.0
    %174 = vmatmul.mubr.f32.gmra.mrb[0].mxu0 %v84
    %v175 = vpop.f32.mrb[0].mxu0
    %v176 = vadd.f32 %v77, %v175
    %v177 = vpop.f32.mrb[0].mxu0
    %178 = vmatprep.mubr.f32.mxu0 0.0
    %179 = vmatmul.mubr.f32.gmra.mrb[0].mxu0 %v87
    %v180 = vpop.f32.mrb[0].mxu0
    %v181 = vadd.f32 %v77, %v180
    %v182 = vpop.f32.mrb[0].mxu0
    %183 = vmatprep.mubr.f32.mxu0 0.0
    %184 = vmatmul.mubr.f32.gmra.mrb[0].mxu0 %v90
    %v185 = vpop.f32.mrb[0].mxu0
    %v186 = vadd.f32 %v77, %v185
    %v187 = vpop.f32.mrb[0].mxu0
    %188 = vmatprep.mubr.f32.mxu0 0.0
    %189 = vmatmul.mubr.f32.gmra.mrb[0].mxu0 %v93
    %v190 = vpop.f32.mrb[0].mxu0
    %v191 = vadd.f32 %v77, %v190
    %v192 = vpop.f32.mrb[0].mxu0
    %193 = vmatprep.mubr.f32.mxu0 0.0
    %194 = vmatmul.mubr.f32.gmra.mrb[0].mxu0 %v96
    %v195 = vpop.f32.mrb[0].mxu0
    %v196 = vadd.f32 %v77, %v195
    %v197 = vpop.f32.mrb[0].mxu0
    %198 = vmatprep.mubr.f32.mxu0 0.0
    %199 = vmatmul.mubr.f32.gmra.mrb[0].mxu0 %v99
    %v200 = vpop.f32.mrb[0].mxu0
    %v201 = vadd.f32 %v77, %v200
    %v202 = vpop.f32.mrb[0].mxu0
    %203 = vmatprep.mubr.f32.mxu0 0.0
    %204 = vmatmul.mubr.f32.gmra.mrb[0].mxu0 %v102
    %v205 = vpop.f32.mrb[0].mxu0
    %v206 = vadd.f32 %v77, %v205
    %v207 = vpop.f32.mrb[0].mxu0
    %208 = vdwg.mxu0
    %vm209 = vcmask 785408
    %210 = vst.msk [vmem:[#allocation2] sm:$0xff] %vm209, %v171
    %211 = vst.msk [vmem:[#allocation2 + $0x8] sm:$0xff] %vm209, %v176
    %212 = vst.msk [vmem:[#allocation2 + $0x10] sm:$0xff] %vm209, %v181
    %213 = vst.msk [vmem:[#allocation2 + $0x18] sm:$0xff] %vm209, %v186
    %214 = vst.msk [vmem:[#allocation2 + $0x20] sm:$0xff] %vm209, %v191
    %215 = vst.msk [vmem:[#allocation2 + $0x28] sm:$0xff] %vm209, %v196
    %216 = vst.msk [vmem:[#allocation2 + $0x30] sm:$0xff] %vm209, %v201
    %217 = vst.msk [vmem:[#allocation2 + $0x38] sm:$0xff] %vm209, %v206
    %s218 = scalar_lea.vmem [#allocation11], 16
    %v219 = vld [vmem:[%s218] sm:$0xff]
    %v220 = vld [vmem:[%s218 + $0x8] sm:$0xff]
    %s221 = scalar_lea.vmem %s3, 1
    %v222 = vld [vmem:[%s221] sm:$0x1]
    %v224 = vlaneseq
    %v225 = vshrl.u32 %v224, 7
    %v226 = vsub.s32 0, %v225
    %v227 = vrot.slane %v222, %v226
    %229 = vmatprep.subr.mxu0 0.0
    %230 = vmatpush1.msra.mxu0 %v219
    %231 = vmatprep.subr.mxu0 0.0
    %232 = vmatpush1.msra.mxu0 %v220
    %233 = vmatprep.subr.mxu0 0.0
    %234 = vmatpush1.msra.mxu0 0.0
    %235 = vmatprep.subr.mxu0 0.0
    %236 = vmatpush1.msra.mxu0 0.0
    %237 = vmatprep.subr.mxu0 0.0
    %238 = vmatpush1.msra.mxu0 0.0
    %239 = vmatprep.subr.mxu0 0.0
    %240 = vmatpush1.msra.mxu0 0.0
    %241 = vmatprep.subr.mxu0 0.0
    %242 = vmatpush1.msra.mxu0 0.0
    %243 = vmatprep.subr.mxu0 0.0
    %244 = vmatpush1.msra.mxu0 0.0
    %245 = vmatprep.subr.mxu0 0.0
    %246 = vmatpush1.msra.mxu0 0.0
    %247 = vmatprep.subr.mxu0 0.0
    %248 = vmatpush1.msra.mxu0 0.0
    %249 = vmatprep.subr.mxu0 0.0
    %250 = vmatpush1.msra.mxu0 0.0
    %251 = vmatprep.subr.mxu0 0.0
    %252 = vmatpush1.msra.mxu0 0.0
    %253 = vmatprep.subr.mxu0 0.0
    %254 = vmatpush1.msra.mxu0 0.0
    %255 = vmatprep.subr.mxu0 0.0
    %256 = vmatpush1.msra.mxu0 0.0
    %257 = vmatprep.subr.mxu0 0.0
    %258 = vmatpush1.msra.mxu0 0.0
    %259 = vmatprep.subr.mxu0 0.0
    %260 = vmatpush1.msra.mxu0 0.0
    %261 = vmatprep.subr.mxu0 0.0
    %262 = vmatpush1.msra.mxu0 0.0
    %263 = vmatprep.subr.mxu0 0.0
    %264 = vmatpush1.msra.mxu0 0.0
    %265 = vmatprep.subr.mxu0 0.0
    %266 = vmatpush1.msra.mxu0 0.0
    %267 = vmatprep.subr.mxu0 0.0
    %268 = vmatpush1.msra.mxu0 0.0
    %269 = vmatprep.subr.mxu0 0.0
    %270 = vmatpush1.msra.mxu0 0.0
    %271 = vmatprep.subr.mxu0 0.0
    %272 = vmatpush1.msra.mxu0 0.0
    %273 = vmatprep.subr.mxu0 0.0
    %274 = vmatpush1.msra.mxu0 0.0
    %275 = vmatprep.subr.mxu0 0.0
    %276 = vmatpush1.msra.mxu0 0.0
    %277 = vmatprep.subr.mxu0 0.0
    %278 = vmatpush1.msra.mxu0 0.0
    %279 = vmatprep.subr.mxu0 0.0
    %280 = vmatpush1.msra.mxu0 0.0
    %281 = vmatprep.subr.mxu0 0.0
    %282 = vmatpush1.msra.mxu0 0.0
    %283 = vmatprep.subr.mxu0 0.0
    %284 = vmatpush1.msra.mxu0 0.0
    %285 = vmatprep.subr.mxu0 0.0
    %286 = vmatpush1.msra.mxu0 0.0
    %287 = vmatprep.subr.mxu0 0.0
    %288 = vmatpush1.msra.mxu0 0.0
    %289 = vmatprep.subr.mxu0 0.0
    %290 = vmatpush1.msra.mxu0 0.0
    %291 = vmatprep.subr.mxu0 0.0
    %292 = vmatpush1.msra.mxu0 0.0
    %293 = vmatprep.mubr.f32.mxu0 0.0
    %294 = vmatmul.mubr.f32.gmra.mrb[0].mxu0 %v81
    %v295 = vpop.f32.mrb[0].mxu0
    %v296 = vadd.f32 %v227, %v295
    %v297 = vpop.f32.mrb[0].mxu0
    %298 = vmatprep.mubr.f32.mxu0 0.0
    %299 = vmatmul.mubr.f32.gmra.mrb[0].mxu0 %v84
    %v300 = vpop.f32.mrb[0].mxu0
    %v301 = vadd.f32 %v227, %v300
    %v302 = vpop.f32.mrb[0].mxu0
    %303 = vmatprep.mubr.f32.mxu0 0.0
    %304 = vmatmul.mubr.f32.gmra.mrb[0].mxu0 %v87
    %v305 = vpop.f32.mrb[0].mxu0
    %v306 = vadd.f32 %v227, %v305
    %v307 = vpop.f32.mrb[0].mxu0
    %308 = vmatprep.mubr.f32.mxu0 0.0
    %309 = vmatmul.mubr.f32.gmra.mrb[0].mxu0 %v90
    %v310 = vpop.f32.mrb[0].mxu0
    %v311 = vadd.f32 %v227, %v310
    %v312 = vpop.f32.mrb[0].mxu0
    %313 = vmatprep.mubr.f32.mxu0 0.0
    %314 = vmatmul.mubr.f32.gmra.mrb[0].mxu0 %v93
    %v315 = vpop.f32.mrb[0].mxu0
    %v316 = vadd.f32 %v227, %v315
    %v317 = vpop.f32.mrb[0].mxu0
    %318 = vmatprep.mubr.f32.mxu0 0.0
    %319 = vmatmul.mubr.f32.gmra.mrb[0].mxu0 %v96
    %v320 = vpop.f32.mrb[0].mxu0
    %v321 = vadd.f32 %v227, %v320
    %v322 = vpop.f32.mrb[0].mxu0
    %323 = vmatprep.mubr.f32.mxu0 0.0
    %324 = vmatmul.mubr.f32.gmra.mrb[0].mxu0 %v99
    %v325 = vpop.f32.mrb[0].mxu0
    %v326 = vadd.f32 %v227, %v325
    %v327 = vpop.f32.mrb[0].mxu0
    %328 = vmatprep.mubr.f32.mxu0 0.0
    %329 = vmatmul.mubr.f32.gmra.mrb[0].mxu0 %v102
    %v330 = vpop.f32.mrb[0].mxu0
    %v331 = vadd.f32 %v227, %v330
    %v332 = vpop.f32.mrb[0].mxu0
    %333 = vdwg.mxu0
    %334 = vst.msk [vmem:[#allocation3] sm:$0xff] %vm209, %v296
    %335 = vst.msk [vmem:[#allocation3 + $0x8] sm:$0xff] %vm209, %v301
    %336 = vst.msk [vmem:[#allocation3 + $0x10] sm:$0xff] %vm209, %v306
    %337 = vst.msk [vmem:[#allocation3 + $0x18] sm:$0xff] %vm209, %v311
    %338 = vst.msk [vmem:[#allocation3 + $0x20] sm:$0xff] %vm209, %v316
    %339 = vst.msk [vmem:[#allocation3 + $0x28] sm:$0xff] %vm209, %v321
    %340 = vst.msk [vmem:[#allocation3 + $0x30] sm:$0xff] %vm209, %v326
    %341 = vst.msk [vmem:[#allocation3 + $0x38] sm:$0xff] %vm209, %v331
    %vm342 = vcmask 261120
    %343 = vst.msk [vmem:[#allocation4] sm:$0xff] %vm342, 0.0
    %344 = vst.msk [vmem:[#allocation5] sm:$0xff] %vm342, 0.0
    %v345 = vld [vmem:[#allocation4] sm:$0xff]
    %v346 = vld [vmem:[#allocation5] sm:$0xff]
    %v347 = vld [vmem:[#allocation13] sm:$0xff]
    %v348 = vld [vmem:[#allocation13 + $0x8] sm:$0xff]
    %v349 = vld [vmem:[#allocation13 + $0x10] sm:$0xff]
    %v350 = vld [vmem:[#allocation13 + $0x18] sm:$0xff]
    %v351 = vld [vmem:[%s4] sm:$0x1]
    %v353 = vlaneseq
    %v354 = vshrl.u32 %v353, 7
    %v355 = vsub.s32 0, %v354
    %v356 = vrot.slane %v351, %v355
    %v359 = vsel %vm342, %v345, 0
    %361 = vmatprep.subr.mxu0 0.0
    %362 = vmatpush1.msra.mxu0 %v347
    %363 = vmatprep.subr.mxu0 0.0
    %364 = vmatpush1.msra.mxu0 %v348
    %365 = vmatprep.subr.mxu0 0.0
    %366 = vmatpush1.msra.mxu0 %v349
    %367 = vmatprep.subr.mxu0 0.0
    %368 = vmatpush1.msra.mxu0 %v350
    %369 = vmatprep.subr.mxu0 0.0
    %370 = vmatpush1.msra.mxu0 0.0
    %371 = vmatprep.subr.mxu0 0.0
    %372 = vmatpush1.msra.mxu0 0.0
    %373 = vmatprep.subr.mxu0 0.0
    %374 = vmatpush1.msra.mxu0 0.0
    %375 = vmatprep.subr.mxu0 0.0
    %376 = vmatpush1.msra.mxu0 0.0
    %377 = vmatprep.subr.mxu0 0.0
    %378 = vmatpush1.msra.mxu0 0.0
    %379 = vmatprep.subr.mxu0 0.0
    %380 = vmatpush1.msra.mxu0 0.0
    %381 = vmatprep.subr.mxu0 0.0
    %382 = vmatpush1.msra.mxu0 0.0
    %383 = vmatprep.subr.mxu0 0.0
    %384 = vmatpush1.msra.mxu0 0.0
    %385 = vmatprep.subr.mxu0 0.0
    %386 = vmatpush1.msra.mxu0 0.0
    %387 = vmatprep.subr.mxu0 0.0
    %388 = vmatpush1.msra.mxu0 0.0
    %389 = vmatprep.subr.mxu0 0.0
    %390 = vmatpush1.msra.mxu0 0.0
    %391 = vmatprep.subr.mxu0 0.0
    %392 = vmatpush1.msra.mxu0 0.0
    %393 = vmatprep.subr.mxu0 0.0
    %394 = vmatpush1.msra.mxu0 0.0
    %395 = vmatprep.subr.mxu0 0.0
    %396 = vmatpush1.msra.mxu0 0.0
    %397 = vmatprep.subr.mxu0 0.0
    %398 = vmatpush1.msra.mxu0 0.0
    %399 = vmatprep.subr.mxu0 0.0
    %400 = vmatpush1.msra.mxu0 0.0
    %401 = vmatprep.subr.mxu0 0.0
    %402 = vmatpush1.msra.mxu0 0.0
    %403 = vmatprep.subr.mxu0 0.0
    %404 = vmatpush1.msra.mxu0 0.0
    %405 = vmatprep.subr.mxu0 0.0
    %406 = vmatpush1.msra.mxu0 0.0
    %407 = vmatprep.subr.mxu0 0.0
    %408 = vmatpush1.msra.mxu0 0.0
    %409 = vmatprep.subr.mxu0 0.0
    %410 = vmatpush1.msra.mxu0 0.0
    %411 = vmatprep.subr.mxu0 0.0
    %412 = vmatpush1.msra.mxu0 0.0
    %413 = vmatprep.subr.mxu0 0.0
    %414 = vmatpush1.msra.mxu0 0.0
    %415 = vmatprep.subr.mxu0 0.0
    %416 = vmatpush1.msra.mxu0 0.0
    %417 = vmatprep.subr.mxu0 0.0
    %418 = vmatpush1.msra.mxu0 0.0
    %419 = vmatprep.subr.mxu0 0.0
    %420 = vmatpush1.msra.mxu0 0.0
    %421 = vmatprep.subr.mxu0 0.0
    %422 = vmatpush1.msra.mxu0 0.0
    %423 = vmatprep.subr.mxu0 0.0
    %424 = vmatpush1.msra.mxu0 0.0
    %425 = vmatprep.mubr.f32.mxu0 0.0
    %426 = vmatmul.mubr.f32.gmra.mrb[0].mxu0 %v359
    %v427 = vpop.f32.mrb[0].mxu0
    %v428 = vadd.f32 %v356, %v427
    %v429 = vpop.f32.mrb[0].mxu0
    %430 = vdwg.mxu0
    %s431 = scalar_lea.vmem [#allocation13], 32
    %v432 = vld [vmem:[%s431] sm:$0xff]
    %v433 = vld [vmem:[%s431 + $0x8] sm:$0xff]
    %v434 = vld [vmem:[%s431 + $0x10] sm:$0xff]
    %v435 = vld [vmem:[%s431 + $0x18] sm:$0xff]
    %s436 = scalar_lea.vmem %s4, 1
    %v437 = vld [vmem:[%s436] sm:$0x1]
    %v439 = vlaneseq
    %v440 = vshrl.u32 %v439, 7
    %v441 = vsub.s32 0, %v440
    %v442 = vrot.slane %v437, %v441
    %v445 = vsel %vm342, %v346, 0
    %447 = vmatprep.subr.mxu0 0.0
    %448 = vmatpush1.msra.mxu0 %v432
    %449 = vmatprep.subr.mxu0 0.0
    %450 = vmatpush1.msra.mxu0 %v433
    %451 = vmatprep.subr.mxu0 0.0
    %452 = vmatpush1.msra.mxu0 %v434
    %453 = vmatprep.subr.mxu0 0.0
    %454 = vmatpush1.msra.mxu0 %v435
    %455 = vmatprep.subr.mxu0 0.0
    %456 = vmatpush1.msra.mxu0 0.0
    %457 = vmatprep.subr.mxu0 0.0
    %458 = vmatpush1.msra.mxu0 0.0
    %459 = vmatprep.subr.mxu0 0.0
    %460 = vmatpush1.msra.mxu0 0.0
    %461 = vmatprep.subr.mxu0 0.0
    %462 = vmatpush1.msra.mxu0 0.0
    %463 = vmatprep.subr.mxu0 0.0
    %464 = vmatpush1.msra.mxu0 0.0
    %465 = vmatprep.subr.mxu0 0.0
    %466 = vmatpush1.msra.mxu0 0.0
    %467 = vmatprep.subr.mxu0 0.0
    %468 = vmatpush1.msra.mxu0 0.0
    %469 = vmatprep.subr.mxu0 0.0
    %470 = vmatpush1.msra.mxu0 0.0
    %471 = vmatprep.subr.mxu0 0.0
    %472 = vmatpush1.msra.mxu0 0.0
    %473 = vmatprep.subr.mxu0 0.0
    %474 = vmatpush1.msra.mxu0 0.0
    %475 = vmatprep.subr.mxu0 0.0
    %476 = vmatpush1.msra.mxu0 0.0
    %477 = vmatprep.subr.mxu0 0.0
    %478 = vmatpush1.msra.mxu0 0.0
    %479 = vmatprep.subr.mxu0 0.0
    %480 = vmatpush1.msra.mxu0 0.0
    %481 = vmatprep.subr.mxu0 0.0
    %482 = vmatpush1.msra.mxu0 0.0
    %483 = vmatprep.subr.mxu0 0.0
    %484 = vmatpush1.msra.mxu0 0.0
    %485 = vmatprep.subr.mxu0 0.0
    %486 = vmatpush1.msra.mxu0 0.0
    %487 = vmatprep.subr.mxu0 0.0
    %488 = vmatpush1.msra.mxu0 0.0
    %489 = vmatprep.subr.mxu0 0.0
    %490 = vmatpush1.msra.mxu0 0.0
    %491 = vmatprep.subr.mxu0 0.0
    %492 = vmatpush1.msra.mxu0 0.0
    %493 = vmatprep.subr.mxu0 0.0
    %494 = vmatpush1.msra.mxu0 0.0
    %495 = vmatprep.subr.mxu0 0.0
    %496 = vmatpush1.msra.mxu0 0.0
    %497 = vmatprep.subr.mxu0 0.0
    %498 = vmatpush1.msra.mxu0 0.0
    %499 = vmatprep.subr.mxu0 0.0
    %500 = vmatpush1.msra.mxu0 0.0
    %501 = vmatprep.subr.mxu0 0.0
    %502 = vmatpush1.msra.mxu0 0.0
    %503 = vmatprep.subr.mxu0 0.0
    %504 = vmatpush1.msra.mxu0 0.0
    %505 = vmatprep.subr.mxu0 0.0
    %506 = vmatpush1.msra.mxu0 0.0
    %507 = vmatprep.subr.mxu0 0.0
    %508 = vmatpush1.msra.mxu0 0.0
    %509 = vmatprep.subr.mxu0 0.0
    %510 = vmatpush1.msra.mxu0 0.0
    %511 = vmatprep.mubr.f32.mxu0 0.0
    %512 = vmatmul.mubr.f32.gmra.mrb[0].mxu0 %v445
    %v513 = vpop.f32.mrb[0].mxu0
    %v514 = vadd.f32 %v442, %v513
    %v515 = vpop.f32.mrb[0].mxu0
    %516 = vdwg.mxu0
    %v517 = vld [vmem:[#allocation2] sm:$0xff]
    %v518 = vadd.f32 %v517, %v428
    %v519 = vxor.u32 %v518, 2147483648
    %v520 = vmul.f32 %v519, 1.442695
    %v521 = vpow.pop %v520
    %v522 = vadd.f32 %v521, 1.0
    %v523 = vrcp.pop %v522
    %v524 = vmul.f32 1.0, %v523
    %526 = vrot.lane.b32.xlu0 %v428, 64
    %v527 = vpop.permute.xlu0 %526
    %v529 = vmul.f32 %v524, %v527
    %531 = vrot.lane.b32.xlu0 %v529, 64
    %v532 = vpop.permute.xlu0 %531
    %v534 = vadd.f32 %v517, %v532
    %v535 = vtanh.pop %v534
    %v536 = vsub.f32 1.0, %v524
    %538 = vrot.lane.b32.xlu0 %v535, 96
    %v539 = vpop.permute.xlu0 %538
    %v541 = vmul.f32 %v536, %v539
    %542 = vrot.lane.b32.xlu0 %v345, 32
    %v543 = vpop.permute.xlu0 %542
    %v545 = vmul.f32 %v524, %v543
    %v546 = vadd.f32 %v541, %v545
    %s547 = scalar_lea.vmem [#allocation3], 56
    %v548 = vld [vmem:[%s547] sm:$0xff]
    %v549 = vadd.f32 %v548, %v514
    %v550 = vxor.u32 %v549, 2147483648
    %v551 = vmul.f32 %v550, 1.442695
    %v552 = vpow.pop %v551
    %v553 = vadd.f32 %v552, 1.0
    %v554 = vrcp.pop %v553
    %v555 = vmul.f32 1.0, %v554
    %557 = vrot.lane.b32.xlu0 %v514, 64
    %v558 = vpop.permute.xlu0 %557
    %v560 = vmul.f32 %v555, %v558
    %562 = vrot.lane.b32.xlu0 %v560, 64
    %v563 = vpop.permute.xlu0 %562
    %v565 = vadd.f32 %v548, %v563
    %v566 = vtanh.pop %v565
    %v567 = vsub.f32 1.0, %v555
    %569 = vrot.lane.b32.xlu0 %v566, 96
    %v570 = vpop.permute.xlu0 %569
    %v572 = vmul.f32 %v567, %v570
    %573 = vrot.lane.b32.xlu0 %v346, 32
    %v574 = vpop.permute.xlu0 %573
    %v576 = vmul.f32 %v555, %v574
    %v577 = vadd.f32 %v572, %v576
    %579 = vrot.lane.b32.xlu0 %v546, 96
    %v580 = vpop.permute.xlu0 %579
    %582 = vst.msk [vmem:[#allocation4] sm:$0xff] %vm342, %v580
    %584 = vrot.lane.b32.xlu0 %v577, 96
    %v585 = vpop.permute.xlu0 %584
    %587 = vst.msk [vmem:[#allocation5] sm:$0xff] %vm342, %v585
    %588 = vst.msk [vmem:[#allocation6] sm:$0xff] %vm342, %v580
    %s589 = scalar_lea.vmem [#allocation7], 56
    %590 = vst.msk [vmem:[%s589] sm:$0xff] %vm342, %v585
    %v591 = vld [vmem:[#allocation4] sm:$0xff]
    %v592 = vld [vmem:[#allocation5] sm:$0xff]
    %v593 = vld [vmem:[#allocation13] sm:$0xff]
    %v594 = vld [vmem:[#allocation13 + $0x8] sm:$0xff]
    %v595 = vld [vmem:[#allocation13 + $0x10] sm:$0xff]
    %v596 = vld [vmem:[#allocation13 + $0x18] sm:$0xff]
    %v597 = vld [vmem:[%s4] sm:$0x1]
    %v599 = vlaneseq
    %v600 = vshrl.u32 %v599, 7
    %v601 = vsub.s32 0, %v600
    %v602 = vrot.slane %v597, %v601
    %v605 = vsel %vm342, %v591, 0
    %607 = vmatprep.subr.mxu0 0.0
    %608 = vmatpush1.msra.mxu0 %v593
    %609 = vmatprep.subr.mxu0 0.0
    %610 = vmatpush1.msra.mxu0 %v594
    %611 = vmatprep.subr.mxu0 0.0
    %612 = vmatpush1.msra.mxu0 %v595
    %613 = vmatprep.subr.mxu0 0.0
    %614 = vmatpush1.msra.mxu0 %v596
    %615 = vmatprep.subr.mxu0 0.0
    %616 = vmatpush1.msra.mxu0 0.0
    %617 = vmatprep.subr.mxu0 0.0
    %618 = vmatpush1.msra.mxu0 0.0
    %619 = vmatprep.subr.mxu0 0.0
    %620 = vmatpush1.msra.mxu0 0.0
    %621 = vmatprep.subr.mxu0 0.0
    %622 = vmatpush1.msra.mxu0 0.0
    %623 = vmatprep.subr.mxu0 0.0
    %624 = vmatpush1.msra.mxu0 0.0
    %625 = vmatprep.subr.mxu0 0.0
    %626 = vmatpush1.msra.mxu0 0.0
    %627 = vmatprep.subr.mxu0 0.0
    %628 = vmatpush1.msra.mxu0 0.0
    %629 = vmatprep.subr.mxu0 0.0
    %630 = vmatpush1.msra.mxu0 0.0
    %631 = vmatprep.subr.mxu0 0.0
    %632 = vmatpush1.msra.mxu0 0.0
    %633 = vmatprep.subr.mxu0 0.0
    %634 = vmatpush1.msra.mxu0 0.0
    %635 = vmatprep.subr.mxu0 0.0
    %636 = vmatpush1.msra.mxu0 0.0
    %637 = vmatprep.subr.mxu0 0.0
    %638 = vmatpush1.msra.mxu0 0.0
    %639 = vmatprep.subr.mxu0 0.0
    %640 = vmatpush1.msra.mxu0 0.0
    %641 = vmatprep.subr.mxu0 0.0
    %642 = vmatpush1.msra.mxu0 0.0
    %643 = vmatprep.subr.mxu0 0.0
    %644 = vmatpush1.msra.mxu0 0.0
    %645 = vmatprep.subr.mxu0 0.0
    %646 = vmatpush1.msra.mxu0 0.0
    %647 = vmatprep.subr.mxu0 0.0
    %648 = vmatpush1.msra.mxu0 0.0
    %649 = vmatprep.subr.mxu0 0.0
    %650 = vmatpush1.msra.mxu0 0.0
    %651 = vmatprep.subr.mxu0 0.0
    %652 = vmatpush1.msra.mxu0 0.0
    %653 = vmatprep.subr.mxu0 0.0
    %654 = vmatpush1.msra.mxu0 0.0
    %655 = vmatprep.subr.mxu0 0.0
    %656 = vmatpush1.msra.mxu0 0.0
    %657 = vmatprep.subr.mxu0 0.0
    %658 = vmatpush1.msra.mxu0 0.0
    %659 = vmatprep.subr.mxu0 0.0
    %660 = vmatpush1.msra.mxu0 0.0
    %661 = vmatprep.subr.mxu0 0.0
    %662 = vmatpush1.msra.mxu0 0.0
    %663 = vmatprep.subr.mxu0 0.0
    %664 = vmatpush1.msra.mxu0 0.0
    %665 = vmatprep.subr.mxu0 0.0
    %666 = vmatpush1.msra.mxu0 0.0
    %667 = vmatprep.subr.mxu0 0.0
    %668 = vmatpush1.msra.mxu0 0.0
    %669 = vmatprep.subr.mxu0 0.0
    %670 = vmatpush1.msra.mxu0 0.0
    %671 = vmatprep.mubr.f32.mxu0 0.0
    %672 = vmatmul.mubr.f32.gmra.mrb[0].mxu0 %v605
    %v673 = vpop.f32.mrb[0].mxu0
    %v674 = vadd.f32 %v602, %v673
    %v675 = vpop.f32.mrb[0].mxu0
    %676 = vdwg.mxu0
    %v677 = vld [vmem:[%s431] sm:$0xff]
    %v678 = vld [vmem:[%s431 + $0x8] sm:$0xff]
    %v679 = vld [vmem:[%s431 + $0x10] sm:$0xff]
    %v680 = vld [vmem:[%s431 + $0x18] sm:$0xff]
    %v681 = vld [vmem:[%s436] sm:$0x1]
    %v683 = vlaneseq
    %v684 = vshrl.u32 %v683, 7
    %v685 = vsub.s32 0, %v684
    %v686 = vrot.slane %v681, %v685
    %v689 = vsel %vm342, %v592, 0
    %691 = vmatprep.subr.mxu0 0.0
    %692 = vmatpush1.msra.mxu0 %v677
    %693 = vmatprep.subr.mxu0 0.0
    %694 = vmatpush1.msra.mxu0 %v678
    %695 = vmatprep.subr.mxu0 0.0
    %696 = vmatpush1.msra.mxu0 %v679
    %697 = vmatprep.subr.mxu0 0.0
    %698 = vmatpush1.msra.mxu0 %v680
    %699 = vmatprep.subr.mxu0 0.0
    %700 = vmatpush1.msra.mxu0 0.0
    %701 = vmatprep.subr.mxu0 0.0
    %702 = vmatpush1.msra.mxu0 0.0
    %703 = vmatprep.subr.mxu0 0.0
    %704 = vmatpush1.msra.mxu0 0.0
    %705 = vmatprep.subr.mxu0 0.0
    %706 = vmatpush1.msra.mxu0 0.0
    %707 = vmatprep.subr.mxu0 0.0
    %708 = vmatpush1.msra.mxu0 0.0
    %709 = vmatprep.subr.mxu0 0.0
    %710 = vmatpush1.msra.mxu0 0.0
    %711 = vmatprep.subr.mxu0 0.0
    %712 = vmatpush1.msra.mxu0 0.0
    %713 = vmatprep.subr.mxu0 0.0
    %714 = vmatpush1.msra.mxu0 0.0
    %715 = vmatprep.subr.mxu0 0.0
    %716 = vmatpush1.msra.mxu0 0.0
    %717 = vmatprep.subr.mxu0 0.0
    %718 = vmatpush1.msra.mxu0 0.0
    %719 = vmatprep.subr.mxu0 0.0
    %720 = vmatpush1.msra.mxu0 0.0
    %721 = vmatprep.subr.mxu0 0.0
    %722 = vmatpush1.msra.mxu0 0.0
    %723 = vmatprep.subr.mxu0 0.0
    %724 = vmatpush1.msra.mxu0 0.0
    %725 = vmatprep.subr.mxu0 0.0
    %726 = vmatpush1.msra.mxu0 0.0
    %727 = vmatprep.subr.mxu0 0.0
    %728 = vmatpush1.msra.mxu0 0.0
    %729 = vmatprep.subr.mxu0 0.0
    %730 = vmatpush1.msra.mxu0 0.0
    %731 = vmatprep.subr.mxu0 0.0
    %732 = vmatpush1.msra.mxu0 0.0
    %733 = vmatprep.subr.mxu0 0.0
    %734 = vmatpush1.msra.mxu0 0.0
    %735 = vmatprep.subr.mxu0 0.0
    %736 = vmatpush1.msra.mxu0 0.0
    %737 = vmatprep.subr.mxu0 0.0
    %738 = vmatpush1.msra.mxu0 0.0
    %739 = vmatprep.subr.mxu0 0.0
    %740 = vmatpush1.msra.mxu0 0.0
    %741 = vmatprep.subr.mxu0 0.0
    %742 = vmatpush1.msra.mxu0 0.0
    %743 = vmatprep.subr.mxu0 0.0
    %744 = vmatpush1.msra.mxu0 0.0
    %745 = vmatprep.subr.mxu0 0.0
    %746 = vmatpush1.msra.mxu0 0.0
    %747 = vmatprep.subr.mxu0 0.0
    %748 = vmatpush1.msra.mxu0 0.0
    %749 = vmatprep.subr.mxu0 0.0
    %750 = vmatpush1.msra.mxu0 0.0
    %751 = vmatprep.subr.mxu0 0.0
    %752 = vmatpush1.msra.mxu0 0.0
    %753 = vmatprep.subr.mxu0 0.0
    %754 = vmatpush1.msra.mxu0 0.0
    %755 = vmatprep.mubr.f32.mxu0 0.0
    %756 = vmatmul.mubr.f32.gmra.mrb[0].mxu0 %v689
    %v757 = vpop.f32.mrb[0].mxu0
    %v758 = vadd.f32 %v686, %v757
    %v759 = vpop.f32.mrb[0].mxu0
    %760 = vdwg.mxu0
    %s761 = scalar_lea.vmem [#allocation2], 8
    %v762 = vld [vmem:[%s761] sm:$0xff]
    %v763 = vadd.f32 %v762, %v674
    %v764 = vxor.u32 %v763, 2147483648
    %v765 = vmul.f32 %v764, 1.442695
    %v766 = vpow.pop %v765
    %v767 = vadd.f32 %v766, 1.0
    %v768 = vrcp.pop %v767
    %v769 = vmul.f32 1.0, %v768
    %771 = vrot.lane.b32.xlu0 %v674, 64
    %v772 = vpop.permute.xlu0 %771
    %v774 = vmul.f32 %v769, %v772
    %776 = vrot.lane.b32.xlu0 %v774, 64
    %v777 = vpop.permute.xlu0 %776
    %v779 = vadd.f32 %v762, %v777
    %v780 = vtanh.pop %v779
    %v781 = vsub.f32 1.0, %v769
    %783 = vrot.lane.b32.xlu0 %v780, 96
    %v784 = vpop.permute.xlu0 %783
    %v786 = vmul.f32 %v781, %v784
    %787 = vrot.lane.b32.xlu0 %v591, 32
    %v788 = vpop.permute.xlu0 %787
    %v790 = vmul.f32 %v769, %v788
    %v791 = vadd.f32 %v786, %v790
    %s792 = scalar_lea.vmem [#allocation3], 48
    %v793 = vld [vmem:[%s792] sm:$0xff]
    %v794 = vadd.f32 %v793, %v758
    %v795 = vxor.u32 %v794, 2147483648
    %v796 = vmul.f32 %v795, 1.442695
    %v797 = vpow.pop %v796
    %v798 = vadd.f32 %v797, 1.0
    %v799 = vrcp.pop %v798
    %v800 = vmul.f32 1.0, %v799
    %802 = vrot.lane.b32.xlu0 %v758, 64
    %v803 = vpop.permute.xlu0 %802
    %v805 = vmul.f32 %v800, %v803
    %807 = vrot.lane.b32.xlu0 %v805, 64
    %v808 = vpop.permute.xlu0 %807
    %v810 = vadd.f32 %v793, %v808
    %v811 = vtanh.pop %v810
    %v812 = vsub.f32 1.0, %v800
    %814 = vrot.lane.b32.xlu0 %v811, 96
    %v815 = vpop.permute.xlu0 %814
    %v817 = vmul.f32 %v812, %v815
    %818 = vrot.lane.b32.xlu0 %v592, 32
    %v819 = vpop.permute.xlu0 %818
    %v821 = vmul.f32 %v800, %v819
    %v822 = vadd.f32 %v817, %v821
    %824 = vrot.lane.b32.xlu0 %v791, 96
    %v825 = vpop.permute.xlu0 %824
    %827 = vst.msk [vmem:[#allocation4] sm:$0xff] %vm342, %v825
    %829 = vrot.lane.b32.xlu0 %v822, 96
    %v830 = vpop.permute.xlu0 %829
    %832 = vst.msk [vmem:[#allocation5] sm:$0xff] %vm342, %v830
    %s833 = scalar_lea.vmem [#allocation6], 8
    %834 = vst.msk [vmem:[%s833] sm:$0xff] %vm342, %v825
    %s835 = scalar_lea.vmem [#allocation7], 48
    %836 = vst.msk [vmem:[%s835] sm:$0xff] %vm342, %v830
    %v837 = vld [vmem:[#allocation4] sm:$0xff]
    %v838 = vld [vmem:[#allocation5] sm:$0xff]
    %v839 = vld [vmem:[#allocation13] sm:$0xff]
    %v840 = vld [vmem:[#allocation13 + $0x8] sm:$0xff]
    %v841 = vld [vmem:[#allocation13 + $0x10] sm:$0xff]
    %v842 = vld [vmem:[#allocation13 + $0x18] sm:$0xff]
    %v843 = vld [vmem:[%s4] sm:$0x1]
    %v845 = vlaneseq
    %v846 = vshrl.u32 %v845, 7
    %v847 = vsub.s32 0, %v846
    %v848 = vrot.slane %v843, %v847
    %v851 = vsel %vm342, %v837, 0
    %853 = vmatprep.subr.mxu0 0.0
    %854 = vmatpush1.msra.mxu0 %v839
    %855 = vmatprep.subr.mxu0 0.0
    %856 = vmatpush1.msra.mxu0 %v840
    %857 = vmatprep.subr.mxu0 0.0
    %858 = vmatpush1.msra.mxu0 %v841
    %859 = vmatprep.subr.mxu0 0.0
    %860 = vmatpush1.msra.mxu0 %v842
    %861 = vmatprep.subr.mxu0 0.0
    %862 = vmatpush1.msra.mxu0 0.0
    %863 = vmatprep.subr.mxu0 0.0
    %864 = vmatpush1.msra.mxu0 0.0
    %865 = vmatprep.subr.mxu0 0.0
    %866 = vmatpush1.msra.mxu0 0.0
    %867 = vmatprep.subr.mxu0 0.0
    %868 = vmatpush1.msra.mxu0 0.0
    %869 = vmatprep.subr.mxu0 0.0
    %870 = vmatpush1.msra.mxu0 0.0
    %871 = vmatprep.subr.mxu0 0.0
    %872 = vmatpush1.msra.mxu0 0.0
    %873 = vmatprep.subr.mxu0 0.0
    %874 = vmatpush1.msra.mxu0 0.0
    %875 = vmatprep.subr.mxu0 0.0
    %876 = vmatpush1.msra.mxu0 0.0
    %877 = vmatprep.subr.mxu0 0.0
    %878 = vmatpush1.msra.mxu0 0.0
    %879 = vmatprep.subr.mxu0 0.0
    %880 = vmatpush1.msra.mxu0 0.0
    %881 = vmatprep.subr.mxu0 0.0
    %882 = vmatpush1.msra.mxu0 0.0
    %883 = vmatprep.subr.mxu0 0.0
    %884 = vmatpush1.msra.mxu0 0.0
    %885 = vmatprep.subr.mxu0 0.0
    %886 = vmatpush1.msra.mxu0 0.0
    %887 = vmatprep.subr.mxu0 0.0
    %888 = vmatpush1.msra.mxu0 0.0
    %889 = vmatprep.subr.mxu0 0.0
    %890 = vmatpush1.msra.mxu0 0.0
    %891 = vmatprep.subr.mxu0 0.0
    %892 = vmatpush1.msra.mxu0 0.0
    %893 = vmatprep.subr.mxu0 0.0
    %894 = vmatpush1.msra.mxu0 0.0
    %895 = vmatprep.subr.mxu0 0.0
    %896 = vmatpush1.msra.mxu0 0.0
    %897 = vmatprep.subr.mxu0 0.0
    %898 = vmatpush1.msra.mxu0 0.0
    %899 = vmatprep.subr.mxu0 0.0
    %900 = vmatpush1.msra.mxu0 0.0
    %901 = vmatprep.subr.mxu0 0.0
    %902 = vmatpush1.msra.mxu0 0.0
    %903 = vmatprep.subr.mxu0 0.0
    %904 = vmatpush1.msra.mxu0 0.0
    %905 = vmatprep.subr.mxu0 0.0
    %906 = vmatpush1.msra.mxu0 0.0
    %907 = vmatprep.subr.mxu0 0.0
    %908 = vmatpush1.msra.mxu0 0.0
    %909 = vmatprep.subr.mxu0 0.0
    %910 = vmatpush1.msra.mxu0 0.0
    %911 = vmatprep.subr.mxu0 0.0
    %912 = vmatpush1.msra.mxu0 0.0
    %913 = vmatprep.subr.mxu0 0.0
    %914 = vmatpush1.msra.mxu0 0.0
    %915 = vmatprep.subr.mxu0 0.0
    %916 = vmatpush1.msra.mxu0 0.0
    %917 = vmatprep.mubr.f32.mxu0 0.0
    %918 = vmatmul.mubr.f32.gmra.mrb[0].mxu0 %v851
    %v919 = vpop.f32.mrb[0].mxu0
    %v920 = vadd.f32 %v848, %v919
    %v921 = vpop.f32.mrb[0].mxu0
    %922 = vdwg.mxu0
    %v923 = vld [vmem:[%s431] sm:$0xff]
    %v924 = vld [vmem:[%s431 + $0x8] sm:$0xff]
    %v925 = vld [vmem:[%s431 + $0x10] sm:$0xff]
    %v926 = vld [vmem:[%s431 + $0x18] sm:$0xff]
    %v927 = vld [vmem:[%s436] sm:$0x1]
    %v929 = vlaneseq
    %v930 = vshrl.u32 %v929, 7
    %v931 = vsub.s32 0, %v930
    %v932 = vrot.slane %v927, %v931
    %v935 = vsel %vm342, %v838, 0
    %937 = vmatprep.subr.mxu0 0.0
    %938 = vmatpush1.msra.mxu0 %v923
    %939 = vmatprep.subr.mxu0 0.0
    %940 = vmatpush1.msra.mxu0 %v924
    %941 = vmatprep.subr.mxu0 0.0
    %942 = vmatpush1.msra.mxu0 %v925
    %943 = vmatprep.subr.mxu0 0.0
    %944 = vmatpush1.msra.mxu0 %v926
    %945 = vmatprep.subr.mxu0 0.0
    %946 = vmatpush1.msra.mxu0 0.0
    %947 = vmatprep.subr.mxu0 0.0
    %948 = vmatpush1.msra.mxu0 0.0
    %949 = vmatprep.subr.mxu0 0.0
    %950 = vmatpush1.msra.mxu0 0.0
    %951 = vmatprep.subr.mxu0 0.0
    %952 = vmatpush1.msra.mxu0 0.0
    %953 = vmatprep.subr.mxu0 0.0
    %954 = vmatpush1.msra.mxu0 0.0
    %955 = vmatprep.subr.mxu0 0.0
    %956 = vmatpush1.msra.mxu0 0.0
    %957 = vmatprep.subr.mxu0 0.0
    %958 = vmatpush1.msra.mxu0 0.0
    %959 = vmatprep.subr.mxu0 0.0
    %960 = vmatpush1.msra.mxu0 0.0
    %961 = vmatprep.subr.mxu0 0.0
    %962 = vmatpush1.msra.mxu0 0.0
    %963 = vmatprep.subr.mxu0 0.0
    %964 = vmatpush1.msra.mxu0 0.0
    %965 = vmatprep.subr.mxu0 0.0
    %966 = vmatpush1.msra.mxu0 0.0
    %967 = vmatprep.subr.mxu0 0.0
    %968 = vmatpush1.msra.mxu0 0.0
    %969 = vmatprep.subr.mxu0 0.0
    %970 = vmatpush1.msra.mxu0 0.0
    %971 = vmatprep.subr.mxu0 0.0
    %972 = vmatpush1.msra.mxu0 0.0
    %973 = vmatprep.subr.mxu0 0.0
    %974 = vmatpush1.msra.mxu0 0.0
    %975 = vmatprep.subr.mxu0 0.0
    %976 = vmatpush1.msra.mxu0 0.0
    %977 = vmatprep.subr.mxu0 0.0
    %978 = vmatpush1.msra.mxu0 0.0
    %979 = vmatprep.subr.mxu0 0.0
    %980 = vmatpush1.msra.mxu0 0.0
    %981 = vmatprep.subr.mxu0 0.0
    %982 = vmatpush1.msra.mxu0 0.0
    %983 = vmatprep.subr.mxu0 0.0
    %984 = vmatpush1.msra.mxu0 0.0
    %985 = vmatprep.subr.mxu0 0.0
    %986 = vmatpush1.msra.mxu0 0.0
    %987 = vmatprep.subr.mxu0 0.0
    %988 = vmatpush1.msra.mxu0 0.0
    %989 = vmatprep.subr.mxu0 0.0
    %990 = vmatpush1.msra.mxu0 0.0
    %991 = vmatprep.subr.mxu0 0.0
    %992 = vmatpush1.msra.mxu0 0.0
    %993 = vmatprep.subr.mxu0 0.0
    %994 = vmatpush1.msra.mxu0 0.0
    %995 = vmatprep.subr.mxu0 0.0
    %996 = vmatpush1.msra.mxu0 0.0
    %997 = vmatprep.subr.mxu0 0.0
    %998 = vmatpush1.msra.mxu0 0.0
    %999 = vmatprep.subr.mxu0 0.0
    %1000 = vmatpush1.msra.mxu0 0.0
    %1001 = vmatprep.mubr.f32.mxu0 0.0
    %1002 = vmatmul.mubr.f32.gmra.mrb[0].mxu0 %v935
    %v1003 = vpop.f32.mrb[0].mxu0
    %v1004 = vadd.f32 %v932, %v1003
    %v1005 = vpop.f32.mrb[0].mxu0
    %1006 = vdwg.mxu0
    %s1007 = scalar_lea.vmem [#allocation2], 16
    %v1008 = vld [vmem:[%s1007] sm:$0xff]
    %v1009 = vadd.f32 %v1008, %v920
    %v1010 = vxor.u32 %v1009, 2147483648
    %v1011 = vmul.f32 %v1010, 1.442695
    %v1012 = vpow.pop %v1011
    %v1013 = vadd.f32 %v1012, 1.0
    %v1014 = vrcp.pop %v1013
    %v1015 = vmul.f32 1.0, %v1014
    %1017 = vrot.lane.b32.xlu0 %v920, 64
    %v1018 = vpop.permute.xlu0 %1017
    %v1020 = vmul.f32 %v1015, %v1018
    %1022 = vrot.lane.b32.xlu0 %v1020, 64
    %v1023 = vpop.permute.xlu0 %1022
    %v1025 = vadd.f32 %v1008, %v1023
    %v1026 = vtanh.pop %v1025
    %v1027 = vsub.f32 1.0, %v1015
    %1029 = vrot.lane.b32.xlu0 %v1026, 96
    %v1030 = vpop.permute.xlu0 %1029
    %v1032 = vmul.f32 %v1027, %v1030
    %1033 = vrot.lane.b32.xlu0 %v837, 32
    %v1034 = vpop.permute.xlu0 %1033
    %v1036 = vmul.f32 %v1015, %v1034
    %v1037 = vadd.f32 %v1032, %v1036
    %s1038 = scalar_lea.vmem [#allocation3], 40
    %v1039 = vld [vmem:[%s1038] sm:$0xff]
    %v1040 = vadd.f32 %v1039, %v1004
    %v1041 = vxor.u32 %v1040, 2147483648
    %v1042 = vmul.f32 %v1041, 1.442695
    %v1043 = vpow.pop %v1042
    %v1044 = vadd.f32 %v1043, 1.0
    %v1045 = vrcp.pop %v1044
    %v1046 = vmul.f32 1.0, %v1045
    %1048 = vrot.lane.b32.xlu0 %v1004, 64
    %v1049 = vpop.permute.xlu0 %1048
    %v1051 = vmul.f32 %v1046, %v1049
    %1053 = vrot.lane.b32.xlu0 %v1051, 64
    %v1054 = vpop.permute.xlu0 %1053
    %v1056 = vadd.f32 %v1039, %v1054
    %v1057 = vtanh.pop %v1056
    %v1058 = vsub.f32 1.0, %v1046
    %1060 = vrot.lane.b32.xlu0 %v1057, 96
    %v1061 = vpop.permute.xlu0 %1060
    %v1063 = vmul.f32 %v1058, %v1061
    %1064 = vrot.lane.b32.xlu0 %v838, 32
    %v1065 = vpop.permute.xlu0 %1064
    %v1067 = vmul.f32 %v1046, %v1065
    %v1068 = vadd.f32 %v1063, %v1067
    %1070 = vrot.lane.b32.xlu0 %v1037, 96
    %v1071 = vpop.permute.xlu0 %1070
    %1073 = vst.msk [vmem:[#allocation4] sm:$0xff] %vm342, %v1071
    %1075 = vrot.lane.b32.xlu0 %v1068, 96
    %v1076 = vpop.permute.xlu0 %1075
    %1078 = vst.msk [vmem:[#allocation5] sm:$0xff] %vm342, %v1076
    %s1079 = scalar_lea.vmem [#allocation6], 16
    %1080 = vst.msk [vmem:[%s1079] sm:$0xff] %vm342, %v1071
    %s1081 = scalar_lea.vmem [#allocation7], 40
    %1082 = vst.msk [vmem:[%s1081] sm:$0xff] %vm342, %v1076
    %v1083 = vld [vmem:[#allocation4] sm:$0xff]
    %v1084 = vld [vmem:[#allocation5] sm:$0xff]
    %v1085 = vld [vmem:[#allocation13] sm:$0xff]
    %v1086 = vld [vmem:[#allocation13 + $0x8] sm:$0xff]
    %v1087 = vld [vmem:[#allocation13 + $0x10] sm:$0xff]
    %v1088 = vld [vmem:[#allocation13 + $0x18] sm:$0xff]
    %v1089 = vld [vmem:[%s4] sm:$0x1]
    %v1091 = vlaneseq
    %v1092 = vshrl.u32 %v1091, 7
    %v1093 = vsub.s32 0, %v1092
    %v1094 = vrot.slane %v1089, %v1093
    %v1097 = vsel %vm342, %v1083, 0
    %1099 = vmatprep.subr.mxu0 0.0
    %1100 = vmatpush1.msra.mxu0 %v1085
    %1101 = vmatprep.subr.mxu0 0.0
    %1102 = vmatpush1.msra.mxu0 %v1086
    %1103 = vmatprep.subr.mxu0 0.0
    %1104 = vmatpush1.msra.mxu0 %v1087
    %1105 = vmatprep.subr.mxu0 0.0
    %1106 = vmatpush1.msra.mxu0 %v1088
    %1107 = vmatprep.subr.mxu0 0.0
    %1108 = vmatpush1.msra.mxu0 0.0
    %1109 = vmatprep.subr.mxu0 0.0
    %1110 = vmatpush1.msra.mxu0 0.0
    %1111 = vmatprep.subr.mxu0 0.0
    %1112 = vmatpush1.msra.mxu0 0.0
    %1113 = vmatprep.subr.mxu0 0.0
    %1114 = vmatpush1.msra.mxu0 0.0
    %1115 = vmatprep.subr.mxu0 0.0
    %1116 = vmatpush1.msra.mxu0 0.0
    %1117 = vmatprep.subr.mxu0 0.0
    %1118 = vmatpush1.msra.mxu0 0.0
    %1119 = vmatprep.subr.mxu0 0.0
    %1120 = vmatpush1.msra.mxu0 0.0
    %1121 = vmatprep.subr.mxu0 0.0
    %1122 = vmatpush1.msra.mxu0 0.0
    %1123 = vmatprep.subr.mxu0 0.0
    %1124 = vmatpush1.msra.mxu0 0.0
    %1125 = vmatprep.subr.mxu0 0.0
    %1126 = vmatpush1.msra.mxu0 0.0
    %1127 = vmatprep.subr.mxu0 0.0
    %1128 = vmatpush1.msra.mxu0 0.0
    %1129 = vmatprep.subr.mxu0 0.0
    %1130 = vmatpush1.msra.mxu0 0.0
    %1131 = vmatprep.subr.mxu0 0.0
    %1132 = vmatpush1.msra.mxu0 0.0
    %1133 = vmatprep.subr.mxu0 0.0
    %1134 = vmatpush1.msra.mxu0 0.0
    %1135 = vmatprep.subr.mxu0 0.0
    %1136 = vmatpush1.msra.mxu0 0.0
    %1137 = vmatprep.subr.mxu0 0.0
    %1138 = vmatpush1.msra.mxu0 0.0
    %1139 = vmatprep.subr.mxu0 0.0
    %1140 = vmatpush1.msra.mxu0 0.0
    %1141 = vmatprep.subr.mxu0 0.0
    %1142 = vmatpush1.msra.mxu0 0.0
    %1143 = vmatprep.subr.mxu0 0.0
    %1144 = vmatpush1.msra.mxu0 0.0
    %1145 = vmatprep.subr.mxu0 0.0
    %1146 = vmatpush1.msra.mxu0 0.0
    %1147 = vmatprep.subr.mxu0 0.0
    %1148 = vmatpush1.msra.mxu0 0.0
    %1149 = vmatprep.subr.mxu0 0.0
    %1150 = vmatpush1.msra.mxu0 0.0
    %1151 = vmatprep.subr.mxu0 0.0
    %1152 = vmatpush1.msra.mxu0 0.0
    %1153 = vmatprep.subr.mxu0 0.0
    %1154 = vmatpush1.msra.mxu0 0.0
    %1155 = vmatprep.subr.mxu0 0.0
    %1156 = vmatpush1.msra.mxu0 0.0
    %1157 = vmatprep.subr.mxu0 0.0
    %1158 = vmatpush1.msra.mxu0 0.0
    %1159 = vmatprep.subr.mxu0 0.0
    %1160 = vmatpush1.msra.mxu0 0.0
    %1161 = vmatprep.subr.mxu0 0.0
    %1162 = vmatpush1.msra.mxu0 0.0
    %1163 = vmatprep.mubr.f32.mxu0 0.0
    %1164 = vmatmul.mubr.f32.gmra.mrb[0].mxu0 %v1097
    %v1165 = vpop.f32.mrb[0].mxu0
    %v1166 = vadd.f32 %v1094, %v1165
    %v1167 = vpop.f32.mrb[0].mxu0
    %1168 = vdwg.mxu0
    %v1169 = vld [vmem:[%s431] sm:$0xff]
    %v1170 = vld [vmem:[%s431 + $0x8] sm:$0xff]
    %v1171 = vld [vmem:[%s431 + $0x10] sm:$0xff]
    %v1172 = vld [vmem:[%s431 + $0x18] sm:$0xff]
    %v1173 = vld [vmem:[%s436] sm:$0x1]
    %v1175 = vlaneseq
    %v1176 = vshrl.u32 %v1175, 7
    %v1177 = vsub.s32 0, %v1176
    %v1178 = vrot.slane %v1173, %v1177
    %v1181 = vsel %vm342, %v1084, 0
    %1183 = vmatprep.subr.mxu0 0.0
    %1184 = vmatpush1.msra.mxu0 %v1169
    %1185 = vmatprep.subr.mxu0 0.0
    %1186 = vmatpush1.msra.mxu0 %v1170
    %1187 = vmatprep.subr.mxu0 0.0
    %1188 = vmatpush1.msra.mxu0 %v1171
    %1189 = vmatprep.subr.mxu0 0.0
    %1190 = vmatpush1.msra.mxu0 %v1172
    %1191 = vmatprep.subr.mxu0 0.0
    %1192 = vmatpush1.msra.mxu0 0.0
    %1193 = vmatprep.subr.mxu0 0.0
    %1194 = vmatpush1.msra.mxu0 0.0
    %1195 = vmatprep.subr.mxu0 0.0
    %1196 = vmatpush1.msra.mxu0 0.0
    %1197 = vmatprep.subr.mxu0 0.0
    %1198 = vmatpush1.msra.mxu0 0.0
    %1199 = vmatprep.subr.mxu0 0.0
    %1200 = vmatpush1.msra.mxu0 0.0
    %1201 = vmatprep.subr.mxu0 0.0
    %1202 = vmatpush1.msra.mxu0 0.0
    %1203 = vmatprep.subr.mxu0 0.0
    %1204 = vmatpush1.msra.mxu0 0.0
    %1205 = vmatprep.subr.mxu0 0.0
    %1206 = vmatpush1.msra.mxu0 0.0
    %1207 = vmatprep.subr.mxu0 0.0
    %1208 = vmatpush1.msra.mxu0 0.0
    %1209 = vmatprep.subr.mxu0 0.0
    %1210 = vmatpush1.msra.mxu0 0.0
    %1211 = vmatprep.subr.mxu0 0.0
    %1212 = vmatpush1.msra.mxu0 0.0
    %1213 = vmatprep.subr.mxu0 0.0
    %1214 = vmatpush1.msra.mxu0 0.0
    %1215 = vmatprep.subr.mxu0 0.0
    %1216 = vmatpush1.msra.mxu0 0.0
    %1217 = vmatprep.subr.mxu0 0.0
    %1218 = vmatpush1.msra.mxu0 0.0
    %1219 = vmatprep.subr.mxu0 0.0
    %1220 = vmatpush1.msra.mxu0 0.0
    %1221 = vmatprep.subr.mxu0 0.0
    %1222 = vmatpush1.msra.mxu0 0.0
    %1223 = vmatprep.subr.mxu0 0.0
    %1224 = vmatpush1.msra.mxu0 0.0
    %1225 = vmatprep.subr.mxu0 0.0
    %1226 = vmatpush1.msra.mxu0 0.0
    %1227 = vmatprep.subr.mxu0 0.0
    %1228 = vmatpush1.msra.mxu0 0.0
    %1229 = vmatprep.subr.mxu0 0.0
    %1230 = vmatpush1.msra.mxu0 0.0
    %1231 = vmatprep.subr.mxu0 0.0
    %1232 = vmatpush1.msra.mxu0 0.0
    %1233 = vmatprep.subr.mxu0 0.0
    %1234 = vmatpush1.msra.mxu0 0.0
    %1235 = vmatprep.subr.mxu0 0.0
    %1236 = vmatpush1.msra.mxu0 0.0
    %1237 = vmatprep.subr.mxu0 0.0
    %1238 = vmatpush1.msra.mxu0 0.0
    %1239 = vmatprep.subr.mxu0 0.0
    %1240 = vmatpush1.msra.mxu0 0.0
    %1241 = vmatprep.subr.mxu0 0.0
    %1242 = vmatpush1.msra.mxu0 0.0
    %1243 = vmatprep.subr.mxu0 0.0
    %1244 = vmatpush1.msra.mxu0 0.0
    %1245 = vmatprep.subr.mxu0 0.0
    %1246 = vmatpush1.msra.mxu0 0.0
    %1247 = vmatprep.mubr.f32.mxu0 0.0
    %1248 = vmatmul.mubr.f32.gmra.mrb[0].mxu0 %v1181
    %v1249 = vpop.f32.mrb[0].mxu0
    %v1250 = vadd.f32 %v1178, %v1249
    %v1251 = vpop.f32.mrb[0].mxu0
    %1252 = vdwg.mxu0
    %s1253 = scalar_lea.vmem [#allocation2], 24
    %v1254 = vld [vmem:[%s1253] sm:$0xff]
    %v1255 = vadd.f32 %v1254, %v1166
    %v1256 = vxor.u32 %v1255, 2147483648
    %v1257 = vmul.f32 %v1256, 1.442695
    %v1258 = vpow.pop %v1257
    %v1259 = vadd.f32 %v1258, 1.0
    %v1260 = vrcp.pop %v1259
    %v1261 = vmul.f32 1.0, %v1260
    %1263 = vrot.lane.b32.xlu0 %v1166, 64
    %v1264 = vpop.permute.xlu0 %1263
    %v1266 = vmul.f32 %v1261, %v1264
    %1268 = vrot.lane.b32.xlu0 %v1266, 64
    %v1269 = vpop.permute.xlu0 %1268
    %v1271 = vadd.f32 %v1254, %v1269
    %v1272 = vtanh.pop %v1271
    %v1273 = vsub.f32 1.0, %v1261
    %1275 = vrot.lane.b32.xlu0 %v1272, 96
    %v1276 = vpop.permute.xlu0 %1275
    %v1278 = vmul.f32 %v1273, %v1276
    %1279 = vrot.lane.b32.xlu0 %v1083, 32
    %v1280 = vpop.permute.xlu0 %1279
    %v1282 = vmul.f32 %v1261, %v1280
    %v1283 = vadd.f32 %v1278, %v1282
    %s1284 = scalar_lea.vmem [#allocation3], 32
    %v1285 = vld [vmem:[%s1284] sm:$0xff]
    %v1286 = vadd.f32 %v1285, %v1250
    %v1287 = vxor.u32 %v1286, 2147483648
    %v1288 = vmul.f32 %v1287, 1.442695
    %v1289 = vpow.pop %v1288
    %v1290 = vadd.f32 %v1289, 1.0
    %v1291 = vrcp.pop %v1290
    %v1292 = vmul.f32 1.0, %v1291
    %1294 = vrot.lane.b32.xlu0 %v1250, 64
    %v1295 = vpop.permute.xlu0 %1294
    %v1297 = vmul.f32 %v1292, %v1295
    %1299 = vrot.lane.b32.xlu0 %v1297, 64
    %v1300 = vpop.permute.xlu0 %1299
    %v1302 = vadd.f32 %v1285, %v1300
    %v1303 = vtanh.pop %v1302
    %v1304 = vsub.f32 1.0, %v1292
    %1306 = vrot.lane.b32.xlu0 %v1303, 96
    %v1307 = vpop.permute.xlu0 %1306
    %v1309 = vmul.f32 %v1304, %v1307
    %1310 = vrot.lane.b32.xlu0 %v1084, 32
    %v1311 = vpop.permute.xlu0 %1310
    %v1313 = vmul.f32 %v1292, %v1311
    %v1314 = vadd.f32 %v1309, %v1313
    %1316 = vrot.lane.b32.xlu0 %v1283, 96
    %v1317 = vpop.permute.xlu0 %1316
    %1319 = vst.msk [vmem:[#allocation4] sm:$0xff] %vm342, %v1317
    %1321 = vrot.lane.b32.xlu0 %v1314, 96
    %v1322 = vpop.permute.xlu0 %1321
    %1324 = vst.msk [vmem:[#allocation5] sm:$0xff] %vm342, %v1322
    %s1325 = scalar_lea.vmem [#allocation6], 24
    %1326 = vst.msk [vmem:[%s1325] sm:$0xff] %vm342, %v1317
    %s1327 = scalar_lea.vmem [#allocation7], 32
    %1328 = vst.msk [vmem:[%s1327] sm:$0xff] %vm342, %v1322
    %v1329 = vld [vmem:[#allocation4] sm:$0xff]
    %v1330 = vld [vmem:[#allocation5] sm:$0xff]
    %v1331 = vld [vmem:[#allocation13] sm:$0xff]
    %v1332 = vld [vmem:[#allocation13 + $0x8] sm:$0xff]
    %v1333 = vld [vmem:[#allocation13 + $0x10] sm:$0xff]
    %v1334 = vld [vmem:[#allocation13 + $0x18] sm:$0xff]
    %v1335 = vld [vmem:[%s4] sm:$0x1]
    %v1337 = vlaneseq
    %v1338 = vshrl.u32 %v1337, 7
    %v1339 = vsub.s32 0, %v1338
    %v1340 = vrot.slane %v1335, %v1339
    %v1343 = vsel %vm342, %v1329, 0
    %1345 = vmatprep.subr.mxu0 0.0
    %1346 = vmatpush1.msra.mxu0 %v1331
    %1347 = vmatprep.subr.mxu0 0.0
    %1348 = vmatpush1.msra.mxu0 %v1332
    %1349 = vmatprep.subr.mxu0 0.0
    %1350 = vmatpush1.msra.mxu0 %v1333
    %1351 = vmatprep.subr.mxu0 0.0
    %1352 = vmatpush1.msra.mxu0 %v1334
    %1353 = vmatprep.subr.mxu0 0.0
    %1354 = vmatpush1.msra.mxu0 0.0
    %1355 = vmatprep.subr.mxu0 0.0
    %1356 = vmatpush1.msra.mxu0 0.0
    %1357 = vmatprep.subr.mxu0 0.0
    %1358 = vmatpush1.msra.mxu0 0.0
    %1359 = vmatprep.subr.mxu0 0.0
    %1360 = vmatpush1.msra.mxu0 0.0
    %1361 = vmatprep.subr.mxu0 0.0
    %1362 = vmatpush1.msra.mxu0 0.0
    %1363 = vmatprep.subr.mxu0 0.0
    %1364 = vmatpush1.msra.mxu0 0.0
    %1365 = vmatprep.subr.mxu0 0.0
    %1366 = vmatpush1.msra.mxu0 0.0
    %1367 = vmatprep.subr.mxu0 0.0
    %1368 = vmatpush1.msra.mxu0 0.0
    %1369 = vmatprep.subr.mxu0 0.0
    %1370 = vmatpush1.msra.mxu0 0.0
    %1371 = vmatprep.subr.mxu0 0.0
    %1372 = vmatpush1.msra.mxu0 0.0
    %1373 = vmatprep.subr.mxu0 0.0
    %1374 = vmatpush1.msra.mxu0 0.0
    %1375 = vmatprep.subr.mxu0 0.0
    %1376 = vmatpush1.msra.mxu0 0.0
    %1377 = vmatprep.subr.mxu0 0.0
    %1378 = vmatpush1.msra.mxu0 0.0
    %1379 = vmatprep.subr.mxu0 0.0
    %1380 = vmatpush1.msra.mxu0 0.0
    %1381 = vmatprep.subr.mxu0 0.0
    %1382 = vmatpush1.msra.mxu0 0.0
    %1383 = vmatprep.subr.mxu0 0.0
    %1384 = vmatpush1.msra.mxu0 0.0
    %1385 = vmatprep.subr.mxu0 0.0
    %1386 = vmatpush1.msra.mxu0 0.0
    %1387 = vmatprep.subr.mxu0 0.0
    %1388 = vmatpush1.msra.mxu0 0.0
    %1389 = vmatprep.subr.mxu0 0.0
    %1390 = vmatpush1.msra.mxu0 0.0
    %1391 = vmatprep.subr.mxu0 0.0
    %1392 = vmatpush1.msra.mxu0 0.0
    %1393 = vmatprep.subr.mxu0 0.0
    %1394 = vmatpush1.msra.mxu0 0.0
    %1395 = vmatprep.subr.mxu0 0.0
    %1396 = vmatpush1.msra.mxu0 0.0
    %1397 = vmatprep.subr.mxu0 0.0
    %1398 = vmatpush1.msra.mxu0 0.0
    %1399 = vmatprep.subr.mxu0 0.0
    %1400 = vmatpush1.msra.mxu0 0.0
    %1401 = vmatprep.subr.mxu0 0.0
    %1402 = vmatpush1.msra.mxu0 0.0
    %1403 = vmatprep.subr.mxu0 0.0
    %1404 = vmatpush1.msra.mxu0 0.0
    %1405 = vmatprep.subr.mxu0 0.0
    %1406 = vmatpush1.msra.mxu0 0.0
    %1407 = vmatprep.subr.mxu0 0.0
    %1408 = vmatpush1.msra.mxu0 0.0
    %1409 = vmatprep.mubr.f32.mxu0 0.0
    %1410 = vmatmul.mubr.f32.gmra.mrb[0].mxu0 %v1343
    %v1411 = vpop.f32.mrb[0].mxu0
    %v1412 = vadd.f32 %v1340, %v1411
    %v1413 = vpop.f32.mrb[0].mxu0
    %1414 = vdwg.mxu0
    %v1415 = vld [vmem:[%s431] sm:$0xff]
    %v1416 = vld [vmem:[%s431 + $0x8] sm:$0xff]
    %v1417 = vld [vmem:[%s431 + $0x10] sm:$0xff]
    %v1418 = vld [vmem:[%s431 + $0x18] sm:$0xff]
    %v1419 = vld [vmem:[%s436] sm:$0x1]
    %v1421 = vlaneseq
    %v1422 = vshrl.u32 %v1421, 7
    %v1423 = vsub.s32 0, %v1422
    %v1424 = vrot.slane %v1419, %v1423
    %v1427 = vsel %vm342, %v1330, 0
    %1429 = vmatprep.subr.mxu0 0.0
    %1430 = vmatpush1.msra.mxu0 %v1415
    %1431 = vmatprep.subr.mxu0 0.0
    %1432 = vmatpush1.msra.mxu0 %v1416
    %1433 = vmatprep.subr.mxu0 0.0
    %1434 = vmatpush1.msra.mxu0 %v1417
    %1435 = vmatprep.subr.mxu0 0.0
    %1436 = vmatpush1.msra.mxu0 %v1418
    %1437 = vmatprep.subr.mxu0 0.0
    %1438 = vmatpush1.msra.mxu0 0.0
    %1439 = vmatprep.subr.mxu0 0.0
    %1440 = vmatpush1.msra.mxu0 0.0
    %1441 = vmatprep.subr.mxu0 0.0
    %1442 = vmatpush1.msra.mxu0 0.0
    %1443 = vmatprep.subr.mxu0 0.0
    %1444 = vmatpush1.msra.mxu0 0.0
    %1445 = vmatprep.subr.mxu0 0.0
    %1446 = vmatpush1.msra.mxu0 0.0
    %1447 = vmatprep.subr.mxu0 0.0
    %1448 = vmatpush1.msra.mxu0 0.0
    %1449 = vmatprep.subr.mxu0 0.0
    %1450 = vmatpush1.msra.mxu0 0.0
    %1451 = vmatprep.subr.mxu0 0.0
    %1452 = vmatpush1.msra.mxu0 0.0
    %1453 = vmatprep.subr.mxu0 0.0
    %1454 = vmatpush1.msra.mxu0 0.0
    %1455 = vmatprep.subr.mxu0 0.0
    %1456 = vmatpush1.msra.mxu0 0.0
    %1457 = vmatprep.subr.mxu0 0.0
    %1458 = vmatpush1.msra.mxu0 0.0
    %1459 = vmatprep.subr.mxu0 0.0
    %1460 = vmatpush1.msra.mxu0 0.0
    %1461 = vmatprep.subr.mxu0 0.0
    %1462 = vmatpush1.msra.mxu0 0.0
    %1463 = vmatprep.subr.mxu0 0.0
    %1464 = vmatpush1.msra.mxu0 0.0
    %1465 = vmatprep.subr.mxu0 0.0
    %1466 = vmatpush1.msra.mxu0 0.0
    %1467 = vmatprep.subr.mxu0 0.0
    %1468 = vmatpush1.msra.mxu0 0.0
    %1469 = vmatprep.subr.mxu0 0.0
    %1470 = vmatpush1.msra.mxu0 0.0
    %1471 = vmatprep.subr.mxu0 0.0
    %1472 = vmatpush1.msra.mxu0 0.0
    %1473 = vmatprep.subr.mxu0 0.0
    %1474 = vmatpush1.msra.mxu0 0.0
    %1475 = vmatprep.subr.mxu0 0.0
    %1476 = vmatpush1.msra.mxu0 0.0
    %1477 = vmatprep.subr.mxu0 0.0
    %1478 = vmatpush1.msra.mxu0 0.0
    %1479 = vmatprep.subr.mxu0 0.0
    %1480 = vmatpush1.msra.mxu0 0.0
    %1481 = vmatprep.subr.mxu0 0.0
    %1482 = vmatpush1.msra.mxu0 0.0
    %1483 = vmatprep.subr.mxu0 0.0
    %1484 = vmatpush1.msra.mxu0 0.0
    %1485 = vmatprep.subr.mxu0 0.0
    %1486 = vmatpush1.msra.mxu0 0.0
    %1487 = vmatprep.subr.mxu0 0.0
    %1488 = vmatpush1.msra.mxu0 0.0
    %1489 = vmatprep.subr.mxu0 0.0
    %1490 = vmatpush1.msra.mxu0 0.0
    %1491 = vmatprep.subr.mxu0 0.0
    %1492 = vmatpush1.msra.mxu0 0.0
    %1493 = vmatprep.mubr.f32.mxu0 0.0
    %1494 = vmatmul.mubr.f32.gmra.mrb[0].mxu0 %v1427
    %v1495 = vpop.f32.mrb[0].mxu0
    %v1496 = vadd.f32 %v1424, %v1495
    %v1497 = vpop.f32.mrb[0].mxu0
    %1498 = vdwg.mxu0
    %s1499 = scalar_lea.vmem [#allocation2], 32
    %v1500 = vld [vmem:[%s1499] sm:$0xff]
    %v1501 = vadd.f32 %v1500, %v1412
    %v1502 = vxor.u32 %v1501, 2147483648
    %v1503 = vmul.f32 %v1502, 1.442695
    %v1504 = vpow.pop %v1503
    %v1505 = vadd.f32 %v1504, 1.0
    %v1506 = vrcp.pop %v1505
    %v1507 = vmul.f32 1.0, %v1506
    %1509 = vrot.lane.b32.xlu0 %v1412, 64
    %v1510 = vpop.permute.xlu0 %1509
    %v1512 = vmul.f32 %v1507, %v1510
    %1514 = vrot.lane.b32.xlu0 %v1512, 64
    %v1515 = vpop.permute.xlu0 %1514
    %v1517 = vadd.f32 %v1500, %v1515
    %v1518 = vtanh.pop %v1517
    %v1519 = vsub.f32 1.0, %v1507
    %1521 = vrot.lane.b32.xlu0 %v1518, 96
    %v1522 = vpop.permute.xlu0 %1521
    %v1524 = vmul.f32 %v1519, %v1522
    %1525 = vrot.lane.b32.xlu0 %v1329, 32
    %v1526 = vpop.permute.xlu0 %1525
    %v1528 = vmul.f32 %v1507, %v1526
    %v1529 = vadd.f32 %v1524, %v1528
    %s1530 = scalar_lea.vmem [#allocation3], 24
    %v1531 = vld [vmem:[%s1530] sm:$0xff]
    %v1532 = vadd.f32 %v1531, %v1496
    %v1533 = vxor.u32 %v1532, 2147483648
    %v1534 = vmul.f32 %v1533, 1.442695
    %v1535 = vpow.pop %v1534
    %v1536 = vadd.f32 %v1535, 1.0
    %v1537 = vrcp.pop %v1536
    %v1538 = vmul.f32 1.0, %v1537
    %1540 = vrot.lane.b32.xlu0 %v1496, 64
    %v1541 = vpop.permute.xlu0 %1540
    %v1543 = vmul.f32 %v1538, %v1541
    %1545 = vrot.lane.b32.xlu0 %v1543, 64
    %v1546 = vpop.permute.xlu0 %1545
    %v1548 = vadd.f32 %v1531, %v1546
    %v1549 = vtanh.pop %v1548
    %v1550 = vsub.f32 1.0, %v1538
    %1552 = vrot.lane.b32.xlu0 %v1549, 96
    %v1553 = vpop.permute.xlu0 %1552
    %v1555 = vmul.f32 %v1550, %v1553
    %1556 = vrot.lane.b32.xlu0 %v1330, 32
    %v1557 = vpop.permute.xlu0 %1556
    %v1559 = vmul.f32 %v1538, %v1557
    %v1560 = vadd.f32 %v1555, %v1559
    %1562 = vrot.lane.b32.xlu0 %v1529, 96
    %v1563 = vpop.permute.xlu0 %1562
    %1565 = vst.msk [vmem:[#allocation4] sm:$0xff] %vm342, %v1563
    %1567 = vrot.lane.b32.xlu0 %v1560, 96
    %v1568 = vpop.permute.xlu0 %1567
    %1570 = vst.msk [vmem:[#allocation5] sm:$0xff] %vm342, %v1568
    %s1571 = scalar_lea.vmem [#allocation6], 32
    %1572 = vst.msk [vmem:[%s1571] sm:$0xff] %vm342, %v1563
    %s1573 = scalar_lea.vmem [#allocation7], 24
    %1574 = vst.msk [vmem:[%s1573] sm:$0xff] %vm342, %v1568
    %v1575 = vld [vmem:[#allocation4] sm:$0xff]
    %v1576 = vld [vmem:[#allocation5] sm:$0xff]
    %v1577 = vld [vmem:[#allocation13] sm:$0xff]
    %v1578 = vld [vmem:[#allocation13 + $0x8] sm:$0xff]
    %v1579 = vld [vmem:[#allocation13 + $0x10] sm:$0xff]
    %v1580 = vld [vmem:[#allocation13 + $0x18] sm:$0xff]
    %v1581 = vld [vmem:[%s4] sm:$0x1]
    %v1583 = vlaneseq
    %v1584 = vshrl.u32 %v1583, 7
    %v1585 = vsub.s32 0, %v1584
    %v1586 = vrot.slane %v1581, %v1585
    %v1589 = vsel %vm342, %v1575, 0
    %1591 = vmatprep.subr.mxu0 0.0
    %1592 = vmatpush1.msra.mxu0 %v1577
    %1593 = vmatprep.subr.mxu0 0.0
    %1594 = vmatpush1.msra.mxu0 %v1578
    %1595 = vmatprep.subr.mxu0 0.0
    %1596 = vmatpush1.msra.mxu0 %v1579
    %1597 = vmatprep.subr.mxu0 0.0
    %1598 = vmatpush1.msra.mxu0 %v1580
    %1599 = vmatprep.subr.mxu0 0.0
    %1600 = vmatpush1.msra.mxu0 0.0
    %1601 = vmatprep.subr.mxu0 0.0
    %1602 = vmatpush1.msra.mxu0 0.0
    %1603 = vmatprep.subr.mxu0 0.0
    %1604 = vmatpush1.msra.mxu0 0.0
    %1605 = vmatprep.subr.mxu0 0.0
    %1606 = vmatpush1.msra.mxu0 0.0
    %1607 = vmatprep.subr.mxu0 0.0
    %1608 = vmatpush1.msra.mxu0 0.0
    %1609 = vmatprep.subr.mxu0 0.0
    %1610 = vmatpush1.msra.mxu0 0.0
    %1611 = vmatprep.subr.mxu0 0.0
    %1612 = vmatpush1.msra.mxu0 0.0
    %1613 = vmatprep.subr.mxu0 0.0
    %1614 = vmatpush1.msra.mxu0 0.0
    %1615 = vmatprep.subr.mxu0 0.0
    %1616 = vmatpush1.msra.mxu0 0.0
    %1617 = vmatprep.subr.mxu0 0.0
    %1618 = vmatpush1.msra.mxu0 0.0
    %1619 = vmatprep.subr.mxu0 0.0
    %1620 = vmatpush1.msra.mxu0 0.0
    %1621 = vmatprep.subr.mxu0 0.0
    %1622 = vmatpush1.msra.mxu0 0.0
    %1623 = vmatprep.subr.mxu0 0.0
    %1624 = vmatpush1.msra.mxu0 0.0
    %1625 = vmatprep.subr.mxu0 0.0
    %1626 = vmatpush1.msra.mxu0 0.0
    %1627 = vmatprep.subr.mxu0 0.0
    %1628 = vmatpush1.msra.mxu0 0.0
    %1629 = vmatprep.subr.mxu0 0.0
    %1630 = vmatpush1.msra.mxu0 0.0
    %1631 = vmatprep.subr.mxu0 0.0
    %1632 = vmatpush1.msra.mxu0 0.0
    %1633 = vmatprep.subr.mxu0 0.0
    %1634 = vmatpush1.msra.mxu0 0.0
    %1635 = vmatprep.subr.mxu0 0.0
    %1636 = vmatpush1.msra.mxu0 0.0
    %1637 = vmatprep.subr.mxu0 0.0
    %1638 = vmatpush1.msra.mxu0 0.0
    %1639 = vmatprep.subr.mxu0 0.0
    %1640 = vmatpush1.msra.mxu0 0.0
    %1641 = vmatprep.subr.mxu0 0.0
    %1642 = vmatpush1.msra.mxu0 0.0
    %1643 = vmatprep.subr.mxu0 0.0
    %1644 = vmatpush1.msra.mxu0 0.0
    %1645 = vmatprep.subr.mxu0 0.0
    %1646 = vmatpush1.msra.mxu0 0.0
    %1647 = vmatprep.subr.mxu0 0.0
    %1648 = vmatpush1.msra.mxu0 0.0
    %1649 = vmatprep.subr.mxu0 0.0
    %1650 = vmatpush1.msra.mxu0 0.0
    %1651 = vmatprep.subr.mxu0 0.0
    %1652 = vmatpush1.msra.mxu0 0.0
    %1653 = vmatprep.subr.mxu0 0.0
    %1654 = vmatpush1.msra.mxu0 0.0
    %1655 = vmatprep.mubr.f32.mxu0 0.0
    %1656 = vmatmul.mubr.f32.gmra.mrb[0].mxu0 %v1589
    %v1657 = vpop.f32.mrb[0].mxu0
    %v1658 = vadd.f32 %v1586, %v1657
    %v1659 = vpop.f32.mrb[0].mxu0
    %1660 = vdwg.mxu0
    %v1661 = vld [vmem:[%s431] sm:$0xff]
    %v1662 = vld [vmem:[%s431 + $0x8] sm:$0xff]
    %v1663 = vld [vmem:[%s431 + $0x10] sm:$0xff]
    %v1664 = vld [vmem:[%s431 + $0x18] sm:$0xff]
    %v1665 = vld [vmem:[%s436] sm:$0x1]
    %v1667 = vlaneseq
    %v1668 = vshrl.u32 %v1667, 7
    %v1669 = vsub.s32 0, %v1668
    %v1670 = vrot.slane %v1665, %v1669
    %v1673 = vsel %vm342, %v1576, 0
    %1675 = vmatprep.subr.mxu0 0.0
    %1676 = vmatpush1.msra.mxu0 %v1661
    %1677 = vmatprep.subr.mxu0 0.0
    %1678 = vmatpush1.msra.mxu0 %v1662
    %1679 = vmatprep.subr.mxu0 0.0
    %1680 = vmatpush1.msra.mxu0 %v1663
    %1681 = vmatprep.subr.mxu0 0.0
    %1682 = vmatpush1.msra.mxu0 %v1664
    %1683 = vmatprep.subr.mxu0 0.0
    %1684 = vmatpush1.msra.mxu0 0.0
    %1685 = vmatprep.subr.mxu0 0.0
    %1686 = vmatpush1.msra.mxu0 0.0
    %1687 = vmatprep.subr.mxu0 0.0
    %1688 = vmatpush1.msra.mxu0 0.0
    %1689 = vmatprep.subr.mxu0 0.0
    %1690 = vmatpush1.msra.mxu0 0.0
    %1691 = vmatprep.subr.mxu0 0.0
    %1692 = vmatpush1.msra.mxu0 0.0
    %1693 = vmatprep.subr.mxu0 0.0
    %1694 = vmatpush1.msra.mxu0 0.0
    %1695 = vmatprep.subr.mxu0 0.0
    %1696 = vmatpush1.msra.mxu0 0.0
    %1697 = vmatprep.subr.mxu0 0.0
    %1698 = vmatpush1.msra.mxu0 0.0
    %1699 = vmatprep.subr.mxu0 0.0
    %1700 = vmatpush1.msra.mxu0 0.0
    %1701 = vmatprep.subr.mxu0 0.0
    %1702 = vmatpush1.msra.mxu0 0.0
    %1703 = vmatprep.subr.mxu0 0.0
    %1704 = vmatpush1.msra.mxu0 0.0
    %1705 = vmatprep.subr.mxu0 0.0
    %1706 = vmatpush1.msra.mxu0 0.0
    %1707 = vmatprep.subr.mxu0 0.0
    %1708 = vmatpush1.msra.mxu0 0.0
    %1709 = vmatprep.subr.mxu0 0.0
    %1710 = vmatpush1.msra.mxu0 0.0
    %1711 = vmatprep.subr.mxu0 0.0
    %1712 = vmatpush1.msra.mxu0 0.0
    %1713 = vmatprep.subr.mxu0 0.0
    %1714 = vmatpush1.msra.mxu0 0.0
    %1715 = vmatprep.subr.mxu0 0.0
    %1716 = vmatpush1.msra.mxu0 0.0
    %1717 = vmatprep.subr.mxu0 0.0
    %1718 = vmatpush1.msra.mxu0 0.0
    %1719 = vmatprep.subr.mxu0 0.0
    %1720 = vmatpush1.msra.mxu0 0.0
    %1721 = vmatprep.subr.mxu0 0.0
    %1722 = vmatpush1.msra.mxu0 0.0
    %1723 = vmatprep.subr.mxu0 0.0
    %1724 = vmatpush1.msra.mxu0 0.0
    %1725 = vmatprep.subr.mxu0 0.0
    %1726 = vmatpush1.msra.mxu0 0.0
    %1727 = vmatprep.subr.mxu0 0.0
    %1728 = vmatpush1.msra.mxu0 0.0
    %1729 = vmatprep.subr.mxu0 0.0
    %1730 = vmatpush1.msra.mxu0 0.0
    %1731 = vmatprep.subr.mxu0 0.0
    %1732 = vmatpush1.msra.mxu0 0.0
    %1733 = vmatprep.subr.mxu0 0.0
    %1734 = vmatpush1.msra.mxu0 0.0
    %1735 = vmatprep.subr.mxu0 0.0
    %1736 = vmatpush1.msra.mxu0 0.0
    %1737 = vmatprep.subr.mxu0 0.0
    %1738 = vmatpush1.msra.mxu0 0.0
    %1739 = vmatprep.mubr.f32.mxu0 0.0
    %1740 = vmatmul.mubr.f32.gmra.mrb[0].mxu0 %v1673
    %v1741 = vpop.f32.mrb[0].mxu0
    %v1742 = vadd.f32 %v1670, %v1741
    %v1743 = vpop.f32.mrb[0].mxu0
    %1744 = vdwg.mxu0
    %s1745 = scalar_lea.vmem [#allocation2], 40
    %v1746 = vld [vmem:[%s1745] sm:$0xff]
    %v1747 = vadd.f32 %v1746, %v1658
    %v1748 = vxor.u32 %v1747, 2147483648
    %v1749 = vmul.f32 %v1748, 1.442695
    %v1750 = vpow.pop %v1749
    %v1751 = vadd.f32 %v1750, 1.0
    %v1752 = vrcp.pop %v1751
    %v1753 = vmul.f32 1.0, %v1752
    %1755 = vrot.lane.b32.xlu0 %v1658, 64
    %v1756 = vpop.permute.xlu0 %1755
    %v1758 = vmul.f32 %v1753, %v1756
    %1760 = vrot.lane.b32.xlu0 %v1758, 64
    %v1761 = vpop.permute.xlu0 %1760
    %v1763 = vadd.f32 %v1746, %v1761
    %v1764 = vtanh.pop %v1763
    %v1765 = vsub.f32 1.0, %v1753
    %1767 = vrot.lane.b32.xlu0 %v1764, 96
    %v1768 = vpop.permute.xlu0 %1767
    %v1770 = vmul.f32 %v1765, %v1768
    %1771 = vrot.lane.b32.xlu0 %v1575, 32
    %v1772 = vpop.permute.xlu0 %1771
    %v1774 = vmul.f32 %v1753, %v1772
    %v1775 = vadd.f32 %v1770, %v1774
    %s1776 = scalar_lea.vmem [#allocation3], 16
    %v1777 = vld [vmem:[%s1776] sm:$0xff]
    %v1778 = vadd.f32 %v1777, %v1742
    %v1779 = vxor.u32 %v1778, 2147483648
    %v1780 = vmul.f32 %v1779, 1.442695
    %v1781 = vpow.pop %v1780
    %v1782 = vadd.f32 %v1781, 1.0
    %v1783 = vrcp.pop %v1782
    %v1784 = vmul.f32 1.0, %v1783
    %1786 = vrot.lane.b32.xlu0 %v1742, 64
    %v1787 = vpop.permute.xlu0 %1786
    %v1789 = vmul.f32 %v1784, %v1787
    %1791 = vrot.lane.b32.xlu0 %v1789, 64
    %v1792 = vpop.permute.xlu0 %1791
    %v1794 = vadd.f32 %v1777, %v1792
    %v1795 = vtanh.pop %v1794
    %v1796 = vsub.f32 1.0, %v1784
    %1798 = vrot.lane.b32.xlu0 %v1795, 96
    %v1799 = vpop.permute.xlu0 %1798
    %v1801 = vmul.f32 %v1796, %v1799
    %1802 = vrot.lane.b32.xlu0 %v1576, 32
    %v1803 = vpop.permute.xlu0 %1802
    %v1805 = vmul.f32 %v1784, %v1803
    %v1806 = vadd.f32 %v1801, %v1805
    %1808 = vrot.lane.b32.xlu0 %v1775, 96
    %v1809 = vpop.permute.xlu0 %1808
    %1811 = vst.msk [vmem:[#allocation4] sm:$0xff] %vm342, %v1809
    %1813 = vrot.lane.b32.xlu0 %v1806, 96
    %v1814 = vpop.permute.xlu0 %1813
    %1816 = vst.msk [vmem:[#allocation5] sm:$0xff] %vm342, %v1814
    %s1817 = scalar_lea.vmem [#allocation6], 40
    %1818 = vst.msk [vmem:[%s1817] sm:$0xff] %vm342, %v1809
    %s1819 = scalar_lea.vmem [#allocation7], 16
    %1820 = vst.msk [vmem:[%s1819] sm:$0xff] %vm342, %v1814
    %v1821 = vld [vmem:[#allocation4] sm:$0xff]
    %v1822 = vld [vmem:[#allocation5] sm:$0xff]
    %v1823 = vld [vmem:[#allocation13] sm:$0xff]
    %v1824 = vld [vmem:[#allocation13 + $0x8] sm:$0xff]
    %v1825 = vld [vmem:[#allocation13 + $0x10] sm:$0xff]
    %v1826 = vld [vmem:[#allocation13 + $0x18] sm:$0xff]
    %v1827 = vld [vmem:[%s4] sm:$0x1]
    %v1829 = vlaneseq
    %v1830 = vshrl.u32 %v1829, 7
    %v1831 = vsub.s32 0, %v1830
    %v1832 = vrot.slane %v1827, %v1831
    %v1835 = vsel %vm342, %v1821, 0
    %1837 = vmatprep.subr.mxu0 0.0
    %1838 = vmatpush1.msra.mxu0 %v1823
    %1839 = vmatprep.subr.mxu0 0.0
    %1840 = vmatpush1.msra.mxu0 %v1824
    %1841 = vmatprep.subr.mxu0 0.0
    %1842 = vmatpush1.msra.mxu0 %v1825
    %1843 = vmatprep.subr.mxu0 0.0
    %1844 = vmatpush1.msra.mxu0 %v1826
    %1845 = vmatprep.subr.mxu0 0.0
    %1846 = vmatpush1.msra.mxu0 0.0
    %1847 = vmatprep.subr.mxu0 0.0
    %1848 = vmatpush1.msra.mxu0 0.0
    %1849 = vmatprep.subr.mxu0 0.0
    %1850 = vmatpush1.msra.mxu0 0.0
    %1851 = vmatprep.subr.mxu0 0.0
    %1852 = vmatpush1.msra.mxu0 0.0
    %1853 = vmatprep.subr.mxu0 0.0
    %1854 = vmatpush1.msra.mxu0 0.0
    %1855 = vmatprep.subr.mxu0 0.0
    %1856 = vmatpush1.msra.mxu0 0.0
    %1857 = vmatprep.subr.mxu0 0.0
    %1858 = vmatpush1.msra.mxu0 0.0
    %1859 = vmatprep.subr.mxu0 0.0
    %1860 = vmatpush1.msra.mxu0 0.0
    %1861 = vmatprep.subr.mxu0 0.0
    %1862 = vmatpush1.msra.mxu0 0.0
    %1863 = vmatprep.subr.mxu0 0.0
    %1864 = vmatpush1.msra.mxu0 0.0
    %1865 = vmatprep.subr.mxu0 0.0
    %1866 = vmatpush1.msra.mxu0 0.0
    %1867 = vmatprep.subr.mxu0 0.0
    %1868 = vmatpush1.msra.mxu0 0.0
    %1869 = vmatprep.subr.mxu0 0.0
    %1870 = vmatpush1.msra.mxu0 0.0
    %1871 = vmatprep.subr.mxu0 0.0
    %1872 = vmatpush1.msra.mxu0 0.0
    %1873 = vmatprep.subr.mxu0 0.0
    %1874 = vmatpush1.msra.mxu0 0.0
    %1875 = vmatprep.subr.mxu0 0.0
    %1876 = vmatpush1.msra.mxu0 0.0
    %1877 = vmatprep.subr.mxu0 0.0
    %1878 = vmatpush1.msra.mxu0 0.0
    %1879 = vmatprep.subr.mxu0 0.0
    %1880 = vmatpush1.msra.mxu0 0.0
    %1881 = vmatprep.subr.mxu0 0.0
    %1882 = vmatpush1.msra.mxu0 0.0
    %1883 = vmatprep.subr.mxu0 0.0
    %1884 = vmatpush1.msra.mxu0 0.0
    %1885 = vmatprep.subr.mxu0 0.0
    %1886 = vmatpush1.msra.mxu0 0.0
    %1887 = vmatprep.subr.mxu0 0.0
    %1888 = vmatpush1.msra.mxu0 0.0
    %1889 = vmatprep.subr.mxu0 0.0
    %1890 = vmatpush1.msra.mxu0 0.0
    %1891 = vmatprep.subr.mxu0 0.0
    %1892 = vmatpush1.msra.mxu0 0.0
    %1893 = vmatprep.subr.mxu0 0.0
    %1894 = vmatpush1.msra.mxu0 0.0
    %1895 = vmatprep.subr.mxu0 0.0
    %1896 = vmatpush1.msra.mxu0 0.0
    %1897 = vmatprep.subr.mxu0 0.0
    %1898 = vmatpush1.msra.mxu0 0.0
    %1899 = vmatprep.subr.mxu0 0.0
    %1900 = vmatpush1.msra.mxu0 0.0
    %1901 = vmatprep.mubr.f32.mxu0 0.0
    %1902 = vmatmul.mubr.f32.gmra.mrb[0].mxu0 %v1835
    %v1903 = vpop.f32.mrb[0].mxu0
    %v1904 = vadd.f32 %v1832, %v1903
    %v1905 = vpop.f32.mrb[0].mxu0
    %1906 = vdwg.mxu0
    %v1907 = vld [vmem:[%s431] sm:$0xff]
    %v1908 = vld [vmem:[%s431 + $0x8] sm:$0xff]
    %v1909 = vld [vmem:[%s431 + $0x10] sm:$0xff]
    %v1910 = vld [vmem:[%s431 + $0x18] sm:$0xff]
    %v1911 = vld [vmem:[%s436] sm:$0x1]
    %v1913 = vlaneseq
    %v1914 = vshrl.u32 %v1913, 7
    %v1915 = vsub.s32 0, %v1914
    %v1916 = vrot.slane %v1911, %v1915
    %v1919 = vsel %vm342, %v1822, 0
    %1921 = vmatprep.subr.mxu0 0.0
    %1922 = vmatpush1.msra.mxu0 %v1907
    %1923 = vmatprep.subr.mxu0 0.0
    %1924 = vmatpush1.msra.mxu0 %v1908
    %1925 = vmatprep.subr.mxu0 0.0
    %1926 = vmatpush1.msra.mxu0 %v1909
    %1927 = vmatprep.subr.mxu0 0.0
    %1928 = vmatpush1.msra.mxu0 %v1910
    %1929 = vmatprep.subr.mxu0 0.0
    %1930 = vmatpush1.msra.mxu0 0.0
    %1931 = vmatprep.subr.mxu0 0.0
    %1932 = vmatpush1.msra.mxu0 0.0
    %1933 = vmatprep.subr.mxu0 0.0
    %1934 = vmatpush1.msra.mxu0 0.0
    %1935 = vmatprep.subr.mxu0 0.0
    %1936 = vmatpush1.msra.mxu0 0.0
    %1937 = vmatprep.subr.mxu0 0.0
    %1938 = vmatpush1.msra.mxu0 0.0
    %1939 = vmatprep.subr.mxu0 0.0
    %1940 = vmatpush1.msra.mxu0 0.0
    %1941 = vmatprep.subr.mxu0 0.0
    %1942 = vmatpush1.msra.mxu0 0.0
    %1943 = vmatprep.subr.mxu0 0.0
    %1944 = vmatpush1.msra.mxu0 0.0
    %1945 = vmatprep.subr.mxu0 0.0
    %1946 = vmatpush1.msra.mxu0 0.0
    %1947 = vmatprep.subr.mxu0 0.0
    %1948 = vmatpush1.msra.mxu0 0.0
    %1949 = vmatprep.subr.mxu0 0.0
    %1950 = vmatpush1.msra.mxu0 0.0
    %1951 = vmatprep.subr.mxu0 0.0
    %1952 = vmatpush1.msra.mxu0 0.0
    %1953 = vmatprep.subr.mxu0 0.0
    %1954 = vmatpush1.msra.mxu0 0.0
    %1955 = vmatprep.subr.mxu0 0.0
    %1956 = vmatpush1.msra.mxu0 0.0
    %1957 = vmatprep.subr.mxu0 0.0
    %1958 = vmatpush1.msra.mxu0 0.0
    %1959 = vmatprep.subr.mxu0 0.0
    %1960 = vmatpush1.msra.mxu0 0.0
    %1961 = vmatprep.subr.mxu0 0.0
    %1962 = vmatpush1.msra.mxu0 0.0
    %1963 = vmatprep.subr.mxu0 0.0
    %1964 = vmatpush1.msra.mxu0 0.0
    %1965 = vmatprep.subr.mxu0 0.0
    %1966 = vmatpush1.msra.mxu0 0.0
    %1967 = vmatprep.subr.mxu0 0.0
    %1968 = vmatpush1.msra.mxu0 0.0
    %1969 = vmatprep.subr.mxu0 0.0
    %1970 = vmatpush1.msra.mxu0 0.0
    %1971 = vmatprep.subr.mxu0 0.0
    %1972 = vmatpush1.msra.mxu0 0.0
    %1973 = vmatprep.subr.mxu0 0.0
    %1974 = vmatpush1.msra.mxu0 0.0
    %1975 = vmatprep.subr.mxu0 0.0
    %1976 = vmatpush1.msra.mxu0 0.0
    %1977 = vmatprep.subr.mxu0 0.0
    %1978 = vmatpush1.msra.mxu0 0.0
    %1979 = vmatprep.subr.mxu0 0.0
    %1980 = vmatpush1.msra.mxu0 0.0
    %1981 = vmatprep.subr.mxu0 0.0
    %1982 = vmatpush1.msra.mxu0 0.0
    %1983 = vmatprep.subr.mxu0 0.0
    %1984 = vmatpush1.msra.mxu0 0.0
    %1985 = vmatprep.mubr.f32.mxu0 0.0
    %1986 = vmatmul.mubr.f32.gmra.mrb[0].mxu0 %v1919
    %v1987 = vpop.f32.mrb[0].mxu0
    %v1988 = vadd.f32 %v1916, %v1987
    %v1989 = vpop.f32.mrb[0].mxu0
    %1990 = vdwg.mxu0
    %s1991 = scalar_lea.vmem [#allocation2], 48
    %v1992 = vld [vmem:[%s1991] sm:$0xff]
    %v1993 = vadd.f32 %v1992, %v1904
    %v1994 = vxor.u32 %v1993, 2147483648
    %v1995 = vmul.f32 %v1994, 1.442695
    %v1996 = vpow.pop %v1995
    %v1997 = vadd.f32 %v1996, 1.0
    %v1998 = vrcp.pop %v1997
    %v1999 = vmul.f32 1.0, %v1998
    %2001 = vrot.lane.b32.xlu0 %v1904, 64
    %v2002 = vpop.permute.xlu0 %2001
    %v2004 = vmul.f32 %v1999, %v2002
    %2006 = vrot.lane.b32.xlu0 %v2004, 64
    %v2007 = vpop.permute.xlu0 %2006
    %v2009 = vadd.f32 %v1992, %v2007
    %v2010 = vtanh.pop %v2009
    %v2011 = vsub.f32 1.0, %v1999
    %2013 = vrot.lane.b32.xlu0 %v2010, 96
    %v2014 = vpop.permute.xlu0 %2013
    %v2016 = vmul.f32 %v2011, %v2014
    %2017 = vrot.lane.b32.xlu0 %v1821, 32
    %v2018 = vpop.permute.xlu0 %2017
    %v2020 = vmul.f32 %v1999, %v2018
    %v2021 = vadd.f32 %v2016, %v2020
    %s2022 = scalar_lea.vmem [#allocation3], 8
    %v2023 = vld [vmem:[%s2022] sm:$0xff]
    %v2024 = vadd.f32 %v2023, %v1988
    %v2025 = vxor.u32 %v2024, 2147483648
    %v2026 = vmul.f32 %v2025, 1.442695
    %v2027 = vpow.pop %v2026
    %v2028 = vadd.f32 %v2027, 1.0
    %v2029 = vrcp.pop %v2028
    %v2030 = vmul.f32 1.0, %v2029
    %2032 = vrot.lane.b32.xlu0 %v1988, 64
    %v2033 = vpop.permute.xlu0 %2032
    %v2035 = vmul.f32 %v2030, %v2033
    %2037 = vrot.lane.b32.xlu0 %v2035, 64
    %v2038 = vpop.permute.xlu0 %2037
    %v2040 = vadd.f32 %v2023, %v2038
    %v2041 = vtanh.pop %v2040
    %v2042 = vsub.f32 1.0, %v2030
    %2044 = vrot.lane.b32.xlu0 %v2041, 96
    %v2045 = vpop.permute.xlu0 %2044
    %v2047 = vmul.f32 %v2042, %v2045
    %2048 = vrot.lane.b32.xlu0 %v1822, 32
    %v2049 = vpop.permute.xlu0 %2048
    %v2051 = vmul.f32 %v2030, %v2049
    %v2052 = vadd.f32 %v2047, %v2051
    %2054 = vrot.lane.b32.xlu0 %v2021, 96
    %v2055 = vpop.permute.xlu0 %2054
    %2057 = vst.msk [vmem:[#allocation4] sm:$0xff] %vm342, %v2055
    %2059 = vrot.lane.b32.xlu0 %v2052, 96
    %v2060 = vpop.permute.xlu0 %2059
    %2062 = vst.msk [vmem:[#allocation5] sm:$0xff] %vm342, %v2060
    %s2063 = scalar_lea.vmem [#allocation6], 48
    %2064 = vst.msk [vmem:[%s2063] sm:$0xff] %vm342, %v2055
    %s2065 = scalar_lea.vmem [#allocation7], 8
    %2066 = vst.msk [vmem:[%s2065] sm:$0xff] %vm342, %v2060
    %v2067 = vld [vmem:[#allocation4] sm:$0xff]
    %v2068 = vld [vmem:[#allocation5] sm:$0xff]
    %v2069 = vld [vmem:[#allocation13] sm:$0xff]
    %v2070 = vld [vmem:[#allocation13 + $0x8] sm:$0xff]
    %v2071 = vld [vmem:[#allocation13 + $0x10] sm:$0xff]
    %v2072 = vld [vmem:[#allocation13 + $0x18] sm:$0xff]
    %v2073 = vld [vmem:[%s4] sm:$0x1]
    %v2075 = vlaneseq
    %v2076 = vshrl.u32 %v2075, 7
    %v2077 = vsub.s32 0, %v2076
    %v2078 = vrot.slane %v2073, %v2077
    %v2081 = vsel %vm342, %v2067, 0
    %2083 = vmatprep.subr.mxu0 0.0
    %2084 = vmatpush1.msra.mxu0 %v2069
    %2085 = vmatprep.subr.mxu0 0.0
    %2086 = vmatpush1.msra.mxu0 %v2070
    %2087 = vmatprep.subr.mxu0 0.0
    %2088 = vmatpush1.msra.mxu0 %v2071
    %2089 = vmatprep.subr.mxu0 0.0
    %2090 = vmatpush1.msra.mxu0 %v2072
    %2091 = vmatprep.subr.mxu0 0.0
    %2092 = vmatpush1.msra.mxu0 0.0
    %2093 = vmatprep.subr.mxu0 0.0
    %2094 = vmatpush1.msra.mxu0 0.0
    %2095 = vmatprep.subr.mxu0 0.0
    %2096 = vmatpush1.msra.mxu0 0.0
    %2097 = vmatprep.subr.mxu0 0.0
    %2098 = vmatpush1.msra.mxu0 0.0
    %2099 = vmatprep.subr.mxu0 0.0
    %2100 = vmatpush1.msra.mxu0 0.0
    %2101 = vmatprep.subr.mxu0 0.0
    %2102 = vmatpush1.msra.mxu0 0.0
    %2103 = vmatprep.subr.mxu0 0.0
    %2104 = vmatpush1.msra.mxu0 0.0
    %2105 = vmatprep.subr.mxu0 0.0
    %2106 = vmatpush1.msra.mxu0 0.0
    %2107 = vmatprep.subr.mxu0 0.0
    %2108 = vmatpush1.msra.mxu0 0.0
    %2109 = vmatprep.subr.mxu0 0.0
    %2110 = vmatpush1.msra.mxu0 0.0
    %2111 = vmatprep.subr.mxu0 0.0
    %2112 = vmatpush1.msra.mxu0 0.0
    %2113 = vmatprep.subr.mxu0 0.0
    %2114 = vmatpush1.msra.mxu0 0.0
    %2115 = vmatprep.subr.mxu0 0.0
    %2116 = vmatpush1.msra.mxu0 0.0
    %2117 = vmatprep.subr.mxu0 0.0
    %2118 = vmatpush1.msra.mxu0 0.0
    %2119 = vmatprep.subr.mxu0 0.0
    %2120 = vmatpush1.msra.mxu0 0.0
    %2121 = vmatprep.subr.mxu0 0.0
    %2122 = vmatpush1.msra.mxu0 0.0
    %2123 = vmatprep.subr.mxu0 0.0
    %2124 = vmatpush1.msra.mxu0 0.0
    %2125 = vmatprep.subr.mxu0 0.0
    %2126 = vmatpush1.msra.mxu0 0.0
    %2127 = vmatprep.subr.mxu0 0.0
    %2128 = vmatpush1.msra.mxu0 0.0
    %2129 = vmatprep.subr.mxu0 0.0
    %2130 = vmatpush1.msra.mxu0 0.0
    %2131 = vmatprep.subr.mxu0 0.0
    %2132 = vmatpush1.msra.mxu0 0.0
    %2133 = vmatprep.subr.mxu0 0.0
    %2134 = vmatpush1.msra.mxu0 0.0
    %2135 = vmatprep.subr.mxu0 0.0
    %2136 = vmatpush1.msra.mxu0 0.0
    %2137 = vmatprep.subr.mxu0 0.0
    %2138 = vmatpush1.msra.mxu0 0.0
    %2139 = vmatprep.subr.mxu0 0.0
    %2140 = vmatpush1.msra.mxu0 0.0
    %2141 = vmatprep.subr.mxu0 0.0
    %2142 = vmatpush1.msra.mxu0 0.0
    %2143 = vmatprep.subr.mxu0 0.0
    %2144 = vmatpush1.msra.mxu0 0.0
    %2145 = vmatprep.subr.mxu0 0.0
    %2146 = vmatpush1.msra.mxu0 0.0
    %2147 = vmatprep.mubr.f32.mxu0 0.0
    %2148 = vmatmul.mubr.f32.gmra.mrb[0].mxu0 %v2081
    %v2149 = vpop.f32.mrb[0].mxu0
    %v2150 = vadd.f32 %v2078, %v2149
    %v2151 = vpop.f32.mrb[0].mxu0
    %2152 = vdwg.mxu0
    %v2153 = vld [vmem:[%s431] sm:$0xff]
    %v2154 = vld [vmem:[%s431 + $0x8] sm:$0xff]
    %v2155 = vld [vmem:[%s431 + $0x10] sm:$0xff]
    %v2156 = vld [vmem:[%s431 + $0x18] sm:$0xff]
    %v2157 = vld [vmem:[%s436] sm:$0x1]
    %v2159 = vlaneseq
    %v2160 = vshrl.u32 %v2159, 7
    %v2161 = vsub.s32 0, %v2160
    %v2162 = vrot.slane %v2157, %v2161
    %v2165 = vsel %vm342, %v2068, 0
    %2167 = vmatprep.subr.mxu0 0.0
    %2168 = vmatpush1.msra.mxu0 %v2153
    %2169 = vmatprep.subr.mxu0 0.0
    %2170 = vmatpush1.msra.mxu0 %v2154
    %2171 = vmatprep.subr.mxu0 0.0
    %2172 = vmatpush1.msra.mxu0 %v2155
    %2173 = vmatprep.subr.mxu0 0.0
    %2174 = vmatpush1.msra.mxu0 %v2156
    %2175 = vmatprep.subr.mxu0 0.0
    %2176 = vmatpush1.msra.mxu0 0.0
    %2177 = vmatprep.subr.mxu0 0.0
    %2178 = vmatpush1.msra.mxu0 0.0
    %2179 = vmatprep.subr.mxu0 0.0
    %2180 = vmatpush1.msra.mxu0 0.0
    %2181 = vmatprep.subr.mxu0 0.0
    %2182 = vmatpush1.msra.mxu0 0.0
    %2183 = vmatprep.subr.mxu0 0.0
    %2184 = vmatpush1.msra.mxu0 0.0
    %2185 = vmatprep.subr.mxu0 0.0
    %2186 = vmatpush1.msra.mxu0 0.0
    %2187 = vmatprep.subr.mxu0 0.0
    %2188 = vmatpush1.msra.mxu0 0.0
    %2189 = vmatprep.subr.mxu0 0.0
    %2190 = vmatpush1.msra.mxu0 0.0
    %2191 = vmatprep.subr.mxu0 0.0
    %2192 = vmatpush1.msra.mxu0 0.0
    %2193 = vmatprep.subr.mxu0 0.0
    %2194 = vmatpush1.msra.mxu0 0.0
    %2195 = vmatprep.subr.mxu0 0.0
    %2196 = vmatpush1.msra.mxu0 0.0
    %2197 = vmatprep.subr.mxu0 0.0
    %2198 = vmatpush1.msra.mxu0 0.0
    %2199 = vmatprep.subr.mxu0 0.0
    %2200 = vmatpush1.msra.mxu0 0.0
    %2201 = vmatprep.subr.mxu0 0.0
    %2202 = vmatpush1.msra.mxu0 0.0
    %2203 = vmatprep.subr.mxu0 0.0
    %2204 = vmatpush1.msra.mxu0 0.0
    %2205 = vmatprep.subr.mxu0 0.0
    %2206 = vmatpush1.msra.mxu0 0.0
    %2207 = vmatprep.subr.mxu0 0.0
    %2208 = vmatpush1.msra.mxu0 0.0
    %2209 = vmatprep.subr.mxu0 0.0
    %2210 = vmatpush1.msra.mxu0 0.0
    %2211 = vmatprep.subr.mxu0 0.0
    %2212 = vmatpush1.msra.mxu0 0.0
    %2213 = vmatprep.subr.mxu0 0.0
    %2214 = vmatpush1.msra.mxu0 0.0
    %2215 = vmatprep.subr.mxu0 0.0
    %2216 = vmatpush1.msra.mxu0 0.0
    %2217 = vmatprep.subr.mxu0 0.0
    %2218 = vmatpush1.msra.mxu0 0.0
    %2219 = vmatprep.subr.mxu0 0.0
    %2220 = vmatpush1.msra.mxu0 0.0
    %2221 = vmatprep.subr.mxu0 0.0
    %2222 = vmatpush1.msra.mxu0 0.0
    %2223 = vmatprep.subr.mxu0 0.0
    %2224 = vmatpush1.msra.mxu0 0.0
    %2225 = vmatprep.subr.mxu0 0.0
    %2226 = vmatpush1.msra.mxu0 0.0
    %2227 = vmatprep.subr.mxu0 0.0
    %2228 = vmatpush1.msra.mxu0 0.0
    %2229 = vmatprep.subr.mxu0 0.0
    %2230 = vmatpush1.msra.mxu0 0.0
    %2231 = vmatprep.mubr.f32.mxu0 0.0
    %2232 = vmatmul.mubr.f32.gmra.mrb[0].mxu0 %v2165
    %v2233 = vpop.f32.mrb[0].mxu0
    %v2234 = vadd.f32 %v2162, %v2233
    %v2235 = vpop.f32.mrb[0].mxu0
    %2236 = vdwg.mxu0
    %s2237 = scalar_lea.vmem [#allocation2], 56
    %v2238 = vld [vmem:[%s2237] sm:$0xff]
    %v2239 = vadd.f32 %v2238, %v2150
    %v2240 = vxor.u32 %v2239, 2147483648
    %v2241 = vmul.f32 %v2240, 1.442695
    %v2242 = vpow.pop %v2241
    %v2243 = vadd.f32 %v2242, 1.0
    %v2244 = vrcp.pop %v2243
    %v2245 = vmul.f32 1.0, %v2244
    %2247 = vrot.lane.b32.xlu0 %v2150, 64
    %v2248 = vpop.permute.xlu0 %2247
    %v2250 = vmul.f32 %v2245, %v2248
    %2252 = vrot.lane.b32.xlu0 %v2250, 64
    %v2253 = vpop.permute.xlu0 %2252
    %v2255 = vadd.f32 %v2238, %v2253
    %v2256 = vtanh.pop %v2255
    %v2257 = vsub.f32 1.0, %v2245
    %2259 = vrot.lane.b32.xlu0 %v2256, 96
    %v2260 = vpop.permute.xlu0 %2259
    %v2262 = vmul.f32 %v2257, %v2260
    %2263 = vrot.lane.b32.xlu0 %v2067, 32
    %v2264 = vpop.permute.xlu0 %2263
    %v2266 = vmul.f32 %v2245, %v2264
    %v2267 = vadd.f32 %v2262, %v2266
    %v2268 = vld [vmem:[#allocation3] sm:$0xff]
    %v2269 = vadd.f32 %v2268, %v2234
    %v2270 = vxor.u32 %v2269, 2147483648
    %v2271 = vmul.f32 %v2270, 1.442695
    %v2272 = vpow.pop %v2271
    %v2273 = vadd.f32 %v2272, 1.0
    %v2274 = vrcp.pop %v2273
    %v2275 = vmul.f32 1.0, %v2274
    %2277 = vrot.lane.b32.xlu0 %v2234, 64
    %v2278 = vpop.permute.xlu0 %2277
    %v2280 = vmul.f32 %v2275, %v2278
    %2282 = vrot.lane.b32.xlu0 %v2280, 64
    %v2283 = vpop.permute.xlu0 %2282
    %v2285 = vadd.f32 %v2268, %v2283
    %v2286 = vtanh.pop %v2285
    %v2287 = vsub.f32 1.0, %v2275
    %2289 = vrot.lane.b32.xlu0 %v2286, 96
    %v2290 = vpop.permute.xlu0 %2289
    %v2292 = vmul.f32 %v2287, %v2290
    %2293 = vrot.lane.b32.xlu0 %v2068, 32
    %v2294 = vpop.permute.xlu0 %2293
    %v2296 = vmul.f32 %v2275, %v2294
    %v2297 = vadd.f32 %v2292, %v2296
    %2299 = vrot.lane.b32.xlu0 %v2267, 96
    %v2300 = vpop.permute.xlu0 %2299
    %2302 = vst.msk [vmem:[#allocation4] sm:$0xff] %vm342, %v2300
    %2304 = vrot.lane.b32.xlu0 %v2297, 96
    %v2305 = vpop.permute.xlu0 %2304
    %2307 = vst.msk [vmem:[#allocation5] sm:$0xff] %vm342, %v2305
    %s2308 = scalar_lea.vmem [#allocation6], 56
    %2309 = vst.msk [vmem:[%s2308] sm:$0xff] %vm342, %v2300
    %2310 = vst.msk [vmem:[#allocation7] sm:$0xff] %vm342, %v2305
    %v2311 = vld [vmem:[#allocation6] sm:$0xff]
    %v2312 = vld [vmem:[#allocation6 + $0x8] sm:$0xff]
    %v2313 = vld [vmem:[#allocation6 + $0x10] sm:$0xff]
    %v2314 = vld [vmem:[#allocation6 + $0x18] sm:$0xff]
    %v2315 = vld [vmem:[#allocation6 + $0x20] sm:$0xff]
    %v2316 = vld [vmem:[#allocation6 + $0x28] sm:$0xff]
    %v2317 = vld [vmem:[#allocation6 + $0x30] sm:$0xff]
    %v2318 = vld [vmem:[#allocation6 + $0x38] sm:$0xff]
    %v2319 = vld [vmem:[#allocation7] sm:$0xff]
    %v2320 = vld [vmem:[#allocation7 + $0x8] sm:$0xff]
    %v2321 = vld [vmem:[#allocation7 + $0x10] sm:$0xff]
    %v2322 = vld [vmem:[#allocation7 + $0x18] sm:$0xff]
    %v2323 = vld [vmem:[#allocation7 + $0x20] sm:$0xff]
    %v2324 = vld [vmem:[#allocation7 + $0x28] sm:$0xff]
    %v2325 = vld [vmem:[#allocation7 + $0x30] sm:$0xff]
    %v2326 = vld [vmem:[#allocation7 + $0x38] sm:$0xff]
    %2335 = vrot.lane.b32.xlu0 %v2319, 32
    %v2336 = vpop.permute.xlu0 %2335
    %2337 = vrot.lane.b32.xlu0 %v2320, 32
    %v2338 = vpop.permute.xlu0 %2337
    %2339 = vrot.lane.b32.xlu0 %v2321, 32
    %v2340 = vpop.permute.xlu0 %2339
    %2341 = vrot.lane.b32.xlu0 %v2322, 32
    %v2342 = vpop.permute.xlu0 %2341
    %2343 = vrot.lane.b32.xlu0 %v2323, 32
    %v2344 = vpop.permute.xlu0 %2343
    %2345 = vrot.lane.b32.xlu0 %v2324, 32
    %v2346 = vpop.permute.xlu0 %2345
    %2347 = vrot.lane.b32.xlu0 %v2325, 32
    %v2348 = vpop.permute.xlu0 %2347
    %2349 = vrot.lane.b32.xlu0 %v2326, 32
    %v2350 = vpop.permute.xlu0 %2349
    %v2359 = vsel %vm342, %v2311, %v2336
    %v2360 = vsel %vm342, %v2312, %v2338
    %v2361 = vsel %vm342, %v2313, %v2340
    %v2362 = vsel %vm342, %v2314, %v2342
    %v2363 = vsel %vm342, %v2315, %v2344
    %v2364 = vsel %vm342, %v2316, %v2346
    %v2365 = vsel %vm342, %v2317, %v2348
    %v2366 = vsel %vm342, %v2318, %v2350
    %vm2367 = vcmask 523264
    %2368 = vst.msk [vmem:[#allocation14] sm:$0xff] %vm2367, %v2359
    %2369 = vst.msk [vmem:[#allocation14 + $0x8] sm:$0xff] %vm2367, %v2360
    %2370 = vst.msk [vmem:[#allocation14 + $0x10] sm:$0xff] %vm2367, %v2361
    %2371 = vst.msk [vmem:[#allocation14 + $0x18] sm:$0xff] %vm2367, %v2362
    %2372 = vst.msk [vmem:[#allocation14 + $0x20] sm:$0xff] %vm2367, %v2363
    %2373 = vst.msk [vmem:[#allocation14 + $0x28] sm:$0xff] %vm2367, %v2364
    %2374 = vst.msk [vmem:[#allocation14 + $0x30] sm:$0xff] %vm2367, %v2365
    %2375 = vst.msk [vmem:[#allocation14 + $0x38] sm:$0xff] %vm2367, %v2366
    // Predicated region
    $region34: #{tpu_custom_call.1} parent=1 // pred_check
      _
    $region35: #{tpu_custom_call.1} parent=1 // pred_check_branch
      %2377 = sbr.rel (0) target = $region37
    $region36: #{tpu_custom_call.1} parent=1 // pred_region
      %s2379 = ssub.s32 1024, 1024
      %2380 = vsyncadd [#allocation10], %s2379
      %s2381 = sshll.u32 [#allocation14], 4
      %s2382 = int_to_ptr.vmem [resolvable:$true] %s2381
      %2387 = dma.vmem_to_hbm [thread:$0]  %s2382, 1024, %s5, [#allocation10], 128, 128, 8
    $region37: #{tpu_custom_call.1} parent=1 // pred_fallthru
      _
    // Predicated region
    $region38: #{tpu_custom_call.1} parent=1 // pred_check
      _
    $region39: #{tpu_custom_call.1} parent=1 // pred_check_branch
      %2389 = sbr.rel (0) target = $region41
    $region40: #{tpu_custom_call.1} parent=1 // pred_region
      %2390 = dma.done [#allocation10], 1024
    $region41: #{tpu_custom_call.1} parent=1 // pred_fallthru
      _
    %2391 = vsyncpa [#allocation9], 1
    %2392 = vsyncpa [#allocation12], 1
    %2393 = vsyncpa [#allocation10], 1

</llo_original>
